<compile_context>
chip_gen: v7x
topology: tpu7x:2x2x1
jax: 0.10.0
libtpu: 0.0.40
codegen_flags: <defaults>
</compile_context>

<pallas_src>
import jax
import jax.numpy as jnp
from jax import lax
from jax.experimental import pallas as pl
from jax.experimental.pallas import tpu as pltpu

FEATURE_DIM = 32                      # C (divisible by num_heads = 8)
NUM_REGIONS = 6                       # R
NUM_REGIONS_PAD = 8                   # RP: regions padded to a sublane granule
NUM_HEADS = 8                         # H
HEAD_DIM = FEATURE_DIM // NUM_HEADS   # 4
RC = NUM_REGIONS * FEATURE_DIM        # 192
BTILE = 4                             # batch elements per grid step (fits the default
                                      # scoped VMEM on v5e/v6e/v7x; raise on v6e/v7x)

C = FEATURE_DIM
R = NUM_REGIONS
RP = NUM_REGIONS_PAD
H = NUM_HEADS


# ---------------------------------------------------------------------------
# Fused kernel factory (offsets / tile sizes are Python constants closed over).
# ---------------------------------------------------------------------------
def _make_kernel(btile, hw):
    TP = 2 * btile * RP          # padded tokens per step: (batch, view, padded region)
    NW = 2 * btile * hw          # spatial columns per step: (batch, view, pixel)
    HTP = H * TP
    # row offsets inside the packed (rows, C) constant operand (all multiples of 8)
    o_wr = 0
    o_br = o_wr + RP
    o_wq = o_br + RP
    o_wk = o_wq + C
    o_wv = o_wk + C
    o_wo = o_wv + C
    o_ws = o_wo + C
    o_wf = o_ws + RC
    o_sc = o_wf + RC
    o_sh = o_sc + TP
    o_hm = o_sh + TP
    o_vec = o_hm + HTP

    def kernel(xw_ref, xt_ref, pkc_ref, pkrc_ref, bsel_ref, pkt_ref, out_ref):
        f32 = jnp.float32
        # -------- packed constants (static, 8-aligned sublane slices) --------
        wr = pkc_ref[o_wr:o_wr + RP]              # (RP, C) region conv weight (rows>=R zero)
        br = pkc_ref[o_br:o_br + RP][:, 0:1]      # (RP, 1) region conv bias   (rows>=R -1e9)
        wq = pkc_ref[o_wq:o_wq + C]               # (C, C)  q proj^T (1/sqrt(hd) folded in)
        wk = pkc_ref[o_wk:o_wk + C]               # (C, C)
        wv = pkc_ref[o_wv:o_wv + C]               # (C, C)
        wo = pkc_ref[o_wo:o_wo + C]               # (C, C)
        wstk = pkc_ref[o_ws:o_ws + RC]            # (RC, C) stacked per-region conv weights
        wf = pkc_ref[o_wf:o_wf + RC]              # (RC, C) fusion Linear^T
        esc = pkc_ref[o_sc:o_sc + TP]             # (TP, C) BN scale per token
        esh = pkc_ref[o_sh:o_sh + TP]             # (TP, C) BN shift (conv bias folded)
        hm_big = pkc_ref[o_hm:o_hm + HTP]         # (HTP, C) head feature mask, row = h*TP+t
        vec = pkc_ref[o_vec:o_vec + 8]            # (8, C) packed small vectors
        bq, bk, bv, bo = vec[0:1], vec[1:2], vec[2:3], vec[3:4]
        bf, ln_g, ln_b = vec[4:5], vec[5:6], vec[6:7]
        tile_m = pkrc_ref[0:C]                    # (C, RC)  TileM[i, r*C+j] = (i == j)
        dmask = pkrc_ref[C:C + TP]                # (TP, RC) keep block r(t) only
        bsel = bsel_ref[...]                      # (TP, NW) (group(t)==group(n)) / HW
        attn_b = pkt_ref[0:HTP]                   # (HTP, TP) 0 / -1e9 cross-view bias
        pool_a = pkt_ref[HTP:HTP + btile]         # (btile, TP) 0.5 * (same batch, valid r)

        xw = xw_ref[...]                          # (C, NW)  channels x (batch, view, pixel)
        xt = xt_ref[...]                          # (NW, C)  (batch, view, pixel) x channels

        # ---- region generator: 1x1 conv + softmax over (padded) region axis ----
        logits = jnp.dot(wr, xw, preferred_element_type=f32) + br            # (RP, NW)
        logits = logits - jnp.max(logits, axis=0, keepdims=True)
        e = jnp.exp(logits)
        mask = e * pl.reciprocal(jnp.sum(e, axis=0, keepdims=True), approx=True)

        # ---- weighted AdaptiveAvgPool for every (batch, view, region) at once ----
        # Block-diagonal LHS: row t = (g, r) is region r's mask restricted to group
        # g's spatial columns (bsel also carries the 1/HW mean).  One native matmul.
        mask_bd = jnp.tile(mask, (2 * btile, 1)) * bsel                       # (TP, NW)
        pooled = jnp.dot(mask_bd, xt, preferred_element_type=f32)             # (TP, C)

        # ---- per-region encoders: block-diagonal 1x1 conv + BN(eval) + ReLU ----
        spread = jnp.dot(pooled, tile_m, preferred_element_type=f32) * dmask  # (TP, RC)
        enc = jnp.dot(spread, wstk, preferred_element_type=f32)               # (TP, C)
        enc = jnp.maximum(enc * esc + esh, 0.0)                               # tokens

        # ---- cross-view MHA: both views/directions and all 8 heads in one pass ----
        q = jnp.dot(enc, wq, preferred_element_type=f32) + bq                 # (TP, C) pre-scaled
        k = jnp.dot(enc, wk, preferred_element_type=f32) + bk                 # (TP, C)
        v = jnp.dot(enc, wv, preferred_element_type=f32) + bv                 # (TP, C)
        qh = jnp.tile(q, (H, 1)) * hm_big                                     # (HTP, C)
        s = lax.dot_general(qh, k, (((1,), (1,)), ((), ())),
                            preferred_element_type=f32) + attn_b              # (HTP, TP)
        s = s - jnp.max(s, axis=-1, keepdims=True)
        p = jnp.exp(s)
        p = p * pl.reciprocal(jnp.sum(p, axis=-1, keepdims=True), approx=True)
        ctxh = jnp.dot(p, v, preferred_element_type=f32) * hm_big             # (HTP, C)
        ctx = jnp.sum(ctxh.reshape(H, TP, C), axis=0)                         # (TP, C) head concat
        attn = jnp.dot(ctx, wo, preferred_element_type=f32) + bo              # (TP, C)

        # ---- fusion Linear(R*C -> C) + direction average + LayerNorm + ReLU ----
        fsp = jnp.dot(attn, tile_m, preferred_element_type=f32) * dmask       # (TP, RC)
        g = jnp.dot(fsp, wf, preferred_element_type=f32)                      # (TP, C)
        lin = jnp.dot(pool_a, g, preferred_element_type=f32) + bf             # (btile, C)
        mu = jnp.mean(lin, axis=-1, keepdims=True)
        var = jnp.mean((lin - mu) ** 2, axis=-1, keepdims=True)
        ln = (lin - mu) * lax.rsqrt(var + 1e-5) * ln_g + ln_b
        out_ref[0] = jnp.maximum(ln, 0.0)                                     # (btile, C)

    return kernel


# ---------------------------------------------------------------------------
# Deterministic parameter init (shapes follow the PyTorch __init__).
# ---------------------------------------------------------------------------
def init_params(key):
    f32 = jnp.float32
    ks = jax.random.split(key, 7)
    p = {}
    # region_generator: Conv2d(C, R, 1) + Softmax(dim=1)
    p["wr"] = jax.random.normal(ks[0], (R, C), f32) * 0.1
    p["br"] = jax.random.normal(ks[1], (R,), f32) * 0.1
    # region_encoders: R x [AdaptiveAvgPool2d(1), Conv2d(C, C, 1), BatchNorm2d, ReLU]
    we = jax.random.normal(ks[2], (R, C, C), f32) / (C ** 0.5)
    be = jax.random.normal(ks[3], (R, C), f32) * 0.1
    bn_scale = jnp.ones((R, C), f32) / (1.0 + 1e-5) ** 0.5     # eval: gamma / sqrt(var+eps)
    p["w_stack"] = jnp.transpose(we, (0, 2, 1)).reshape(RC, C)  # [r*C+i, o] = We[r, o, i]
    p["enc_scale"] = bn_scale
    p["enc_shift"] = be * bn_scale                              # conv bias folded into BN
    # cross_view_align: MultiheadAttention(embed_dim=C, num_heads=8)
    in_proj = jax.random.normal(ks[4], (3 * C, C), f32) / (C ** 0.5)
    p["wq_t"] = in_proj[:C].T
    p["wk_t"] = in_proj[C:2 * C].T
    p["wv_t"] = in_proj[2 * C:].T
    p["bq"] = jnp.zeros((C,), f32)
    p["bk"] = jnp.zeros((C,), f32)
    p["bv"] = jnp.zeros((C,), f32)
    wo = jax.random.normal(ks[5], (C, C), f32) / (C ** 0.5)
    p["wo_t"] = wo.T
    p["bo"] = jnp.zeros((C,), f32)
    # final_fusion: Linear(R*C, C), LayerNorm(C), ReLU, Dropout(0.1 -> identity in eval)
    wf = jax.random.normal(ks[6], (C, RC), f32) / (RC ** 0.5)
    p["wf_t"] = wf.T
    p["bf"] = jnp.zeros((C,), f32)
    p["ln_g"] = jnp.ones((C,), f32)
    p["ln_b"] = jnp.zeros((C,), f32)
    return p


# ---------------------------------------------------------------------------
# Host-precomputed structure constants, packed into 4 operands.
# ---------------------------------------------------------------------------
def _build_packs(p, hw, btile):
    f32 = jnp.float32
    TP = 2 * btile * RP
    NW = 2 * btile * hw
    HTP = H * TP
    scale = 1.0 / (HEAD_DIM ** 0.5)

    # token-index helpers (row t = (batch, view, padded-region))
    r_of_t = jnp.arange(TP) % RP
    g_of_t = jnp.arange(TP) // RP
    b_of_t = g_of_t // 2
    v_of_t = g_of_t % 2
    valid_t = r_of_t < R

    # ---- pack 1: everything with lane-width C, stacked along sublanes ----
    wr_p = jnp.zeros((RP, C), f32).at[:R].set(p["wr"])
    br_p = jnp.full((RP,), -1e9, f32).at[:R].set(p["br"])      # dead rows -> ~0 softmax
    br_rows = jnp.tile(br_p[:, None], (1, C))
    esc = jnp.tile(jnp.zeros((RP, C), f32).at[:R].set(p["enc_scale"]), (2 * btile, 1))
    esh = jnp.tile(jnp.zeros((RP, C), f32).at[:R].set(p["enc_shift"]), (2 * btile, 1))
    head_of_c = jnp.arange(C) // HEAD_DIM
    hm = (jnp.arange(H)[:, None] == head_of_c[None, :]).astype(f32)   # (H, C)
    hm_big = jnp.repeat(hm, TP, axis=0)                               # (HTP, C) row h*TP+t
    vecs = jnp.stack([p["bq"] * scale, p["bk"], p["bv"], p["bo"],
                      p["bf"], p["ln_g"], p["ln_b"], jnp.zeros((C,), f32)], axis=0)
    pkc = jnp.concatenate(
        [wr_p, br_rows, p["wq_t"] * scale, p["wk_t"], p["wv_t"], p["wo_t"],
         p["w_stack"], p["wf_t"], esc, esh, hm_big, vecs], axis=0)

    # ---- pack 2: lane-width R*C (block-diagonal spread helpers) ----
    jj = jnp.arange(RC)
    tile_m = (jnp.arange(C)[:, None] == (jj % C)[None, :]).astype(f32)        # (C, RC)
    dmask_t = (r_of_t[:, None] == (jj // C)[None, :]).astype(f32)             # (TP, RC)
    pkrc = jnp.concatenate([tile_m, dmask_t], axis=0)

    # ---- pack 3: block-diagonal (batch, view) selector for the pooling matmul ----
    g_of_n = jnp.arange(NW) // hw
    bsel = (g_of_t[:, None] == g_of_n[None, :]).astype(f32) * (1.0 / hw)      # (TP, NW)

    # ---- pack 4: additive attention bias + final direction/batch pooling ----
    ok = ((b_of_t[:, None] == b_of_t[None, :]) &
          (v_of_t[:, None] != v_of_t[None, :]) & valid_t[None, :])
    bias_tt = jnp.where(ok, 0.0, -1e9).astype(f32)                            # (TP, TP)
    attn_bias = jnp.tile(bias_tt, (H, 1))                                     # (HTP, TP)
    bt_pad = ((btile + 7) // 8) * 8
    pool_a = jnp.zeros((bt_pad, TP), f32).at[:btile].set(
        0.5 * ((jnp.arange(btile)[:, None] == b_of_t[None, :]) &
               valid_t[None, :]).astype(f32))
    pkt = jnp.concatenate([attn_bias, pool_a], axis=0)                        # (HTP+pad, TP)
    return pkc, pkrc, bsel, pkt


# ---------------------------------------------------------------------------
# Wrapper
# ---------------------------------------------------------------------------
def adaptive_region_alignment(sat_features, uav_features, params, btile=BTILE):
    """sat_features, uav_features: (B, C, H, W) float32 (NCHW).  Returns (B, C)."""
    B, Cc, Hh, Ww = sat_features.shape
    assert Cc == C, f"feature dim must be {C}"
    hw = Hh * Ww
    NW = 2 * btile * hw
    assert NW % 128 == 0, "2*btile*H*W must be a multiple of 128 (lane tiling)"
    num_steps = -(-B // btile)
    b_pad = num_steps * btile
    if b_pad != B:
        padw = ((0, b_pad - B), (0, 0), (0, 0), (0, 0))
        sat_features = jnp.pad(sat_features, padw)
        uav_features = jnp.pad(uav_features, padw)
    x = jnp.stack([sat_features.reshape(b_pad, C, hw),
                   uav_features.reshape(b_pad, C, hw)], axis=1)       # (B', 2, C, HW)
    # Two host-side layouts so every in-kernel matmul is MXU-native (no in-kernel
    # transpose of the big activation; the extra HBM copy is cheap by comparison).
    xw = jnp.transpose(x, (2, 0, 1, 3)).reshape(C, b_pad * 2 * hw)    # (C, (b,v,hw))
    xt = jnp.transpose(x, (0, 1, 3, 2)).reshape(b_pad * 2 * hw, C)    # ((b,v,hw), C)
    pkc, pkrc, bsel, pkt = _build_packs(params, hw, btile)
    kernel = _make_kernel(btile, hw)

    out = pl.pallas_call(
        kernel,
        out_shape=jax.ShapeDtypeStruct((num_steps, btile, C), jnp.float32),
        grid=(num_steps,),
        in_specs=[
            pl.BlockSpec((C, NW), lambda i: (0, i)),        # activations, wide layout
            pl.BlockSpec((NW, C), lambda i: (i, 0)),        # activations, tall layout
            pl.BlockSpec(pkc.shape, lambda i: (0, 0)),      # packed (., C) constants
            pl.BlockSpec(pkrc.shape, lambda i: (0, 0)),     # packed (., R*C) constants
            pl.BlockSpec(bsel.shape, lambda i: (0, 0)),     # pooling block-diag selector
            pl.BlockSpec(pkt.shape, lambda i: (0, 0)),      # attention bias + final pooling
        ],
        out_specs=pl.BlockSpec((1, btile, C), lambda i: (i, 0, 0)),
        compiler_params=pltpu.CompilerParams(
            dimension_semantics=("parallel",)),             # v7x: shard batch tiles over TCs
    )(xw, xt, pkc, pkrc, bsel, pkt)
    return out.reshape(b_pad, C)[:B]


if __name__ == "__main__":
    key = jax.random.PRNGKey(0)
    kp, ks, ku = jax.random.split(key, 3)
    params = init_params(kp)
    B, Hh, Ww = 2, 16, 16
    sat_features = jax.random.normal(ks, (B, C, Hh, Ww), jnp.float32)
    uav_features = jax.random.normal(ku, (B, C, Hh, Ww), jnp.float32)
    out = adaptive_region_alignment(sat_features, uav_features, params)
    out = jax.block_until_ready(out)
    assert out.shape == (B, C), out.shape
    assert bool(jnp.all(jnp.isfinite(out)))
    print("KERNEL_OK")
</pallas_src>

<mosaic_0001>
module attributes {stable_mosaic.version = 11 : i64} {
  func.func @kernel(%arg0: i32, %arg1: memref<32x2048xf32, #tpu.memory_space<vmem>>, %arg2: memref<2048x32xf32, #tpu.memory_space<vmem>>, %arg3: memref<1176x32xf32, #tpu.memory_space<vmem>>, %arg4: memref<96x192xf32, #tpu.memory_space<vmem>>, %arg5: memref<64x2048xf32, #tpu.memory_space<vmem>>, %arg6: memref<520x64xf32, #tpu.memory_space<vmem>>, %arg7: memref<1x4x32xf32, #tpu.memory_space<vmem>>) attributes {dimension_semantics = [#tpu.dimension_semantics<parallel>], iteration_bounds = array<i64: 1>, scalar_prefetch = 0 : i64, scratch_operands = 0 : i64, tpu.core_type = #tpu.core_type<tc>, window_params = [{transform_indices = @transform_0, window_bounds = array<i64: 32, 2048>}, {transform_indices = @transform_1, window_bounds = array<i64: 2048, 32>}, {pipeline_mode = #tpu.pipeline_mode<synchronous>, transform_indices = @transform_2, window_bounds = array<i64: 1176, 32>}, {pipeline_mode = #tpu.pipeline_mode<synchronous>, transform_indices = @transform_3, window_bounds = array<i64: 96, 192>}, {pipeline_mode = #tpu.pipeline_mode<synchronous>, transform_indices = @transform_4, window_bounds = array<i64: 64, 2048>}, {pipeline_mode = #tpu.pipeline_mode<synchronous>, transform_indices = @transform_5, window_bounds = array<i64: 520, 64>}, {transform_indices = @transform_6, window_bounds = array<i64: 1, 4, 32>}]} {
    %c0 = arith.constant 0 : index
    %c0_0 = arith.constant 0 : index
    %0 = vector.load %arg3[%c0, %c0_0] : memref<1176x32xf32, #tpu.memory_space<vmem>>, vector<8x32xf32>
    %c8 = arith.constant 8 : index
    %c0_1 = arith.constant 0 : index
    %1 = vector.load %arg3[%c8, %c0_1] : memref<1176x32xf32, #tpu.memory_space<vmem>>, vector<8x32xf32>
    %2 = vector.extract_strided_slice %1 {offsets = [0, 0], sizes = [8, 1], strides = [1, 1]} : vector<8x32xf32> to vector<8x1xf32>
    %c16 = arith.constant 16 : index
    %c0_2 = arith.constant 0 : index
    %3 = vector.load %arg3[%c16, %c0_2] : memref<1176x32xf32, #tpu.memory_space<vmem>>, vector<32x32xf32>
    %c48 = arith.constant 48 : index
    %c0_3 = arith.constant 0 : index
    %4 = vector.load %arg3[%c48, %c0_3] : memref<1176x32xf32, #tpu.memory_space<vmem>>, vector<32x32xf32>
    %c80 = arith.constant 80 : index
    %c0_4 = arith.constant 0 : index
    %5 = vector.load %arg3[%c80, %c0_4] : memref<1176x32xf32, #tpu.memory_space<vmem>>, vector<32x32xf32>
    %c112 = arith.constant 112 : index
    %c0_5 = arith.constant 0 : index
    %6 = vector.load %arg3[%c112, %c0_5] : memref<1176x32xf32, #tpu.memory_space<vmem>>, vector<32x32xf32>
    %c144 = arith.constant 144 : index
    %c0_6 = arith.constant 0 : index
    %7 = vector.load %arg3[%c144, %c0_6] : memref<1176x32xf32, #tpu.memory_space<vmem>>, vector<192x32xf32>
    %c336 = arith.constant 336 : index
    %c0_7 = arith.constant 0 : index
    %8 = vector.load %arg3[%c336, %c0_7] : memref<1176x32xf32, #tpu.memory_space<vmem>>, vector<192x32xf32>
    %c528 = arith.constant 528 : index
    %c0_8 = arith.constant 0 : index
    %9 = vector.load %arg3[%c528, %c0_8] : memref<1176x32xf32, #tpu.memory_space<vmem>>, vector<64x32xf32>
    %c592 = arith.constant 592 : index
    %c0_9 = arith.constant 0 : index
    %10 = vector.load %arg3[%c592, %c0_9] : memref<1176x32xf32, #tpu.memory_space<vmem>>, vector<64x32xf32>
    %c656 = arith.constant 656 : index
    %c0_10 = arith.constant 0 : index
    %11 = vector.load %arg3[%c656, %c0_10] : memref<1176x32xf32, #tpu.memory_space<vmem>>, vector<512x32xf32>
    %c1168 = arith.constant 1168 : index
    %c0_11 = arith.constant 0 : index
    %12 = vector.load %arg3[%c1168, %c0_11] : memref<1176x32xf32, #tpu.memory_space<vmem>>, vector<8x32xf32>
    %13 = vector.extract_strided_slice %12 {offsets = [0, 0], sizes = [1, 32], strides = [1, 1]} : vector<8x32xf32> to vector<1x32xf32>
    %14 = vector.extract_strided_slice %12 {offsets = [1, 0], sizes = [1, 32], strides = [1, 1]} : vector<8x32xf32> to vector<1x32xf32>
    %15 = vector.extract_strided_slice %12 {offsets = [2, 0], sizes = [1, 32], strides = [1, 1]} : vector<8x32xf32> to vector<1x32xf32>
    %16 = vector.extract_strided_slice %12 {offsets = [3, 0], sizes = [1, 32], strides = [1, 1]} : vector<8x32xf32> to vector<1x32xf32>
    %17 = vector.extract_strided_slice %12 {offsets = [4, 0], sizes = [1, 32], strides = [1, 1]} : vector<8x32xf32> to vector<1x32xf32>
    %18 = vector.extract_strided_slice %12 {offsets = [5, 0], sizes = [1, 32], strides = [1, 1]} : vector<8x32xf32> to vector<1x32xf32>
    %19 = vector.extract_strided_slice %12 {offsets = [6, 0], sizes = [1, 32], strides = [1, 1]} : vector<8x32xf32> to vector<1x32xf32>
    %c0_12 = arith.constant 0 : index
    %c0_13 = arith.constant 0 : index
    %20 = vector.load %arg4[%c0_12, %c0_13] : memref<96x192xf32, #tpu.memory_space<vmem>>, vector<32x192xf32>
    %c32 = arith.constant 32 : index
    %c0_14 = arith.constant 0 : index
    %21 = vector.load %arg4[%c32, %c0_14] : memref<96x192xf32, #tpu.memory_space<vmem>>, vector<64x192xf32>
    %c0_15 = arith.constant 0 : index
    %c0_16 = arith.constant 0 : index
    %22 = vector.load %arg5[%c0_15, %c0_16] : memref<64x2048xf32, #tpu.memory_space<vmem>>, vector<64x2048xf32>
    %c0_17 = arith.constant 0 : index
    %c0_18 = arith.constant 0 : index
    %23 = vector.load %arg6[%c0_17, %c0_18] : memref<520x64xf32, #tpu.memory_space<vmem>>, vector<512x64xf32>
    %c512 = arith.constant 512 : index
    %c0_19 = arith.constant 0 : index
    %24 = vector.load %arg6[%c512, %c0_19] : memref<520x64xf32, #tpu.memory_space<vmem>>, vector<4x64xf32>
    %c0_20 = arith.constant 0 : index
    %c0_21 = arith.constant 0 : index
    %25 = vector.load %arg1[%c0_20, %c0_21] : memref<32x2048xf32, #tpu.memory_space<vmem>>, vector<32x2048xf32>
    %c0_22 = arith.constant 0 : index
    %c0_23 = arith.constant 0 : index
    %26 = vector.load %arg2[%c0_22, %c0_23] : memref<2048x32xf32, #tpu.memory_space<vmem>>, vector<2048x32xf32>
    %cst = arith.constant dense<0.000000e+00> : vector<8x2048xf32>
    %27 = tpu.matmul %0, %25, %cst {dimension_numbers = #tpu.dot_dimension_numbers<[1], [0], [0], [1], [0, 0, 1, 1], [], []>} : vector<8x32xf32>, vector<32x2048xf32>, vector<8x2048xf32> -> vector<8x2048xf32>
    %28 = vector.broadcast %2 : vector<8x1xf32> to vector<8x2048xf32>
    %29 = arith.addf %27, %28 : vector<8x2048xf32>
    %cst_24 = arith.constant dense<0xFF800000> : vector<2048xf32>
    %30 = vector.multi_reduction <maximumf>, %29, %cst_24 [0] : vector<8x2048xf32> to vector<2048xf32>
    %31 = vector.shape_cast %30 : vector<2048xf32> to vector<1x2048xf32>
    %32 = vector.broadcast %31 : vector<1x2048xf32> to vector<8x2048xf32>
    %33 = arith.subf %29, %32 : vector<8x2048xf32>
    %34 = math.exp %33 : vector<8x2048xf32>
    %cst_25 = arith.constant dense<0.000000e+00> : vector<2048xf32>
    %35 = vector.multi_reduction <add>, %34, %cst_25 [0] : vector<8x2048xf32> to vector<2048xf32>
    %36 = vector.shape_cast %35 : vector<2048xf32> to vector<1x2048xf32>
    %37 = tpu.reciprocal %36 {approx = true} : vector<1x2048xf32> -> vector<1x2048xf32>
    %38 = vector.broadcast %37 : vector<1x2048xf32> to vector<8x2048xf32>
    %39 = arith.mulf %34, %38 : vector<8x2048xf32>
    %40 = tpu.concatenate %39, %39, %39, %39, %39, %39, %39, %39 in 0 : vector<8x2048xf32>, vector<8x2048xf32>, vector<8x2048xf32>, vector<8x2048xf32>, vector<8x2048xf32>, vector<8x2048xf32>, vector<8x2048xf32>, vector<8x2048xf32> -> vector<64x2048xf32>
    %41 = arith.mulf %40, %22 : vector<64x2048xf32>
    %cst_26 = arith.constant dense<0.000000e+00> : vector<64x32xf32>
    %42 = tpu.matmul %41, %26, %cst_26 {dimension_numbers = #tpu.dot_dimension_numbers<[1], [0], [0], [1], [0, 0, 1, 1], [], []>} : vector<64x2048xf32>, vector<2048x32xf32>, vector<64x32xf32> -> vector<64x32xf32>
    %cst_27 = arith.constant dense<0.000000e+00> : vector<64x192xf32>
    %43 = tpu.matmul %42, %20, %cst_27 {dimension_numbers = #tpu.dot_dimension_numbers<[1], [0], [0], [1], [0, 0, 1, 1], [], []>} : vector<64x32xf32>, vector<32x192xf32>, vector<64x192xf32> -> vector<64x192xf32>
    %44 = arith.mulf %43, %21 : vector<64x192xf32>
    %cst_28 = arith.constant dense<0.000000e+00> : vector<64x32xf32>
    %45 = tpu.matmul %44, %7, %cst_28 {dimension_numbers = #tpu.dot_dimension_numbers<[1], [0], [0], [1], [0, 0, 1, 1], [], []>} : vector<64x192xf32>, vector<192x32xf32>, vector<64x32xf32> -> vector<64x32xf32>
    %46 = arith.mulf %45, %9 : vector<64x32xf32>
    %47 = arith.addf %46, %10 : vector<64x32xf32>
    %cst_29 = arith.constant 0.000000e+00 : f32
    %48 = vector.broadcast %cst_29 : f32 to vector<64x32xf32>
    %49 = arith.maximumf %47, %48 : vector<64x32xf32>
    %cst_30 = arith.constant dense<0.000000e+00> : vector<64x32xf32>
    %50 = tpu.matmul %49, %3, %cst_30 {dimension_numbers = #tpu.dot_dimension_numbers<[1], [0], [0], [1], [0, 0, 1, 1], [], []>} : vector<64x32xf32>, vector<32x32xf32>, vector<64x32xf32> -> vector<64x32xf32>
    %51 = vector.broadcast %13 : vector<1x32xf32> to vector<64x32xf32>
    %52 = arith.addf %50, %51 : vector<64x32xf32>
    %cst_31 = arith.constant dense<0.000000e+00> : vector<64x32xf32>
    %53 = tpu.matmul %49, %4, %cst_31 {dimension_numbers = #tpu.dot_dimension_numbers<[1], [0], [0], [1], [0, 0, 1, 1], [], []>} : vector<64x32xf32>, vector<32x32xf32>, vector<64x32xf32> -> vector<64x32xf32>
    %54 = vector.broadcast %14 : vector<1x32xf32> to vector<64x32xf32>
    %55 = arith.addf %53, %54 : vector<64x32xf32>
    %cst_32 = arith.constant dense<0.000000e+00> : vector<64x32xf32>
    %56 = tpu.matmul %49, %5, %cst_32 {dimension_numbers = #tpu.dot_dimension_numbers<[1], [0], [0], [1], [0, 0, 1, 1], [], []>} : vector<64x32xf32>, vector<32x32xf32>, vector<64x32xf32> -> vector<64x32xf32>
    %57 = vector.broadcast %15 : vector<1x32xf32> to vector<64x32xf32>
    %58 = arith.addf %56, %57 : vector<64x32xf32>
    %59 = tpu.concatenate %52, %52, %52, %52, %52, %52, %52, %52 in 0 : vector<64x32xf32>, vector<64x32xf32>, vector<64x32xf32>, vector<64x32xf32>, vector<64x32xf32>, vector<64x32xf32>, vector<64x32xf32>, vector<64x32xf32> -> vector<512x32xf32>
    %60 = arith.mulf %59, %11 : vector<512x32xf32>
    %cst_33 = arith.constant dense<0.000000e+00> : vector<512x64xf32>
    %61 = tpu.matmul %60, %55, %cst_33 {dimension_numbers = #tpu.dot_dimension_numbers<[1], [1], [0], [0], [0, 0, 1, 0], [], []>} : vector<512x32xf32>, vector<64x32xf32>, vector<512x64xf32> -> vector<512x64xf32>
    %62 = arith.addf %61, %23 : vector<512x64xf32>
    %cst_34 = arith.constant dense<0xFF800000> : vector<512xf32>
    %63 = vector.multi_reduction <maximumf>, %62, %cst_34 [1] : vector<512x64xf32> to vector<512xf32>
    %64 = vector.shape_cast %63 : vector<512xf32> to vector<512x1xf32>
    %65 = vector.broadcast %64 : vector<512x1xf32> to vector<512x64xf32>
    %66 = arith.subf %62, %65 : vector<512x64xf32>
    %67 = math.exp %66 : vector<512x64xf32>
    %cst_35 = arith.constant dense<0.000000e+00> : vector<512xf32>
    %68 = vector.multi_reduction <add>, %67, %cst_35 [1] : vector<512x64xf32> to vector<512xf32>
    %69 = vector.shape_cast %68 : vector<512xf32> to vector<512x1xf32>
    %70 = tpu.reciprocal %69 {approx = true} : vector<512x1xf32> -> vector<512x1xf32>
    %71 = vector.broadcast %70 : vector<512x1xf32> to vector<512x64xf32>
    %72 = arith.mulf %67, %71 : vector<512x64xf32>
    %cst_36 = arith.constant dense<0.000000e+00> : vector<512x32xf32>
    %73 = tpu.matmul %72, %58, %cst_36 {dimension_numbers = #tpu.dot_dimension_numbers<[1], [0], [0], [1], [0, 0, 1, 1], [], []>} : vector<512x64xf32>, vector<64x32xf32>, vector<512x32xf32> -> vector<512x32xf32>
    %74 = arith.mulf %73, %11 : vector<512x32xf32>
    %75 = vector.shape_cast %74 : vector<512x32xf32> to vector<8x64x32xf32>
    %cst_37 = arith.constant dense<0.000000e+00> : vector<64x32xf32>
    %76 = vector.multi_reduction <add>, %75, %cst_37 [0] : vector<8x64x32xf32> to vector<64x32xf32>
    %cst_38 = arith.constant dense<0.000000e+00> : vector<64x32xf32>
    %77 = tpu.matmul %76, %6, %cst_38 {dimension_numbers = #tpu.dot_dimension_numbers<[1], [0], [0], [1], [0, 0, 1, 1], [], []>} : vector<64x32xf32>, vector<32x32xf32>, vector<64x32xf32> -> vector<64x32xf32>
    %78 = vector.broadcast %16 : vector<1x32xf32> to vector<64x32xf32>
    %79 = arith.addf %77, %78 : vector<64x32xf32>
    %cst_39 = arith.constant dense<0.000000e+00> : vector<64x192xf32>
    %80 = tpu.matmul %79, %20, %cst_39 {dimension_numbers = #tpu.dot_dimension_numbers<[1], [0], [0], [1], [0, 0, 1, 1], [], []>} : vector<64x32xf32>, vector<32x192xf32>, vector<64x192xf32> -> vector<64x192xf32>
    %81 = arith.mulf %80, %21 : vector<64x192xf32>
    %cst_40 = arith.constant dense<0.000000e+00> : vector<64x32xf32>
    %82 = tpu.matmul %81, %8, %cst_40 {dimension_numbers = #tpu.dot_dimension_numbers<[1], [0], [0], [1], [0, 0, 1, 1], [], []>} : vector<64x192xf32>, vector<192x32xf32>, vector<64x32xf32> -> vector<64x32xf32>
    %cst_41 = arith.constant dense<0.000000e+00> : vector<4x32xf32>
    %83 = tpu.matmul %24, %82, %cst_41 {dimension_numbers = #tpu.dot_dimension_numbers<[1], [0], [0], [1], [0, 0, 1, 1], [], []>} : vector<4x64xf32>, vector<64x32xf32>, vector<4x32xf32> -> vector<4x32xf32>
    %84 = vector.broadcast %17 : vector<1x32xf32> to vector<4x32xf32>
    %85 = arith.addf %83, %84 : vector<4x32xf32>
    %cst_42 = arith.constant dense<0.000000e+00> : vector<4xf32>
    %86 = vector.multi_reduction <add>, %85, %cst_42 [1] : vector<4x32xf32> to vector<4xf32>
    %87 = vector.shape_cast %86 : vector<4xf32> to vector<4x1xf32>
    %cst_43 = arith.constant 3.200000e+01 : f32
    %88 = vector.broadcast %cst_43 : f32 to vector<4x1xf32>
    %89 = arith.divf %87, %88 : vector<4x1xf32>
    %90 = vector.broadcast %89 : vector<4x1xf32> to vector<4x32xf32>
    %91 = arith.subf %85, %90 : vector<4x32xf32>
    %92 = arith.mulf %91, %91 : vector<4x32xf32>
    %cst_44 = arith.constant dense<0.000000e+00> : vector<4xf32>
    %93 = vector.multi_reduction <add>, %92, %cst_44 [1] : vector<4x32xf32> to vector<4xf32>
    %94 = vector.shape_cast %93 : vector<4xf32> to vector<4x1xf32>
    %cst_45 = arith.constant 3.200000e+01 : f32
    %95 = vector.broadcast %cst_45 : f32 to vector<4x1xf32>
    %96 = arith.divf %94, %95 : vector<4x1xf32>
    %97 = vector.broadcast %89 : vector<4x1xf32> to vector<4x32xf32>
    %98 = arith.subf %85, %97 : vector<4x32xf32>
    %cst_46 = arith.constant 9.99999974E-6 : f32
    %99 = vector.broadcast %cst_46 : f32 to vector<4x1xf32>
    %100 = arith.addf %96, %99 : vector<4x1xf32>
    %101 = math.rsqrt %100 : vector<4x1xf32>
    %102 = vector.broadcast %101 : vector<4x1xf32> to vector<4x32xf32>
    %103 = arith.mulf %98, %102 : vector<4x32xf32>
    %104 = vector.broadcast %18 : vector<1x32xf32> to vector<4x32xf32>
    %105 = arith.mulf %103, %104 : vector<4x32xf32>
    %106 = vector.broadcast %19 : vector<1x32xf32> to vector<4x32xf32>
    %107 = arith.addf %105, %106 : vector<4x32xf32>
    %cst_47 = arith.constant 0.000000e+00 : f32
    %108 = vector.broadcast %cst_47 : f32 to vector<4x32xf32>
    %109 = arith.maximumf %107, %108 : vector<4x32xf32>
    %c0_48 = arith.constant 0 : index
    %c0_49 = arith.constant 0 : index
    %c0_50 = arith.constant 0 : index
    %110 = vector.load %arg7[%c0_48, %c0_49, %c0_50] : memref<1x4x32xf32, #tpu.memory_space<vmem>>, vector<1x4x32xf32>
    %111 = vector.shape_cast %110 : vector<1x4x32xf32> to vector<4x32xf32>
    %112 = vector.shape_cast %109 : vector<4x32xf32> to vector<1x4x32xf32>
    tpu.vector_store %arg7[%c0_48, %c0_49, %c0_50], %112 {strides = array<i32>} : memref<1x4x32xf32, #tpu.memory_space<vmem>>, vector<1x4x32xf32>,
    return
  }
  func.func @transform_0(%arg0: i32) -> (i32, i32) {
    %c0_i32 = arith.constant 0 : i32
    %c0_i32_0 = arith.constant 0 : i32
    return %c0_i32, %arg0 : i32, i32
  }
  func.func @transform_1(%arg0: i32) -> (i32, i32) {
    %c0_i32 = arith.constant 0 : i32
    %c0_i32_0 = arith.constant 0 : i32
    return %arg0, %c0_i32 : i32, i32
  }
  func.func @transform_2(%arg0: i32) -> (i32, i32) {
    %c0_i32 = arith.constant 0 : i32
    %c0_i32_0 = arith.constant 0 : i32
    %c0_i32_1 = arith.constant 0 : i32
    return %c0_i32, %c0_i32_0 : i32, i32
  }
  func.func @transform_3(%arg0: i32) -> (i32, i32) {
    %c0_i32 = arith.constant 0 : i32
    %c0_i32_0 = arith.constant 0 : i32
    %c0_i32_1 = arith.constant 0 : i32
    return %c0_i32, %c0_i32_0 : i32, i32
  }
  func.func @transform_4(%arg0: i32) -> (i32, i32) {
    %c0_i32 = arith.constant 0 : i32
    %c0_i32_0 = arith.constant 0 : i32
    %c0_i32_1 = arith.constant 0 : i32
    return %c0_i32, %c0_i32_0 : i32, i32
  }
  func.func @transform_5(%arg0: i32) -> (i32, i32) {
    %c0_i32 = arith.constant 0 : i32
    %c0_i32_0 = arith.constant 0 : i32
    %c0_i32_1 = arith.constant 0 : i32
    return %c0_i32, %c0_i32_0 : i32, i32
  }
  func.func @transform_6(%arg0: i32) -> (i32, i32, i32) {
    %c0_i32 = arith.constant 0 : i32
    %c0_i32_0 = arith.constant 0 : i32
    %c0_i32_1 = arith.constant 0 : i32
    return %arg0, %c0_i32, %c0_i32_0 : i32, i32, i32
  }
}

</mosaic_0001>

<llo_original>
// kernel: tpu_custom_call.1
$region0: #{tpu_custom_call.1}
  #allocation0 [shape = 'u32[]', space=smem, size = 0x4, offset = 0x4, fixed_abs, tag = 'smem constant byte address 0x4 - core index']
  #allocation1 [shape = 'u32[144,128]{1,0:T(1,128)}', space=vmem, size = 0x12000, scoped, tag = 'internal scratch']
  %s0 = inlined_call_operand.vmem [shape: f32[32,2048], index: 0, kind: input, shape index: {}]
  %s1 = inlined_call_operand.vmem [shape: f32[2048,32], index: 1, kind: input, shape index: {}]
  %s2 = inlined_call_operand.vmem [shape: f32[1176,32], index: 2, kind: input, shape index: {}]
  %s3 = inlined_call_operand.vmem [shape: f32[96,192], index: 3, kind: input, shape index: {}]
  %s4 = inlined_call_operand.vmem [shape: f32[64,2048], index: 4, kind: input, shape index: {}]
  %s5 = inlined_call_operand.vmem [shape: f32[520,64], index: 5, kind: input, shape index: {}]
  %s6 = inlined_call_operand.hbm [shape: f32[1,4,32], index: 6, kind: output, shape index: {}]
  %s7 = sld [smem:[#allocation0]]
  $region34: #{tpu_custom_call.1} parent=0
    _
  %s9 = ssub.s32 1, %s7
  %s10 = scalar_select 0, %s9, %s7
  $region1: #{tpu_custom_call.1} parent=0
    #allocation2 [shape = 'u8[2048]{0}', space=vmem, size = 0x800, scoped, tag = 'output window, operand 0, single buffered']
    #allocation3 [shape = 's32[1]{0}', space=sflag, size = 0x4, scoped, tag = 'scoped memory for tpu_custom_call.1']
    %11 = vsyncpa [#allocation3], 0
    // Predicated region
    $region2: #{tpu_custom_call.1} parent=1 // pred_check
      _
    $region3: #{tpu_custom_call.1} parent=1 // pred_check_branch
      %13 = sbr.rel (0) target = $region5
    $region4: #{tpu_custom_call.1} parent=1 // pred_region
      _
    $region5: #{tpu_custom_call.1} parent=1 // pred_fallthru
      _
    // Predicated region
    $region6: #{tpu_custom_call.1} parent=1 // pred_check
      _
    $region7: #{tpu_custom_call.1} parent=1 // pred_check_branch
      %15 = sbr.rel (0) target = $region9
    $region8: #{tpu_custom_call.1} parent=1 // pred_region
      _
    $region9: #{tpu_custom_call.1} parent=1 // pred_fallthru
      _
    // Predicated region
    $region10: #{tpu_custom_call.1} parent=1 // pred_check
      _
    $region11: #{tpu_custom_call.1} parent=1 // pred_check_branch
      %17 = sbr.rel (0) target = $region13
    $region12: #{tpu_custom_call.1} parent=1 // pred_region
      _
    $region13: #{tpu_custom_call.1} parent=1 // pred_fallthru
      _
    // Predicated region
    $region14: #{tpu_custom_call.1} parent=1 // pred_check
      _
    $region15: #{tpu_custom_call.1} parent=1 // pred_check_branch
      %19 = sbr.rel (0) target = $region17
    $region16: #{tpu_custom_call.1} parent=1 // pred_region
      _
    $region17: #{tpu_custom_call.1} parent=1 // pred_fallthru
      _
    // Predicated region
    $region18: #{tpu_custom_call.1} parent=1 // pred_check
      _
    $region19: #{tpu_custom_call.1} parent=1 // pred_check_branch
      %21 = sbr.rel (0) target = $region21
    $region20: #{tpu_custom_call.1} parent=1 // pred_region
      _
    $region21: #{tpu_custom_call.1} parent=1 // pred_fallthru
      _
    // Predicated region
    $region22: #{tpu_custom_call.1} parent=1 // pred_check
      _
    $region23: #{tpu_custom_call.1} parent=1 // pred_check_branch
      %23 = sbr.rel (0) target = $region25
    $region24: #{tpu_custom_call.1} parent=1 // pred_region
      _
    $region25: #{tpu_custom_call.1} parent=1 // pred_fallthru
      _
    %v24 = vld [vmem:[%s2] sm:$0xff]
    %v25 = vld [vmem:[%s2 + $0x8] sm:$0xff]
    %v26 = vld [vmem:[%s2 + $0x10] sm:$0xff]
    %v27 = vld [vmem:[%s2 + $0x18] sm:$0xff]
    %v28 = vld [vmem:[%s2 + $0x20] sm:$0xff]
    %v29 = vld [vmem:[%s2 + $0x28] sm:$0xff]
    %v30 = vld [vmem:[%s2 + $0x30] sm:$0xff]
    %v31 = vld [vmem:[%s2 + $0x38] sm:$0xff]
    %v32 = vld [vmem:[%s2 + $0x40] sm:$0xff]
    %v33 = vld [vmem:[%s2 + $0x48] sm:$0xff]
    %v34 = vld [vmem:[%s2 + $0x50] sm:$0xff]
    %v35 = vld [vmem:[%s2 + $0x58] sm:$0xff]
    %v36 = vld [vmem:[%s2 + $0x60] sm:$0xff]
    %v37 = vld [vmem:[%s2 + $0x68] sm:$0xff]
    %v38 = vld [vmem:[%s2 + $0x70] sm:$0xff]
    %v39 = vld [vmem:[%s2 + $0x78] sm:$0xff]
    %v40 = vld [vmem:[%s2 + $0x80] sm:$0xff]
    %v41 = vld [vmem:[%s2 + $0x88] sm:$0xff]
    %v42 = vld [vmem:[%s2 + $0x90] sm:$0xff]
    %v43 = vld [vmem:[%s2 + $0x98] sm:$0xff]
    %v44 = vld [vmem:[%s2 + $0xa0] sm:$0xff]
    %v45 = vld [vmem:[%s2 + $0xa8] sm:$0xff]
    %v46 = vld [vmem:[%s2 + $0xb0] sm:$0xff]
    %v47 = vld [vmem:[%s2 + $0xb8] sm:$0xff]
    %v48 = vld [vmem:[%s2 + $0xc0] sm:$0xff]
    %v49 = vld [vmem:[%s2 + $0xc8] sm:$0xff]
    %v50 = vld [vmem:[%s2 + $0xd0] sm:$0xff]
    %v51 = vld [vmem:[%s2 + $0xd8] sm:$0xff]
    %v52 = vld [vmem:[%s2 + $0xe0] sm:$0xff]
    %v53 = vld [vmem:[%s2 + $0xe8] sm:$0xff]
    %v54 = vld [vmem:[%s2 + $0xf0] sm:$0xff]
    %v55 = vld [vmem:[%s2 + $0xf8] sm:$0xff]
    %v56 = vld [vmem:[%s2 + $0x100] sm:$0xff]
    %v57 = vld [vmem:[%s2 + $0x108] sm:$0xff]
    %v58 = vld [vmem:[%s2 + $0x110] sm:$0xff]
    %v59 = vld [vmem:[%s2 + $0x118] sm:$0xff]
    %v60 = vld [vmem:[%s2 + $0x120] sm:$0xff]
    %v61 = vld [vmem:[%s2 + $0x128] sm:$0xff]
    %v62 = vld [vmem:[%s2 + $0x130] sm:$0xff]
    %v63 = vld [vmem:[%s2 + $0x138] sm:$0xff]
    %v64 = vld [vmem:[%s2 + $0x140] sm:$0xff]
    %v65 = vld [vmem:[%s2 + $0x148] sm:$0xff]
    %v66 = vld [vmem:[%s2 + $0x150] sm:$0xff]
    %v67 = vld [vmem:[%s2 + $0x158] sm:$0xff]
    %v68 = vld [vmem:[%s2 + $0x160] sm:$0xff]
    %v69 = vld [vmem:[%s2 + $0x168] sm:$0xff]
    %v70 = vld [vmem:[%s2 + $0x170] sm:$0xff]
    %v71 = vld [vmem:[%s2 + $0x178] sm:$0xff]
    %v72 = vld [vmem:[%s2 + $0x180] sm:$0xff]
    %v73 = vld [vmem:[%s2 + $0x188] sm:$0xff]
    %v74 = vld [vmem:[%s2 + $0x190] sm:$0xff]
    %v75 = vld [vmem:[%s2 + $0x198] sm:$0xff]
    %v76 = vld [vmem:[%s2 + $0x1a0] sm:$0xff]
    %v77 = vld [vmem:[%s2 + $0x1a8] sm:$0xff]
    %v78 = vld [vmem:[%s2 + $0x1b0] sm:$0xff]
    %v79 = vld [vmem:[%s2 + $0x1b8] sm:$0xff]
    %v80 = vld [vmem:[%s2 + $0x1c0] sm:$0xff]
    %v81 = vld [vmem:[%s2 + $0x1c8] sm:$0xff]
    %v82 = vld [vmem:[%s2 + $0x1d0] sm:$0xff]
    %v83 = vld [vmem:[%s2 + $0x1d8] sm:$0xff]
    %v84 = vld [vmem:[%s2 + $0x1e0] sm:$0xff]
    %v85 = vld [vmem:[%s2 + $0x1e8] sm:$0xff]
    %v86 = vld [vmem:[%s2 + $0x1f0] sm:$0xff]
    %v87 = vld [vmem:[%s2 + $0x1f8] sm:$0xff]
    %v88 = vld [vmem:[%s2 + $0x200] sm:$0xff]
    %v89 = vld [vmem:[%s2 + $0x208] sm:$0xff]
    %v90 = vld [vmem:[%s2 + $0x210] sm:$0xff]
    %v91 = vld [vmem:[%s2 + $0x218] sm:$0xff]
    %v92 = vld [vmem:[%s2 + $0x220] sm:$0xff]
    %v93 = vld [vmem:[%s2 + $0x228] sm:$0xff]
    %v94 = vld [vmem:[%s2 + $0x230] sm:$0xff]
    %v95 = vld [vmem:[%s2 + $0x238] sm:$0xff]
    %v96 = vld [vmem:[%s2 + $0x240] sm:$0xff]
    %v97 = vld [vmem:[%s2 + $0x248] sm:$0xff]
    %v98 = vld [vmem:[%s2 + $0x250] sm:$0xff]
    %v99 = vld [vmem:[%s2 + $0x258] sm:$0xff]
    %v100 = vld [vmem:[%s2 + $0x260] sm:$0xff]
    %v101 = vld [vmem:[%s2 + $0x268] sm:$0xff]
    %v102 = vld [vmem:[%s2 + $0x270] sm:$0xff]
    %v103 = vld [vmem:[%s2 + $0x278] sm:$0xff]
    %v104 = vld [vmem:[%s2 + $0x280] sm:$0xff]
    %v105 = vld [vmem:[%s2 + $0x288] sm:$0xff]
    %v106 = vld [vmem:[%s2 + $0x290] sm:$0xff]
    %v107 = vld [vmem:[%s2 + $0x298] sm:$0xff]
    %v108 = vld [vmem:[%s2 + $0x2a0] sm:$0xff]
    %v109 = vld [vmem:[%s2 + $0x2a8] sm:$0xff]
    %v110 = vld [vmem:[%s2 + $0x2b0] sm:$0xff]
    %v111 = vld [vmem:[%s2 + $0x2b8] sm:$0xff]
    %v112 = vld [vmem:[%s2 + $0x2c0] sm:$0xff]
    %v113 = vld [vmem:[%s2 + $0x2c8] sm:$0xff]
    %v114 = vld [vmem:[%s2 + $0x2d0] sm:$0xff]
    %v115 = vld [vmem:[%s2 + $0x2d8] sm:$0xff]
    %v116 = vld [vmem:[%s2 + $0x2e0] sm:$0xff]
    %v117 = vld [vmem:[%s2 + $0x2e8] sm:$0xff]
    %v118 = vld [vmem:[%s2 + $0x2f0] sm:$0xff]
    %v119 = vld [vmem:[%s2 + $0x2f8] sm:$0xff]
    %v120 = vld [vmem:[%s2 + $0x300] sm:$0xff]
    %v121 = vld [vmem:[%s2 + $0x308] sm:$0xff]
    %v122 = vld [vmem:[%s2 + $0x310] sm:$0xff]
    %v123 = vld [vmem:[%s2 + $0x318] sm:$0xff]
    %v124 = vld [vmem:[%s2 + $0x320] sm:$0xff]
    %v125 = vld [vmem:[%s2 + $0x328] sm:$0xff]
    %v126 = vld [vmem:[%s2 + $0x330] sm:$0xff]
    %v127 = vld [vmem:[%s2 + $0x338] sm:$0xff]
    %v128 = vld [vmem:[%s2 + $0x340] sm:$0xff]
    %v129 = vld [vmem:[%s2 + $0x348] sm:$0xff]
    %v130 = vld [vmem:[%s2 + $0x350] sm:$0xff]
    %v131 = vld [vmem:[%s2 + $0x358] sm:$0xff]
    %v132 = vld [vmem:[%s2 + $0x360] sm:$0xff]
    %v133 = vld [vmem:[%s2 + $0x368] sm:$0xff]
    %v134 = vld [vmem:[%s2 + $0x370] sm:$0xff]
    %v135 = vld [vmem:[%s2 + $0x378] sm:$0xff]
    %v136 = vld [vmem:[%s2 + $0x380] sm:$0xff]
    %v137 = vld [vmem:[%s2 + $0x388] sm:$0xff]
    %v138 = vld [vmem:[%s2 + $0x390] sm:$0xff]
    %v139 = vld [vmem:[%s2 + $0x398] sm:$0xff]
    %v140 = vld [vmem:[%s2 + $0x3a0] sm:$0xff]
    %v141 = vld [vmem:[%s2 + $0x3a8] sm:$0xff]
    %v142 = vld [vmem:[%s2 + $0x3b0] sm:$0xff]
    %v143 = vld [vmem:[%s2 + $0x3b8] sm:$0xff]
    %v144 = vld [vmem:[%s2 + $0x3c0] sm:$0xff]
    %v145 = vld [vmem:[%s2 + $0x3c8] sm:$0xff]
    %v146 = vld [vmem:[%s2 + $0x3d0] sm:$0xff]
    %v147 = vld [vmem:[%s2 + $0x3d8] sm:$0xff]
    %v148 = vld [vmem:[%s2 + $0x3e0] sm:$0xff]
    %v149 = vld [vmem:[%s2 + $0x3e8] sm:$0xff]
    %v150 = vld [vmem:[%s2 + $0x3f0] sm:$0xff]
    %v151 = vld [vmem:[%s2 + $0x3f8] sm:$0xff]
    %v152 = vld [vmem:[%s2 + $0x400] sm:$0xff]
    %v153 = vld [vmem:[%s2 + $0x408] sm:$0xff]
    %v154 = vld [vmem:[%s2 + $0x410] sm:$0xff]
    %v155 = vld [vmem:[%s2 + $0x418] sm:$0xff]
    %v156 = vld [vmem:[%s2 + $0x420] sm:$0xff]
    %v157 = vld [vmem:[%s2 + $0x428] sm:$0xff]
    %v158 = vld [vmem:[%s2 + $0x430] sm:$0xff]
    %v159 = vld [vmem:[%s2 + $0x438] sm:$0xff]
    %v160 = vld [vmem:[%s2 + $0x440] sm:$0xff]
    %v161 = vld [vmem:[%s2 + $0x448] sm:$0xff]
    %v162 = vld [vmem:[%s2 + $0x450] sm:$0xff]
    %v163 = vld [vmem:[%s2 + $0x458] sm:$0xff]
    %v164 = vld [vmem:[%s2 + $0x460] sm:$0xff]
    %v165 = vld [vmem:[%s2 + $0x468] sm:$0xff]
    %v166 = vld [vmem:[%s2 + $0x470] sm:$0xff]
    %v167 = vld [vmem:[%s2 + $0x478] sm:$0xff]
    %v168 = vld [vmem:[%s2 + $0x480] sm:$0xff]
    %v169 = vld [vmem:[%s2 + $0x488] sm:$0xff]
    %v170 = vld [vmem:[%s2 + $0x490] sm:$0xff]
    %v171 = vld [vmem:[%s3] sm:$0xff]
    %v172 = vld [vmem:[%s3 + $0x8] sm:$0xff]
    %v173 = vld [vmem:[%s3 + $0x10] sm:$0xff]
    %v174 = vld [vmem:[%s3 + $0x18] sm:$0xff]
    %v175 = vld [vmem:[%s3 + $0x20] sm:$0xff]
    %v176 = vld [vmem:[%s3 + $0x28] sm:$0xff]
    %v177 = vld [vmem:[%s3 + $0x30] sm:$0xff]
    %v178 = vld [vmem:[%s3 + $0x38] sm:$0xff]
    %v179 = vld [vmem:[%s3 + $0x40] sm:$0xff]
    %v180 = vld [vmem:[%s3 + $0x48] sm:$0xff]
    %v181 = vld [vmem:[%s3 + $0x50] sm:$0xff]
    %v182 = vld [vmem:[%s3 + $0x58] sm:$0xff]
    %v183 = vld [vmem:[%s3 + $0x60] sm:$0xff]
    %v184 = vld [vmem:[%s3 + $0x68] sm:$0xff]
    %v185 = vld [vmem:[%s3 + $0x70] sm:$0xff]
    %v186 = vld [vmem:[%s3 + $0x78] sm:$0xff]
    %v187 = vld [vmem:[%s3 + $0x80] sm:$0xff]
    %v188 = vld [vmem:[%s3 + $0x88] sm:$0xff]
    %v189 = vld [vmem:[%s3 + $0x90] sm:$0xff]
    %v190 = vld [vmem:[%s3 + $0x98] sm:$0xff]
    %v191 = vld [vmem:[%s3 + $0xa0] sm:$0xff]
    %v192 = vld [vmem:[%s3 + $0xa8] sm:$0xff]
    %v193 = vld [vmem:[%s3 + $0xb0] sm:$0xff]
    %v194 = vld [vmem:[%s3 + $0xb8] sm:$0xff]
    %v195 = vld [vmem:[%s4] sm:$0xff]
    %v196 = vld [vmem:[%s4 + $0x8] sm:$0xff]
    %v197 = vld [vmem:[%s4 + $0x10] sm:$0xff]
    %v198 = vld [vmem:[%s4 + $0x18] sm:$0xff]
    %v199 = vld [vmem:[%s4 + $0x20] sm:$0xff]
    %v200 = vld [vmem:[%s4 + $0x28] sm:$0xff]
    %v201 = vld [vmem:[%s4 + $0x30] sm:$0xff]
    %v202 = vld [vmem:[%s4 + $0x38] sm:$0xff]
    %v203 = vld [vmem:[%s4 + $0x40] sm:$0xff]
    %v204 = vld [vmem:[%s4 + $0x48] sm:$0xff]
    %v205 = vld [vmem:[%s4 + $0x50] sm:$0xff]
    %v206 = vld [vmem:[%s4 + $0x58] sm:$0xff]
    %v207 = vld [vmem:[%s4 + $0x60] sm:$0xff]
    %v208 = vld [vmem:[%s4 + $0x68] sm:$0xff]
    %v209 = vld [vmem:[%s4 + $0x70] sm:$0xff]
    %v210 = vld [vmem:[%s4 + $0x78] sm:$0xff]
    %v211 = vld [vmem:[%s4 + $0x80] sm:$0xff]
    %v212 = vld [vmem:[%s4 + $0x88] sm:$0xff]
    %v213 = vld [vmem:[%s4 + $0x90] sm:$0xff]
    %v214 = vld [vmem:[%s4 + $0x98] sm:$0xff]
    %v215 = vld [vmem:[%s4 + $0xa0] sm:$0xff]
    %v216 = vld [vmem:[%s4 + $0xa8] sm:$0xff]
    %v217 = vld [vmem:[%s4 + $0xb0] sm:$0xff]
    %v218 = vld [vmem:[%s4 + $0xb8] sm:$0xff]
    %v219 = vld [vmem:[%s4 + $0xc0] sm:$0xff]
    %v220 = vld [vmem:[%s4 + $0xc8] sm:$0xff]
    %v221 = vld [vmem:[%s4 + $0xd0] sm:$0xff]
    %v222 = vld [vmem:[%s4 + $0xd8] sm:$0xff]
    %v223 = vld [vmem:[%s4 + $0xe0] sm:$0xff]
    %v224 = vld [vmem:[%s4 + $0xe8] sm:$0xff]
    %v225 = vld [vmem:[%s4 + $0xf0] sm:$0xff]
    %v226 = vld [vmem:[%s4 + $0xf8] sm:$0xff]
    %v227 = vld [vmem:[%s4 + $0x100] sm:$0xff]
    %v228 = vld [vmem:[%s4 + $0x108] sm:$0xff]
    %v229 = vld [vmem:[%s4 + $0x110] sm:$0xff]
    %v230 = vld [vmem:[%s4 + $0x118] sm:$0xff]
    %v231 = vld [vmem:[%s4 + $0x120] sm:$0xff]
    %v232 = vld [vmem:[%s4 + $0x128] sm:$0xff]
    %v233 = vld [vmem:[%s4 + $0x130] sm:$0xff]
    %v234 = vld [vmem:[%s4 + $0x138] sm:$0xff]
    %v235 = vld [vmem:[%s4 + $0x140] sm:$0xff]
    %v236 = vld [vmem:[%s4 + $0x148] sm:$0xff]
    %v237 = vld [vmem:[%s4 + $0x150] sm:$0xff]
    %v238 = vld [vmem:[%s4 + $0x158] sm:$0xff]
    %v239 = vld [vmem:[%s4 + $0x160] sm:$0xff]
    %v240 = vld [vmem:[%s4 + $0x168] sm:$0xff]
    %v241 = vld [vmem:[%s4 + $0x170] sm:$0xff]
    %v242 = vld [vmem:[%s4 + $0x178] sm:$0xff]
    %v243 = vld [vmem:[%s4 + $0x180] sm:$0xff]
    %v244 = vld [vmem:[%s4 + $0x188] sm:$0xff]
    %v245 = vld [vmem:[%s4 + $0x190] sm:$0xff]
    %v246 = vld [vmem:[%s4 + $0x198] sm:$0xff]
    %v247 = vld [vmem:[%s4 + $0x1a0] sm:$0xff]
    %v248 = vld [vmem:[%s4 + $0x1a8] sm:$0xff]
    %v249 = vld [vmem:[%s4 + $0x1b0] sm:$0xff]
    %v250 = vld [vmem:[%s4 + $0x1b8] sm:$0xff]
    %v251 = vld [vmem:[%s4 + $0x1c0] sm:$0xff]
    %v252 = vld [vmem:[%s4 + $0x1c8] sm:$0xff]
    %v253 = vld [vmem:[%s4 + $0x1d0] sm:$0xff]
    %v254 = vld [vmem:[%s4 + $0x1d8] sm:$0xff]
    %v255 = vld [vmem:[%s4 + $0x1e0] sm:$0xff]
    %v256 = vld [vmem:[%s4 + $0x1e8] sm:$0xff]
    %v257 = vld [vmem:[%s4 + $0x1f0] sm:$0xff]
    %v258 = vld [vmem:[%s4 + $0x1f8] sm:$0xff]
    %v259 = vld [vmem:[%s4 + $0x200] sm:$0xff]
    %v260 = vld [vmem:[%s4 + $0x208] sm:$0xff]
    %v261 = vld [vmem:[%s4 + $0x210] sm:$0xff]
    %v262 = vld [vmem:[%s4 + $0x218] sm:$0xff]
    %v263 = vld [vmem:[%s4 + $0x220] sm:$0xff]
    %v264 = vld [vmem:[%s4 + $0x228] sm:$0xff]
    %v265 = vld [vmem:[%s4 + $0x230] sm:$0xff]
    %v266 = vld [vmem:[%s4 + $0x238] sm:$0xff]
    %v267 = vld [vmem:[%s4 + $0x240] sm:$0xff]
    %v268 = vld [vmem:[%s4 + $0x248] sm:$0xff]
    %v269 = vld [vmem:[%s4 + $0x250] sm:$0xff]
    %v270 = vld [vmem:[%s4 + $0x258] sm:$0xff]
    %v271 = vld [vmem:[%s4 + $0x260] sm:$0xff]
    %v272 = vld [vmem:[%s4 + $0x268] sm:$0xff]
    %v273 = vld [vmem:[%s4 + $0x270] sm:$0xff]
    %v274 = vld [vmem:[%s4 + $0x278] sm:$0xff]
    %v275 = vld [vmem:[%s4 + $0x280] sm:$0xff]
    %v276 = vld [vmem:[%s4 + $0x288] sm:$0xff]
    %v277 = vld [vmem:[%s4 + $0x290] sm:$0xff]
    %v278 = vld [vmem:[%s4 + $0x298] sm:$0xff]
    %v279 = vld [vmem:[%s4 + $0x2a0] sm:$0xff]
    %v280 = vld [vmem:[%s4 + $0x2a8] sm:$0xff]
    %v281 = vld [vmem:[%s4 + $0x2b0] sm:$0xff]
    %v282 = vld [vmem:[%s4 + $0x2b8] sm:$0xff]
    %v283 = vld [vmem:[%s4 + $0x2c0] sm:$0xff]
    %v284 = vld [vmem:[%s4 + $0x2c8] sm:$0xff]
    %v285 = vld [vmem:[%s4 + $0x2d0] sm:$0xff]
    %v286 = vld [vmem:[%s4 + $0x2d8] sm:$0xff]
    %v287 = vld [vmem:[%s4 + $0x2e0] sm:$0xff]
    %v288 = vld [vmem:[%s4 + $0x2e8] sm:$0xff]
    %v289 = vld [vmem:[%s4 + $0x2f0] sm:$0xff]
    %v290 = vld [vmem:[%s4 + $0x2f8] sm:$0xff]
    %v291 = vld [vmem:[%s4 + $0x300] sm:$0xff]
    %v292 = vld [vmem:[%s4 + $0x308] sm:$0xff]
    %v293 = vld [vmem:[%s4 + $0x310] sm:$0xff]
    %v294 = vld [vmem:[%s4 + $0x318] sm:$0xff]
    %v295 = vld [vmem:[%s4 + $0x320] sm:$0xff]
    %v296 = vld [vmem:[%s4 + $0x328] sm:$0xff]
    %v297 = vld [vmem:[%s4 + $0x330] sm:$0xff]
    %v298 = vld [vmem:[%s4 + $0x338] sm:$0xff]
    %v299 = vld [vmem:[%s4 + $0x340] sm:$0xff]
    %v300 = vld [vmem:[%s4 + $0x348] sm:$0xff]
    %v301 = vld [vmem:[%s4 + $0x350] sm:$0xff]
    %v302 = vld [vmem:[%s4 + $0x358] sm:$0xff]
    %v303 = vld [vmem:[%s4 + $0x360] sm:$0xff]
    %v304 = vld [vmem:[%s4 + $0x368] sm:$0xff]
    %v305 = vld [vmem:[%s4 + $0x370] sm:$0xff]
    %v306 = vld [vmem:[%s4 + $0x378] sm:$0xff]
    %v307 = vld [vmem:[%s4 + $0x380] sm:$0xff]
    %v308 = vld [vmem:[%s4 + $0x388] sm:$0xff]
    %v309 = vld [vmem:[%s4 + $0x390] sm:$0xff]
    %v310 = vld [vmem:[%s4 + $0x398] sm:$0xff]
    %v311 = vld [vmem:[%s4 + $0x3a0] sm:$0xff]
    %v312 = vld [vmem:[%s4 + $0x3a8] sm:$0xff]
    %v313 = vld [vmem:[%s4 + $0x3b0] sm:$0xff]
    %v314 = vld [vmem:[%s4 + $0x3b8] sm:$0xff]
    %v315 = vld [vmem:[%s4 + $0x3c0] sm:$0xff]
    %v316 = vld [vmem:[%s4 + $0x3c8] sm:$0xff]
    %v317 = vld [vmem:[%s4 + $0x3d0] sm:$0xff]
    %v318 = vld [vmem:[%s4 + $0x3d8] sm:$0xff]
    %v319 = vld [vmem:[%s4 + $0x3e0] sm:$0xff]
    %v320 = vld [vmem:[%s4 + $0x3e8] sm:$0xff]
    %v321 = vld [vmem:[%s4 + $0x3f0] sm:$0xff]
    %v322 = vld [vmem:[%s4 + $0x3f8] sm:$0xff]
    %v323 = vld [vmem:[%s5] sm:$0xff]
    %v324 = vld [vmem:[%s5 + $0x8] sm:$0xff]
    %v325 = vld [vmem:[%s5 + $0x10] sm:$0xff]
    %v326 = vld [vmem:[%s5 + $0x18] sm:$0xff]
    %v327 = vld [vmem:[%s5 + $0x20] sm:$0xff]
    %v328 = vld [vmem:[%s5 + $0x28] sm:$0xff]
    %v329 = vld [vmem:[%s5 + $0x30] sm:$0xff]
    %v330 = vld [vmem:[%s5 + $0x38] sm:$0xff]
    %v331 = vld [vmem:[%s5 + $0x40] sm:$0xff]
    %v332 = vld [vmem:[%s5 + $0x48] sm:$0xff]
    %v333 = vld [vmem:[%s5 + $0x50] sm:$0xff]
    %v334 = vld [vmem:[%s5 + $0x58] sm:$0xff]
    %v335 = vld [vmem:[%s5 + $0x60] sm:$0xff]
    %v336 = vld [vmem:[%s5 + $0x68] sm:$0xff]
    %v337 = vld [vmem:[%s5 + $0x70] sm:$0xff]
    %v338 = vld [vmem:[%s5 + $0x78] sm:$0xff]
    %v339 = vld [vmem:[%s5 + $0x80] sm:$0xff]
    %v340 = vld [vmem:[%s5 + $0x88] sm:$0xff]
    %v341 = vld [vmem:[%s5 + $0x90] sm:$0xff]
    %v342 = vld [vmem:[%s5 + $0x98] sm:$0xff]
    %v343 = vld [vmem:[%s5 + $0xa0] sm:$0xff]
    %v344 = vld [vmem:[%s5 + $0xa8] sm:$0xff]
    %v345 = vld [vmem:[%s5 + $0xb0] sm:$0xff]
    %v346 = vld [vmem:[%s5 + $0xb8] sm:$0xff]
    %v347 = vld [vmem:[%s5 + $0xc0] sm:$0xff]
    %v348 = vld [vmem:[%s5 + $0xc8] sm:$0xff]
    %v349 = vld [vmem:[%s5 + $0xd0] sm:$0xff]
    %v350 = vld [vmem:[%s5 + $0xd8] sm:$0xff]
    %v351 = vld [vmem:[%s5 + $0xe0] sm:$0xff]
    %v352 = vld [vmem:[%s5 + $0xe8] sm:$0xff]
    %v353 = vld [vmem:[%s5 + $0xf0] sm:$0xff]
    %v354 = vld [vmem:[%s5 + $0xf8] sm:$0xff]
    %v355 = vld [vmem:[%s5 + $0x100] sm:$0xff]
    %v356 = vld [vmem:[%s5 + $0x108] sm:$0xff]
    %v357 = vld [vmem:[%s5 + $0x110] sm:$0xff]
    %v358 = vld [vmem:[%s5 + $0x118] sm:$0xff]
    %v359 = vld [vmem:[%s5 + $0x120] sm:$0xff]
    %v360 = vld [vmem:[%s5 + $0x128] sm:$0xff]
    %v361 = vld [vmem:[%s5 + $0x130] sm:$0xff]
    %v362 = vld [vmem:[%s5 + $0x138] sm:$0xff]
    %v363 = vld [vmem:[%s5 + $0x140] sm:$0xff]
    %v364 = vld [vmem:[%s5 + $0x148] sm:$0xff]
    %v365 = vld [vmem:[%s5 + $0x150] sm:$0xff]
    %v366 = vld [vmem:[%s5 + $0x158] sm:$0xff]
    %v367 = vld [vmem:[%s5 + $0x160] sm:$0xff]
    %v368 = vld [vmem:[%s5 + $0x168] sm:$0xff]
    %v369 = vld [vmem:[%s5 + $0x170] sm:$0xff]
    %v370 = vld [vmem:[%s5 + $0x178] sm:$0xff]
    %v371 = vld [vmem:[%s5 + $0x180] sm:$0xff]
    %v372 = vld [vmem:[%s5 + $0x188] sm:$0xff]
    %v373 = vld [vmem:[%s5 + $0x190] sm:$0xff]
    %v374 = vld [vmem:[%s5 + $0x198] sm:$0xff]
    %v375 = vld [vmem:[%s5 + $0x1a0] sm:$0xff]
    %v376 = vld [vmem:[%s5 + $0x1a8] sm:$0xff]
    %v377 = vld [vmem:[%s5 + $0x1b0] sm:$0xff]
    %v378 = vld [vmem:[%s5 + $0x1b8] sm:$0xff]
    %v379 = vld [vmem:[%s5 + $0x1c0] sm:$0xff]
    %v380 = vld [vmem:[%s5 + $0x1c8] sm:$0xff]
    %v381 = vld [vmem:[%s5 + $0x1d0] sm:$0xff]
    %v382 = vld [vmem:[%s5 + $0x1d8] sm:$0xff]
    %v383 = vld [vmem:[%s5 + $0x1e0] sm:$0xff]
    %v384 = vld [vmem:[%s5 + $0x1e8] sm:$0xff]
    %v385 = vld [vmem:[%s5 + $0x1f0] sm:$0xff]
    %v386 = vld [vmem:[%s5 + $0x1f8] sm:$0xff]
    %v387 = vld [vmem:[%s5 + $0x200] sm:$0xf]
    %v388 = vld [vmem:[%s0] sm:$0xff]
    %v389 = vld [vmem:[%s0 + $0x8] sm:$0xff]
    %v390 = vld [vmem:[%s0 + $0x10] sm:$0xff]
    %v391 = vld [vmem:[%s0 + $0x18] sm:$0xff]
    %v392 = vld [vmem:[%s0 + $0x20] sm:$0xff]
    %v393 = vld [vmem:[%s0 + $0x28] sm:$0xff]
    %v394 = vld [vmem:[%s0 + $0x30] sm:$0xff]
    %v395 = vld [vmem:[%s0 + $0x38] sm:$0xff]
    %v396 = vld [vmem:[%s0 + $0x40] sm:$0xff]
    %v397 = vld [vmem:[%s0 + $0x48] sm:$0xff]
    %v398 = vld [vmem:[%s0 + $0x50] sm:$0xff]
    %v399 = vld [vmem:[%s0 + $0x58] sm:$0xff]
    %v400 = vld [vmem:[%s0 + $0x60] sm:$0xff]
    %v401 = vld [vmem:[%s0 + $0x68] sm:$0xff]
    %v402 = vld [vmem:[%s0 + $0x70] sm:$0xff]
    %v403 = vld [vmem:[%s0 + $0x78] sm:$0xff]
    %v404 = vld [vmem:[%s0 + $0x80] sm:$0xff]
    %v405 = vld [vmem:[%s0 + $0x88] sm:$0xff]
    %v406 = vld [vmem:[%s0 + $0x90] sm:$0xff]
    %v407 = vld [vmem:[%s0 + $0x98] sm:$0xff]
    %v408 = vld [vmem:[%s0 + $0xa0] sm:$0xff]
    %v409 = vld [vmem:[%s0 + $0xa8] sm:$0xff]
    %v410 = vld [vmem:[%s0 + $0xb0] sm:$0xff]
    %v411 = vld [vmem:[%s0 + $0xb8] sm:$0xff]
    %v412 = vld [vmem:[%s0 + $0xc0] sm:$0xff]
    %v413 = vld [vmem:[%s0 + $0xc8] sm:$0xff]
    %v414 = vld [vmem:[%s0 + $0xd0] sm:$0xff]
    %v415 = vld [vmem:[%s0 + $0xd8] sm:$0xff]
    %v416 = vld [vmem:[%s0 + $0xe0] sm:$0xff]
    %v417 = vld [vmem:[%s0 + $0xe8] sm:$0xff]
    %v418 = vld [vmem:[%s0 + $0xf0] sm:$0xff]
    %v419 = vld [vmem:[%s0 + $0xf8] sm:$0xff]
    %v420 = vld [vmem:[%s0 + $0x100] sm:$0xff]
    %v421 = vld [vmem:[%s0 + $0x108] sm:$0xff]
    %v422 = vld [vmem:[%s0 + $0x110] sm:$0xff]
    %v423 = vld [vmem:[%s0 + $0x118] sm:$0xff]
    %v424 = vld [vmem:[%s0 + $0x120] sm:$0xff]
    %v425 = vld [vmem:[%s0 + $0x128] sm:$0xff]
    %v426 = vld [vmem:[%s0 + $0x130] sm:$0xff]
    %v427 = vld [vmem:[%s0 + $0x138] sm:$0xff]
    %v428 = vld [vmem:[%s0 + $0x140] sm:$0xff]
    %v429 = vld [vmem:[%s0 + $0x148] sm:$0xff]
    %v430 = vld [vmem:[%s0 + $0x150] sm:$0xff]
    %v431 = vld [vmem:[%s0 + $0x158] sm:$0xff]
    %v432 = vld [vmem:[%s0 + $0x160] sm:$0xff]
    %v433 = vld [vmem:[%s0 + $0x168] sm:$0xff]
    %v434 = vld [vmem:[%s0 + $0x170] sm:$0xff]
    %v435 = vld [vmem:[%s0 + $0x178] sm:$0xff]
    %v436 = vld [vmem:[%s0 + $0x180] sm:$0xff]
    %v437 = vld [vmem:[%s0 + $0x188] sm:$0xff]
    %v438 = vld [vmem:[%s0 + $0x190] sm:$0xff]
    %v439 = vld [vmem:[%s0 + $0x198] sm:$0xff]
    %v440 = vld [vmem:[%s0 + $0x1a0] sm:$0xff]
    %v441 = vld [vmem:[%s0 + $0x1a8] sm:$0xff]
    %v442 = vld [vmem:[%s0 + $0x1b0] sm:$0xff]
    %v443 = vld [vmem:[%s0 + $0x1b8] sm:$0xff]
    %v444 = vld [vmem:[%s0 + $0x1c0] sm:$0xff]
    %v445 = vld [vmem:[%s0 + $0x1c8] sm:$0xff]
    %v446 = vld [vmem:[%s0 + $0x1d0] sm:$0xff]
    %v447 = vld [vmem:[%s0 + $0x1d8] sm:$0xff]
    %v448 = vld [vmem:[%s0 + $0x1e0] sm:$0xff]
    %v449 = vld [vmem:[%s0 + $0x1e8] sm:$0xff]
    %v450 = vld [vmem:[%s0 + $0x1f0] sm:$0xff]
    %v451 = vld [vmem:[%s0 + $0x1f8] sm:$0xff]
    %v452 = vld [vmem:[%s1] sm:$0xff]
    %v453 = vld [vmem:[%s1 + $0x8] sm:$0xff]
    %v454 = vld [vmem:[%s1 + $0x10] sm:$0xff]
    %v455 = vld [vmem:[%s1 + $0x18] sm:$0xff]
    %v456 = vld [vmem:[%s1 + $0x20] sm:$0xff]
    %v457 = vld [vmem:[%s1 + $0x28] sm:$0xff]
    %v458 = vld [vmem:[%s1 + $0x30] sm:$0xff]
    %v459 = vld [vmem:[%s1 + $0x38] sm:$0xff]
    %v460 = vld [vmem:[%s1 + $0x40] sm:$0xff]
    %v461 = vld [vmem:[%s1 + $0x48] sm:$0xff]
    %v462 = vld [vmem:[%s1 + $0x50] sm:$0xff]
    %v463 = vld [vmem:[%s1 + $0x58] sm:$0xff]
    %v464 = vld [vmem:[%s1 + $0x60] sm:$0xff]
    %v465 = vld [vmem:[%s1 + $0x68] sm:$0xff]
    %v466 = vld [vmem:[%s1 + $0x70] sm:$0xff]
    %v467 = vld [vmem:[%s1 + $0x78] sm:$0xff]
    %v468 = vld [vmem:[%s1 + $0x80] sm:$0xff]
    %v469 = vld [vmem:[%s1 + $0x88] sm:$0xff]
    %v470 = vld [vmem:[%s1 + $0x90] sm:$0xff]
    %v471 = vld [vmem:[%s1 + $0x98] sm:$0xff]
    %v472 = vld [vmem:[%s1 + $0xa0] sm:$0xff]
    %v473 = vld [vmem:[%s1 + $0xa8] sm:$0xff]
    %v474 = vld [vmem:[%s1 + $0xb0] sm:$0xff]
    %v475 = vld [vmem:[%s1 + $0xb8] sm:$0xff]
    %v476 = vld [vmem:[%s1 + $0xc0] sm:$0xff]
    %v477 = vld [vmem:[%s1 + $0xc8] sm:$0xff]
    %v478 = vld [vmem:[%s1 + $0xd0] sm:$0xff]
    %v479 = vld [vmem:[%s1 + $0xd8] sm:$0xff]
    %v480 = vld [vmem:[%s1 + $0xe0] sm:$0xff]
    %v481 = vld [vmem:[%s1 + $0xe8] sm:$0xff]
    %v482 = vld [vmem:[%s1 + $0xf0] sm:$0xff]
    %v483 = vld [vmem:[%s1 + $0xf8] sm:$0xff]
    %v484 = vld [vmem:[%s1 + $0x100] sm:$0xff]
    %v485 = vld [vmem:[%s1 + $0x108] sm:$0xff]
    %v486 = vld [vmem:[%s1 + $0x110] sm:$0xff]
    %v487 = vld [vmem:[%s1 + $0x118] sm:$0xff]
    %v488 = vld [vmem:[%s1 + $0x120] sm:$0xff]
    %v489 = vld [vmem:[%s1 + $0x128] sm:$0xff]
    %v490 = vld [vmem:[%s1 + $0x130] sm:$0xff]
    %v491 = vld [vmem:[%s1 + $0x138] sm:$0xff]
    %v492 = vld [vmem:[%s1 + $0x140] sm:$0xff]
    %v493 = vld [vmem:[%s1 + $0x148] sm:$0xff]
    %v494 = vld [vmem:[%s1 + $0x150] sm:$0xff]
    %v495 = vld [vmem:[%s1 + $0x158] sm:$0xff]
    %v496 = vld [vmem:[%s1 + $0x160] sm:$0xff]
    %v497 = vld [vmem:[%s1 + $0x168] sm:$0xff]
    %v498 = vld [vmem:[%s1 + $0x170] sm:$0xff]
    %v499 = vld [vmem:[%s1 + $0x178] sm:$0xff]
    %v500 = vld [vmem:[%s1 + $0x180] sm:$0xff]
    %v501 = vld [vmem:[%s1 + $0x188] sm:$0xff]
    %v502 = vld [vmem:[%s1 + $0x190] sm:$0xff]
    %v503 = vld [vmem:[%s1 + $0x198] sm:$0xff]
    %v504 = vld [vmem:[%s1 + $0x1a0] sm:$0xff]
    %v505 = vld [vmem:[%s1 + $0x1a8] sm:$0xff]
    %v506 = vld [vmem:[%s1 + $0x1b0] sm:$0xff]
    %v507 = vld [vmem:[%s1 + $0x1b8] sm:$0xff]
    %v508 = vld [vmem:[%s1 + $0x1c0] sm:$0xff]
    %v509 = vld [vmem:[%s1 + $0x1c8] sm:$0xff]
    %v510 = vld [vmem:[%s1 + $0x1d0] sm:$0xff]
    %v511 = vld [vmem:[%s1 + $0x1d8] sm:$0xff]
    %v512 = vld [vmem:[%s1 + $0x1e0] sm:$0xff]
    %v513 = vld [vmem:[%s1 + $0x1e8] sm:$0xff]
    %v514 = vld [vmem:[%s1 + $0x1f0] sm:$0xff]
    %v515 = vld [vmem:[%s1 + $0x1f8] sm:$0xff]
    %v516 = vld [vmem:[%s1 + $0x200] sm:$0xff]
    %v517 = vld [vmem:[%s1 + $0x208] sm:$0xff]
    %v518 = vld [vmem:[%s1 + $0x210] sm:$0xff]
    %v519 = vld [vmem:[%s1 + $0x218] sm:$0xff]
    %v520 = vld [vmem:[%s1 + $0x220] sm:$0xff]
    %v521 = vld [vmem:[%s1 + $0x228] sm:$0xff]
    %v522 = vld [vmem:[%s1 + $0x230] sm:$0xff]
    %v523 = vld [vmem:[%s1 + $0x238] sm:$0xff]
    %v524 = vld [vmem:[%s1 + $0x240] sm:$0xff]
    %v525 = vld [vmem:[%s1 + $0x248] sm:$0xff]
    %v526 = vld [vmem:[%s1 + $0x250] sm:$0xff]
    %v527 = vld [vmem:[%s1 + $0x258] sm:$0xff]
    %v528 = vld [vmem:[%s1 + $0x260] sm:$0xff]
    %v529 = vld [vmem:[%s1 + $0x268] sm:$0xff]
    %v530 = vld [vmem:[%s1 + $0x270] sm:$0xff]
    %v531 = vld [vmem:[%s1 + $0x278] sm:$0xff]
    %v532 = vld [vmem:[%s1 + $0x280] sm:$0xff]
    %v533 = vld [vmem:[%s1 + $0x288] sm:$0xff]
    %v534 = vld [vmem:[%s1 + $0x290] sm:$0xff]
    %v535 = vld [vmem:[%s1 + $0x298] sm:$0xff]
    %v536 = vld [vmem:[%s1 + $0x2a0] sm:$0xff]
    %v537 = vld [vmem:[%s1 + $0x2a8] sm:$0xff]
    %v538 = vld [vmem:[%s1 + $0x2b0] sm:$0xff]
    %v539 = vld [vmem:[%s1 + $0x2b8] sm:$0xff]
    %v540 = vld [vmem:[%s1 + $0x2c0] sm:$0xff]
    %v541 = vld [vmem:[%s1 + $0x2c8] sm:$0xff]
    %v542 = vld [vmem:[%s1 + $0x2d0] sm:$0xff]
    %v543 = vld [vmem:[%s1 + $0x2d8] sm:$0xff]
    %v544 = vld [vmem:[%s1 + $0x2e0] sm:$0xff]
    %v545 = vld [vmem:[%s1 + $0x2e8] sm:$0xff]
    %v546 = vld [vmem:[%s1 + $0x2f0] sm:$0xff]
    %v547 = vld [vmem:[%s1 + $0x2f8] sm:$0xff]
    %v548 = vld [vmem:[%s1 + $0x300] sm:$0xff]
    %v549 = vld [vmem:[%s1 + $0x308] sm:$0xff]
    %v550 = vld [vmem:[%s1 + $0x310] sm:$0xff]
    %v551 = vld [vmem:[%s1 + $0x318] sm:$0xff]
    %v552 = vld [vmem:[%s1 + $0x320] sm:$0xff]
    %v553 = vld [vmem:[%s1 + $0x328] sm:$0xff]
    %v554 = vld [vmem:[%s1 + $0x330] sm:$0xff]
    %v555 = vld [vmem:[%s1 + $0x338] sm:$0xff]
    %v556 = vld [vmem:[%s1 + $0x340] sm:$0xff]
    %v557 = vld [vmem:[%s1 + $0x348] sm:$0xff]
    %v558 = vld [vmem:[%s1 + $0x350] sm:$0xff]
    %v559 = vld [vmem:[%s1 + $0x358] sm:$0xff]
    %v560 = vld [vmem:[%s1 + $0x360] sm:$0xff]
    %v561 = vld [vmem:[%s1 + $0x368] sm:$0xff]
    %v562 = vld [vmem:[%s1 + $0x370] sm:$0xff]
    %v563 = vld [vmem:[%s1 + $0x378] sm:$0xff]
    %v564 = vld [vmem:[%s1 + $0x380] sm:$0xff]
    %v565 = vld [vmem:[%s1 + $0x388] sm:$0xff]
    %v566 = vld [vmem:[%s1 + $0x390] sm:$0xff]
    %v567 = vld [vmem:[%s1 + $0x398] sm:$0xff]
    %v568 = vld [vmem:[%s1 + $0x3a0] sm:$0xff]
    %v569 = vld [vmem:[%s1 + $0x3a8] sm:$0xff]
    %v570 = vld [vmem:[%s1 + $0x3b0] sm:$0xff]
    %v571 = vld [vmem:[%s1 + $0x3b8] sm:$0xff]
    %v572 = vld [vmem:[%s1 + $0x3c0] sm:$0xff]
    %v573 = vld [vmem:[%s1 + $0x3c8] sm:$0xff]
    %v574 = vld [vmem:[%s1 + $0x3d0] sm:$0xff]
    %v575 = vld [vmem:[%s1 + $0x3d8] sm:$0xff]
    %v576 = vld [vmem:[%s1 + $0x3e0] sm:$0xff]
    %v577 = vld [vmem:[%s1 + $0x3e8] sm:$0xff]
    %v578 = vld [vmem:[%s1 + $0x3f0] sm:$0xff]
    %v579 = vld [vmem:[%s1 + $0x3f8] sm:$0xff]
    %v580 = vld [vmem:[%s1 + $0x400] sm:$0xff]
    %v581 = vld [vmem:[%s1 + $0x408] sm:$0xff]
    %v582 = vld [vmem:[%s1 + $0x410] sm:$0xff]
    %v583 = vld [vmem:[%s1 + $0x418] sm:$0xff]
    %v584 = vld [vmem:[%s1 + $0x420] sm:$0xff]
    %v585 = vld [vmem:[%s1 + $0x428] sm:$0xff]
    %v586 = vld [vmem:[%s1 + $0x430] sm:$0xff]
    %v587 = vld [vmem:[%s1 + $0x438] sm:$0xff]
    %v588 = vld [vmem:[%s1 + $0x440] sm:$0xff]
    %v589 = vld [vmem:[%s1 + $0x448] sm:$0xff]
    %v590 = vld [vmem:[%s1 + $0x450] sm:$0xff]
    %v591 = vld [vmem:[%s1 + $0x458] sm:$0xff]
    %v592 = vld [vmem:[%s1 + $0x460] sm:$0xff]
    %v593 = vld [vmem:[%s1 + $0x468] sm:$0xff]
    %v594 = vld [vmem:[%s1 + $0x470] sm:$0xff]
    %v595 = vld [vmem:[%s1 + $0x478] sm:$0xff]
    %v596 = vld [vmem:[%s1 + $0x480] sm:$0xff]
    %v597 = vld [vmem:[%s1 + $0x488] sm:$0xff]
    %v598 = vld [vmem:[%s1 + $0x490] sm:$0xff]
    %v599 = vld [vmem:[%s1 + $0x498] sm:$0xff]
    %v600 = vld [vmem:[%s1 + $0x4a0] sm:$0xff]
    %v601 = vld [vmem:[%s1 + $0x4a8] sm:$0xff]
    %v602 = vld [vmem:[%s1 + $0x4b0] sm:$0xff]
    %v603 = vld [vmem:[%s1 + $0x4b8] sm:$0xff]
    %v604 = vld [vmem:[%s1 + $0x4c0] sm:$0xff]
    %v605 = vld [vmem:[%s1 + $0x4c8] sm:$0xff]
    %v606 = vld [vmem:[%s1 + $0x4d0] sm:$0xff]
    %v607 = vld [vmem:[%s1 + $0x4d8] sm:$0xff]
    %v608 = vld [vmem:[%s1 + $0x4e0] sm:$0xff]
    %v609 = vld [vmem:[%s1 + $0x4e8] sm:$0xff]
    %v610 = vld [vmem:[%s1 + $0x4f0] sm:$0xff]
    %v611 = vld [vmem:[%s1 + $0x4f8] sm:$0xff]
    %v612 = vld [vmem:[%s1 + $0x500] sm:$0xff]
    %v613 = vld [vmem:[%s1 + $0x508] sm:$0xff]
    %v614 = vld [vmem:[%s1 + $0x510] sm:$0xff]
    %v615 = vld [vmem:[%s1 + $0x518] sm:$0xff]
    %v616 = vld [vmem:[%s1 + $0x520] sm:$0xff]
    %v617 = vld [vmem:[%s1 + $0x528] sm:$0xff]
    %v618 = vld [vmem:[%s1 + $0x530] sm:$0xff]
    %v619 = vld [vmem:[%s1 + $0x538] sm:$0xff]
    %v620 = vld [vmem:[%s1 + $0x540] sm:$0xff]
    %v621 = vld [vmem:[%s1 + $0x548] sm:$0xff]
    %v622 = vld [vmem:[%s1 + $0x550] sm:$0xff]
    %v623 = vld [vmem:[%s1 + $0x558] sm:$0xff]
    %v624 = vld [vmem:[%s1 + $0x560] sm:$0xff]
    %v625 = vld [vmem:[%s1 + $0x568] sm:$0xff]
    %v626 = vld [vmem:[%s1 + $0x570] sm:$0xff]
    %v627 = vld [vmem:[%s1 + $0x578] sm:$0xff]
    %v628 = vld [vmem:[%s1 + $0x580] sm:$0xff]
    %v629 = vld [vmem:[%s1 + $0x588] sm:$0xff]
    %v630 = vld [vmem:[%s1 + $0x590] sm:$0xff]
    %v631 = vld [vmem:[%s1 + $0x598] sm:$0xff]
    %v632 = vld [vmem:[%s1 + $0x5a0] sm:$0xff]
    %v633 = vld [vmem:[%s1 + $0x5a8] sm:$0xff]
    %v634 = vld [vmem:[%s1 + $0x5b0] sm:$0xff]
    %v635 = vld [vmem:[%s1 + $0x5b8] sm:$0xff]
    %v636 = vld [vmem:[%s1 + $0x5c0] sm:$0xff]
    %v637 = vld [vmem:[%s1 + $0x5c8] sm:$0xff]
    %v638 = vld [vmem:[%s1 + $0x5d0] sm:$0xff]
    %v639 = vld [vmem:[%s1 + $0x5d8] sm:$0xff]
    %v640 = vld [vmem:[%s1 + $0x5e0] sm:$0xff]
    %v641 = vld [vmem:[%s1 + $0x5e8] sm:$0xff]
    %v642 = vld [vmem:[%s1 + $0x5f0] sm:$0xff]
    %v643 = vld [vmem:[%s1 + $0x5f8] sm:$0xff]
    %v644 = vld [vmem:[%s1 + $0x600] sm:$0xff]
    %v645 = vld [vmem:[%s1 + $0x608] sm:$0xff]
    %v646 = vld [vmem:[%s1 + $0x610] sm:$0xff]
    %v647 = vld [vmem:[%s1 + $0x618] sm:$0xff]
    %v648 = vld [vmem:[%s1 + $0x620] sm:$0xff]
    %v649 = vld [vmem:[%s1 + $0x628] sm:$0xff]
    %v650 = vld [vmem:[%s1 + $0x630] sm:$0xff]
    %v651 = vld [vmem:[%s1 + $0x638] sm:$0xff]
    %v652 = vld [vmem:[%s1 + $0x640] sm:$0xff]
    %v653 = vld [vmem:[%s1 + $0x648] sm:$0xff]
    %v654 = vld [vmem:[%s1 + $0x650] sm:$0xff]
    %v655 = vld [vmem:[%s1 + $0x658] sm:$0xff]
    %v656 = vld [vmem:[%s1 + $0x660] sm:$0xff]
    %v657 = vld [vmem:[%s1 + $0x668] sm:$0xff]
    %v658 = vld [vmem:[%s1 + $0x670] sm:$0xff]
    %v659 = vld [vmem:[%s1 + $0x678] sm:$0xff]
    %v660 = vld [vmem:[%s1 + $0x680] sm:$0xff]
    %v661 = vld [vmem:[%s1 + $0x688] sm:$0xff]
    %v662 = vld [vmem:[%s1 + $0x690] sm:$0xff]
    %v663 = vld [vmem:[%s1 + $0x698] sm:$0xff]
    %v664 = vld [vmem:[%s1 + $0x6a0] sm:$0xff]
    %v665 = vld [vmem:[%s1 + $0x6a8] sm:$0xff]
    %v666 = vld [vmem:[%s1 + $0x6b0] sm:$0xff]
    %v667 = vld [vmem:[%s1 + $0x6b8] sm:$0xff]
    %v668 = vld [vmem:[%s1 + $0x6c0] sm:$0xff]
    %v669 = vld [vmem:[%s1 + $0x6c8] sm:$0xff]
    %v670 = vld [vmem:[%s1 + $0x6d0] sm:$0xff]
    %v671 = vld [vmem:[%s1 + $0x6d8] sm:$0xff]
    %v672 = vld [vmem:[%s1 + $0x6e0] sm:$0xff]
    %v673 = vld [vmem:[%s1 + $0x6e8] sm:$0xff]
    %v674 = vld [vmem:[%s1 + $0x6f0] sm:$0xff]
    %v675 = vld [vmem:[%s1 + $0x6f8] sm:$0xff]
    %v676 = vld [vmem:[%s1 + $0x700] sm:$0xff]
    %v677 = vld [vmem:[%s1 + $0x708] sm:$0xff]
    %v678 = vld [vmem:[%s1 + $0x710] sm:$0xff]
    %v679 = vld [vmem:[%s1 + $0x718] sm:$0xff]
    %v680 = vld [vmem:[%s1 + $0x720] sm:$0xff]
    %v681 = vld [vmem:[%s1 + $0x728] sm:$0xff]
    %v682 = vld [vmem:[%s1 + $0x730] sm:$0xff]
    %v683 = vld [vmem:[%s1 + $0x738] sm:$0xff]
    %v684 = vld [vmem:[%s1 + $0x740] sm:$0xff]
    %v685 = vld [vmem:[%s1 + $0x748] sm:$0xff]
    %v686 = vld [vmem:[%s1 + $0x750] sm:$0xff]
    %v687 = vld [vmem:[%s1 + $0x758] sm:$0xff]
    %v688 = vld [vmem:[%s1 + $0x760] sm:$0xff]
    %v689 = vld [vmem:[%s1 + $0x768] sm:$0xff]
    %v690 = vld [vmem:[%s1 + $0x770] sm:$0xff]
    %v691 = vld [vmem:[%s1 + $0x778] sm:$0xff]
    %v692 = vld [vmem:[%s1 + $0x780] sm:$0xff]
    %v693 = vld [vmem:[%s1 + $0x788] sm:$0xff]
    %v694 = vld [vmem:[%s1 + $0x790] sm:$0xff]
    %v695 = vld [vmem:[%s1 + $0x798] sm:$0xff]
    %v696 = vld [vmem:[%s1 + $0x7a0] sm:$0xff]
    %v697 = vld [vmem:[%s1 + $0x7a8] sm:$0xff]
    %v698 = vld [vmem:[%s1 + $0x7b0] sm:$0xff]
    %v699 = vld [vmem:[%s1 + $0x7b8] sm:$0xff]
    %v700 = vld [vmem:[%s1 + $0x7c0] sm:$0xff]
    %v701 = vld [vmem:[%s1 + $0x7c8] sm:$0xff]
    %v702 = vld [vmem:[%s1 + $0x7d0] sm:$0xff]
    %v703 = vld [vmem:[%s1 + $0x7d8] sm:$0xff]
    %v704 = vld [vmem:[%s1 + $0x7e0] sm:$0xff]
    %v705 = vld [vmem:[%s1 + $0x7e8] sm:$0xff]
    %v706 = vld [vmem:[%s1 + $0x7f0] sm:$0xff]
    %v707 = vld [vmem:[%s1 + $0x7f8] sm:$0xff]
    %709 = vset.pattern.permute.xlu0 0
    %710 = vperm.xlu0 %709, %v25
    %v711 = vpop.permute.xlu0 %710
    %vm713 = vcmask 261120
    %v715 = vsel %vm713, %v24, 0
    %717 = vmatprep.subr.mxu0 %v389
    %718 = vmatpush1.msra.mxu0 %v388
    %719 = vmatprep.subr.mxu0 %v405
    %720 = vmatpush1.msra.mxu0 %v404
    %721 = vmatprep.subr.mxu0 %v421
    %722 = vmatpush1.msra.mxu0 %v420
    %723 = vmatprep.subr.mxu0 %v437
    %724 = vmatpush1.msra.mxu0 %v436
    %725 = vmatprep.subr.mxu0 0.0
    %726 = vmatpush1.msra.mxu0 0.0
    %727 = vmatprep.subr.mxu0 0.0
    %728 = vmatpush1.msra.mxu0 0.0
    %729 = vmatprep.subr.mxu0 0.0
    %730 = vmatpush1.msra.mxu0 0.0
    %731 = vmatprep.subr.mxu0 0.0
    %732 = vmatpush1.msra.mxu0 0.0
    %733 = vmatprep.subr.mxu0 0.0
    %734 = vmatpush1.msra.mxu0 0.0
    %735 = vmatprep.subr.mxu0 0.0
    %736 = vmatpush1.msra.mxu0 0.0
    %737 = vmatprep.subr.mxu0 0.0
    %738 = vmatpush1.msra.mxu0 0.0
    %739 = vmatprep.subr.mxu0 0.0
    %740 = vmatpush1.msra.mxu0 0.0
    %741 = vmatprep.subr.mxu0 0.0
    %742 = vmatpush1.msra.mxu0 0.0
    %743 = vmatprep.subr.mxu0 0.0
    %744 = vmatpush1.msra.mxu0 0.0
    %745 = vmatprep.subr.mxu0 0.0
    %746 = vmatpush1.msra.mxu0 0.0
    %747 = vmatprep.subr.mxu0 0.0
    %748 = vmatpush1.msra.mxu0 0.0
    %749 = vmatprep.subr.mxu0 0.0
    %750 = vmatpush1.msra.mxu0 0.0
    %751 = vmatprep.subr.mxu0 0.0
    %752 = vmatpush1.msra.mxu0 0.0
    %753 = vmatprep.subr.mxu0 0.0
    %754 = vmatpush1.msra.mxu0 0.0
    %755 = vmatprep.subr.mxu0 0.0
    %756 = vmatpush1.msra.mxu0 0.0
    %757 = vmatprep.subr.mxu0 0.0
    %758 = vmatpush1.msra.mxu0 0.0
    %759 = vmatprep.subr.mxu0 0.0
    %760 = vmatpush1.msra.mxu0 0.0
    %761 = vmatprep.subr.mxu0 0.0
    %762 = vmatpush1.msra.mxu0 0.0
    %763 = vmatprep.subr.mxu0 0.0
    %764 = vmatpush1.msra.mxu0 0.0
    %765 = vmatprep.subr.mxu0 0.0
    %766 = vmatpush1.msra.mxu0 0.0
    %767 = vmatprep.subr.mxu0 0.0
    %768 = vmatpush1.msra.mxu0 0.0
    %769 = vmatprep.subr.mxu0 0.0
    %770 = vmatpush1.msra.mxu0 0.0
    %771 = vmatprep.subr.mxu0 0.0
    %772 = vmatpush1.msra.mxu0 0.0
    %773 = vmatprep.subr.mxu0 0.0
    %774 = vmatpush1.msra.mxu0 0.0
    %775 = vmatprep.subr.mxu0 0.0
    %776 = vmatpush1.msra.mxu0 0.0
    %777 = vmatprep.subr.mxu0 0.0
    %778 = vmatpush1.msra.mxu0 0.0
    %779 = vmatprep.subr.mxu0 0.0
    %780 = vmatpush1.msra.mxu0 0.0
    %781 = vmatprep.mubr.f32.mxu0 0.0
    %782 = vmatmul.mubr.f32.gmra.mrb[0].mxu0 %v715
    %v783 = vpop.f32.mrb[0].mxu0
    %v784 = vadd.f32 %v711, %v783
    %v785 = vpop.f32.mrb[0].mxu0
    %v786 = vadd.f32 %v711, %v785
    %787 = vdwg.mxu0
    %788 = vmatprep.subr.mxu0 %v391
    %789 = vmatpush1.msra.mxu0 %v390
    %790 = vmatprep.subr.mxu0 %v407
    %791 = vmatpush1.msra.mxu0 %v406
    %792 = vmatprep.subr.mxu0 %v423
    %793 = vmatpush1.msra.mxu0 %v422
    %794 = vmatprep.subr.mxu0 %v439
    %795 = vmatpush1.msra.mxu0 %v438
    %796 = vmatprep.subr.mxu0 0.0
    %797 = vmatpush1.msra.mxu0 0.0
    %798 = vmatprep.subr.mxu0 0.0
    %799 = vmatpush1.msra.mxu0 0.0
    %800 = vmatprep.subr.mxu0 0.0
    %801 = vmatpush1.msra.mxu0 0.0
    %802 = vmatprep.subr.mxu0 0.0
    %803 = vmatpush1.msra.mxu0 0.0
    %804 = vmatprep.subr.mxu0 0.0
    %805 = vmatpush1.msra.mxu0 0.0
    %806 = vmatprep.subr.mxu0 0.0
    %807 = vmatpush1.msra.mxu0 0.0
    %808 = vmatprep.subr.mxu0 0.0
    %809 = vmatpush1.msra.mxu0 0.0
    %810 = vmatprep.subr.mxu0 0.0
    %811 = vmatpush1.msra.mxu0 0.0
    %812 = vmatprep.subr.mxu0 0.0
    %813 = vmatpush1.msra.mxu0 0.0
    %814 = vmatprep.subr.mxu0 0.0
    %815 = vmatpush1.msra.mxu0 0.0
    %816 = vmatprep.subr.mxu0 0.0
    %817 = vmatpush1.msra.mxu0 0.0
    %818 = vmatprep.subr.mxu0 0.0
    %819 = vmatpush1.msra.mxu0 0.0
    %820 = vmatprep.subr.mxu0 0.0
    %821 = vmatpush1.msra.mxu0 0.0
    %822 = vmatprep.subr.mxu0 0.0
    %823 = vmatpush1.msra.mxu0 0.0
    %824 = vmatprep.subr.mxu0 0.0
    %825 = vmatpush1.msra.mxu0 0.0
    %826 = vmatprep.subr.mxu0 0.0
    %827 = vmatpush1.msra.mxu0 0.0
    %828 = vmatprep.subr.mxu0 0.0
    %829 = vmatpush1.msra.mxu0 0.0
    %830 = vmatprep.subr.mxu0 0.0
    %831 = vmatpush1.msra.mxu0 0.0
    %832 = vmatprep.subr.mxu0 0.0
    %833 = vmatpush1.msra.mxu0 0.0
    %834 = vmatprep.subr.mxu0 0.0
    %835 = vmatpush1.msra.mxu0 0.0
    %836 = vmatprep.subr.mxu0 0.0
    %837 = vmatpush1.msra.mxu0 0.0
    %838 = vmatprep.subr.mxu0 0.0
    %839 = vmatpush1.msra.mxu0 0.0
    %840 = vmatprep.subr.mxu0 0.0
    %841 = vmatpush1.msra.mxu0 0.0
    %842 = vmatprep.subr.mxu0 0.0
    %843 = vmatpush1.msra.mxu0 0.0
    %844 = vmatprep.subr.mxu0 0.0
    %845 = vmatpush1.msra.mxu0 0.0
    %846 = vmatprep.subr.mxu0 0.0
    %847 = vmatpush1.msra.mxu0 0.0
    %848 = vmatprep.subr.mxu0 0.0
    %849 = vmatpush1.msra.mxu0 0.0
    %850 = vmatprep.subr.mxu0 0.0
    %851 = vmatpush1.msra.mxu0 0.0
    %852 = vmatprep.mubr.f32.mxu0 0.0
    %853 = vmatmul.mubr.f32.gmra.mrb[0].mxu0 %v715
    %v854 = vpop.f32.mrb[0].mxu0
    %v855 = vadd.f32 %v711, %v854
    %v856 = vpop.f32.mrb[0].mxu0
    %v857 = vadd.f32 %v711, %v856
    %858 = vdwg.mxu0
    %859 = vmatprep.subr.mxu0 %v393
    %860 = vmatpush1.msra.mxu0 %v392
    %861 = vmatprep.subr.mxu0 %v409
    %862 = vmatpush1.msra.mxu0 %v408
    %863 = vmatprep.subr.mxu0 %v425
    %864 = vmatpush1.msra.mxu0 %v424
    %865 = vmatprep.subr.mxu0 %v441
    %866 = vmatpush1.msra.mxu0 %v440
    %867 = vmatprep.subr.mxu0 0.0
    %868 = vmatpush1.msra.mxu0 0.0
    %869 = vmatprep.subr.mxu0 0.0
    %870 = vmatpush1.msra.mxu0 0.0
    %871 = vmatprep.subr.mxu0 0.0
    %872 = vmatpush1.msra.mxu0 0.0
    %873 = vmatprep.subr.mxu0 0.0
    %874 = vmatpush1.msra.mxu0 0.0
    %875 = vmatprep.subr.mxu0 0.0
    %876 = vmatpush1.msra.mxu0 0.0
    %877 = vmatprep.subr.mxu0 0.0
    %878 = vmatpush1.msra.mxu0 0.0
    %879 = vmatprep.subr.mxu0 0.0
    %880 = vmatpush1.msra.mxu0 0.0
    %881 = vmatprep.subr.mxu0 0.0
    %882 = vmatpush1.msra.mxu0 0.0
    %883 = vmatprep.subr.mxu0 0.0
    %884 = vmatpush1.msra.mxu0 0.0
    %885 = vmatprep.subr.mxu0 0.0
    %886 = vmatpush1.msra.mxu0 0.0
    %887 = vmatprep.subr.mxu0 0.0
    %888 = vmatpush1.msra.mxu0 0.0
    %889 = vmatprep.subr.mxu0 0.0
    %890 = vmatpush1.msra.mxu0 0.0
    %891 = vmatprep.subr.mxu0 0.0
    %892 = vmatpush1.msra.mxu0 0.0
    %893 = vmatprep.subr.mxu0 0.0
    %894 = vmatpush1.msra.mxu0 0.0
    %895 = vmatprep.subr.mxu0 0.0
    %896 = vmatpush1.msra.mxu0 0.0
    %897 = vmatprep.subr.mxu0 0.0
    %898 = vmatpush1.msra.mxu0 0.0
    %899 = vmatprep.subr.mxu0 0.0
    %900 = vmatpush1.msra.mxu0 0.0
    %901 = vmatprep.subr.mxu0 0.0
    %902 = vmatpush1.msra.mxu0 0.0
    %903 = vmatprep.subr.mxu0 0.0
    %904 = vmatpush1.msra.mxu0 0.0
    %905 = vmatprep.subr.mxu0 0.0
    %906 = vmatpush1.msra.mxu0 0.0
    %907 = vmatprep.subr.mxu0 0.0
    %908 = vmatpush1.msra.mxu0 0.0
    %909 = vmatprep.subr.mxu0 0.0
    %910 = vmatpush1.msra.mxu0 0.0
    %911 = vmatprep.subr.mxu0 0.0
    %912 = vmatpush1.msra.mxu0 0.0
    %913 = vmatprep.subr.mxu0 0.0
    %914 = vmatpush1.msra.mxu0 0.0
    %915 = vmatprep.subr.mxu0 0.0
    %916 = vmatpush1.msra.mxu0 0.0
    %917 = vmatprep.subr.mxu0 0.0
    %918 = vmatpush1.msra.mxu0 0.0
    %919 = vmatprep.subr.mxu0 0.0
    %920 = vmatpush1.msra.mxu0 0.0
    %921 = vmatprep.subr.mxu0 0.0
    %922 = vmatpush1.msra.mxu0 0.0
    %923 = vmatprep.mubr.f32.mxu0 0.0
    %924 = vmatmul.mubr.f32.gmra.mrb[0].mxu0 %v715
    %v925 = vpop.f32.mrb[0].mxu0
    %v926 = vadd.f32 %v711, %v925
    %v927 = vpop.f32.mrb[0].mxu0
    %v928 = vadd.f32 %v711, %v927
    %929 = vdwg.mxu0
    %930 = vmatprep.subr.mxu0 %v395
    %931 = vmatpush1.msra.mxu0 %v394
    %932 = vmatprep.subr.mxu0 %v411
    %933 = vmatpush1.msra.mxu0 %v410
    %934 = vmatprep.subr.mxu0 %v427
    %935 = vmatpush1.msra.mxu0 %v426
    %936 = vmatprep.subr.mxu0 %v443
    %937 = vmatpush1.msra.mxu0 %v442
    %938 = vmatprep.subr.mxu0 0.0
    %939 = vmatpush1.msra.mxu0 0.0
    %940 = vmatprep.subr.mxu0 0.0
    %941 = vmatpush1.msra.mxu0 0.0
    %942 = vmatprep.subr.mxu0 0.0
    %943 = vmatpush1.msra.mxu0 0.0
    %944 = vmatprep.subr.mxu0 0.0
    %945 = vmatpush1.msra.mxu0 0.0
    %946 = vmatprep.subr.mxu0 0.0
    %947 = vmatpush1.msra.mxu0 0.0
    %948 = vmatprep.subr.mxu0 0.0
    %949 = vmatpush1.msra.mxu0 0.0
    %950 = vmatprep.subr.mxu0 0.0
    %951 = vmatpush1.msra.mxu0 0.0
    %952 = vmatprep.subr.mxu0 0.0
    %953 = vmatpush1.msra.mxu0 0.0
    %954 = vmatprep.subr.mxu0 0.0
    %955 = vmatpush1.msra.mxu0 0.0
    %956 = vmatprep.subr.mxu0 0.0
    %957 = vmatpush1.msra.mxu0 0.0
    %958 = vmatprep.subr.mxu0 0.0
    %959 = vmatpush1.msra.mxu0 0.0
    %960 = vmatprep.subr.mxu0 0.0
    %961 = vmatpush1.msra.mxu0 0.0
    %962 = vmatprep.subr.mxu0 0.0
    %963 = vmatpush1.msra.mxu0 0.0
    %964 = vmatprep.subr.mxu0 0.0
    %965 = vmatpush1.msra.mxu0 0.0
    %966 = vmatprep.subr.mxu0 0.0
    %967 = vmatpush1.msra.mxu0 0.0
    %968 = vmatprep.subr.mxu0 0.0
    %969 = vmatpush1.msra.mxu0 0.0
    %970 = vmatprep.subr.mxu0 0.0
    %971 = vmatpush1.msra.mxu0 0.0
    %972 = vmatprep.subr.mxu0 0.0
    %973 = vmatpush1.msra.mxu0 0.0
    %974 = vmatprep.subr.mxu0 0.0
    %975 = vmatpush1.msra.mxu0 0.0
    %976 = vmatprep.subr.mxu0 0.0
    %977 = vmatpush1.msra.mxu0 0.0
    %978 = vmatprep.subr.mxu0 0.0
    %979 = vmatpush1.msra.mxu0 0.0
    %980 = vmatprep.subr.mxu0 0.0
    %981 = vmatpush1.msra.mxu0 0.0
    %982 = vmatprep.subr.mxu0 0.0
    %983 = vmatpush1.msra.mxu0 0.0
    %984 = vmatprep.subr.mxu0 0.0
    %985 = vmatpush1.msra.mxu0 0.0
    %986 = vmatprep.subr.mxu0 0.0
    %987 = vmatpush1.msra.mxu0 0.0
    %988 = vmatprep.subr.mxu0 0.0
    %989 = vmatpush1.msra.mxu0 0.0
    %990 = vmatprep.subr.mxu0 0.0
    %991 = vmatpush1.msra.mxu0 0.0
    %992 = vmatprep.subr.mxu0 0.0
    %993 = vmatpush1.msra.mxu0 0.0
    %994 = vmatprep.mubr.f32.mxu0 0.0
    %995 = vmatmul.mubr.f32.gmra.mrb[0].mxu0 %v715
    %v996 = vpop.f32.mrb[0].mxu0
    %v997 = vadd.f32 %v711, %v996
    %v998 = vpop.f32.mrb[0].mxu0
    %v999 = vadd.f32 %v711, %v998
    %1000 = vdwg.mxu0
    %1001 = vmatprep.subr.mxu0 %v397
    %1002 = vmatpush1.msra.mxu0 %v396
    %1003 = vmatprep.subr.mxu0 %v413
    %1004 = vmatpush1.msra.mxu0 %v412
    %1005 = vmatprep.subr.mxu0 %v429
    %1006 = vmatpush1.msra.mxu0 %v428
    %1007 = vmatprep.subr.mxu0 %v445
    %1008 = vmatpush1.msra.mxu0 %v444
    %1009 = vmatprep.subr.mxu0 0.0
    %1010 = vmatpush1.msra.mxu0 0.0
    %1011 = vmatprep.subr.mxu0 0.0
    %1012 = vmatpush1.msra.mxu0 0.0
    %1013 = vmatprep.subr.mxu0 0.0
    %1014 = vmatpush1.msra.mxu0 0.0
    %1015 = vmatprep.subr.mxu0 0.0
    %1016 = vmatpush1.msra.mxu0 0.0
    %1017 = vmatprep.subr.mxu0 0.0
    %1018 = vmatpush1.msra.mxu0 0.0
    %1019 = vmatprep.subr.mxu0 0.0
    %1020 = vmatpush1.msra.mxu0 0.0
    %1021 = vmatprep.subr.mxu0 0.0
    %1022 = vmatpush1.msra.mxu0 0.0
    %1023 = vmatprep.subr.mxu0 0.0
    %1024 = vmatpush1.msra.mxu0 0.0
    %1025 = vmatprep.subr.mxu0 0.0
    %1026 = vmatpush1.msra.mxu0 0.0
    %1027 = vmatprep.subr.mxu0 0.0
    %1028 = vmatpush1.msra.mxu0 0.0
    %1029 = vmatprep.subr.mxu0 0.0
    %1030 = vmatpush1.msra.mxu0 0.0
    %1031 = vmatprep.subr.mxu0 0.0
    %1032 = vmatpush1.msra.mxu0 0.0
    %1033 = vmatprep.subr.mxu0 0.0
    %1034 = vmatpush1.msra.mxu0 0.0
    %1035 = vmatprep.subr.mxu0 0.0
    %1036 = vmatpush1.msra.mxu0 0.0
    %1037 = vmatprep.subr.mxu0 0.0
    %1038 = vmatpush1.msra.mxu0 0.0
    %1039 = vmatprep.subr.mxu0 0.0
    %1040 = vmatpush1.msra.mxu0 0.0
    %1041 = vmatprep.subr.mxu0 0.0
    %1042 = vmatpush1.msra.mxu0 0.0
    %1043 = vmatprep.subr.mxu0 0.0
    %1044 = vmatpush1.msra.mxu0 0.0
    %1045 = vmatprep.subr.mxu0 0.0
    %1046 = vmatpush1.msra.mxu0 0.0
    %1047 = vmatprep.subr.mxu0 0.0
    %1048 = vmatpush1.msra.mxu0 0.0
    %1049 = vmatprep.subr.mxu0 0.0
    %1050 = vmatpush1.msra.mxu0 0.0
    %1051 = vmatprep.subr.mxu0 0.0
    %1052 = vmatpush1.msra.mxu0 0.0
    %1053 = vmatprep.subr.mxu0 0.0
    %1054 = vmatpush1.msra.mxu0 0.0
    %1055 = vmatprep.subr.mxu0 0.0
    %1056 = vmatpush1.msra.mxu0 0.0
    %1057 = vmatprep.subr.mxu0 0.0
    %1058 = vmatpush1.msra.mxu0 0.0
    %1059 = vmatprep.subr.mxu0 0.0
    %1060 = vmatpush1.msra.mxu0 0.0
    %1061 = vmatprep.subr.mxu0 0.0
    %1062 = vmatpush1.msra.mxu0 0.0
    %1063 = vmatprep.subr.mxu0 0.0
    %1064 = vmatpush1.msra.mxu0 0.0
    %1065 = vmatprep.mubr.f32.mxu0 0.0
    %1066 = vmatmul.mubr.f32.gmra.mrb[0].mxu0 %v715
    %v1067 = vpop.f32.mrb[0].mxu0
    %v1068 = vadd.f32 %v711, %v1067
    %v1069 = vpop.f32.mrb[0].mxu0
    %v1070 = vadd.f32 %v711, %v1069
    %1071 = vdwg.mxu0
    %1072 = vmatprep.subr.mxu0 %v399
    %1073 = vmatpush1.msra.mxu0 %v398
    %1074 = vmatprep.subr.mxu0 %v415
    %1075 = vmatpush1.msra.mxu0 %v414
    %1076 = vmatprep.subr.mxu0 %v431
    %1077 = vmatpush1.msra.mxu0 %v430
    %1078 = vmatprep.subr.mxu0 %v447
    %1079 = vmatpush1.msra.mxu0 %v446
    %1080 = vmatprep.subr.mxu0 0.0
    %1081 = vmatpush1.msra.mxu0 0.0
    %1082 = vmatprep.subr.mxu0 0.0
    %1083 = vmatpush1.msra.mxu0 0.0
    %1084 = vmatprep.subr.mxu0 0.0
    %1085 = vmatpush1.msra.mxu0 0.0
    %1086 = vmatprep.subr.mxu0 0.0
    %1087 = vmatpush1.msra.mxu0 0.0
    %1088 = vmatprep.subr.mxu0 0.0
    %1089 = vmatpush1.msra.mxu0 0.0
    %1090 = vmatprep.subr.mxu0 0.0
    %1091 = vmatpush1.msra.mxu0 0.0
    %1092 = vmatprep.subr.mxu0 0.0
    %1093 = vmatpush1.msra.mxu0 0.0
    %1094 = vmatprep.subr.mxu0 0.0
    %1095 = vmatpush1.msra.mxu0 0.0
    %1096 = vmatprep.subr.mxu0 0.0
    %1097 = vmatpush1.msra.mxu0 0.0
    %1098 = vmatprep.subr.mxu0 0.0
    %1099 = vmatpush1.msra.mxu0 0.0
    %1100 = vmatprep.subr.mxu0 0.0
    %1101 = vmatpush1.msra.mxu0 0.0
    %1102 = vmatprep.subr.mxu0 0.0
    %1103 = vmatpush1.msra.mxu0 0.0
    %1104 = vmatprep.subr.mxu0 0.0
    %1105 = vmatpush1.msra.mxu0 0.0
    %1106 = vmatprep.subr.mxu0 0.0
    %1107 = vmatpush1.msra.mxu0 0.0
    %1108 = vmatprep.subr.mxu0 0.0
    %1109 = vmatpush1.msra.mxu0 0.0
    %1110 = vmatprep.subr.mxu0 0.0
    %1111 = vmatpush1.msra.mxu0 0.0
    %1112 = vmatprep.subr.mxu0 0.0
    %1113 = vmatpush1.msra.mxu0 0.0
    %1114 = vmatprep.subr.mxu0 0.0
    %1115 = vmatpush1.msra.mxu0 0.0
    %1116 = vmatprep.subr.mxu0 0.0
    %1117 = vmatpush1.msra.mxu0 0.0
    %1118 = vmatprep.subr.mxu0 0.0
    %1119 = vmatpush1.msra.mxu0 0.0
    %1120 = vmatprep.subr.mxu0 0.0
    %1121 = vmatpush1.msra.mxu0 0.0
    %1122 = vmatprep.subr.mxu0 0.0
    %1123 = vmatpush1.msra.mxu0 0.0
    %1124 = vmatprep.subr.mxu0 0.0
    %1125 = vmatpush1.msra.mxu0 0.0
    %1126 = vmatprep.subr.mxu0 0.0
    %1127 = vmatpush1.msra.mxu0 0.0
    %1128 = vmatprep.subr.mxu0 0.0
    %1129 = vmatpush1.msra.mxu0 0.0
    %1130 = vmatprep.subr.mxu0 0.0
    %1131 = vmatpush1.msra.mxu0 0.0
    %1132 = vmatprep.subr.mxu0 0.0
    %1133 = vmatpush1.msra.mxu0 0.0
    %1134 = vmatprep.subr.mxu0 0.0
    %1135 = vmatpush1.msra.mxu0 0.0
    %1136 = vmatprep.mubr.f32.mxu0 0.0
    %1137 = vmatmul.mubr.f32.gmra.mrb[0].mxu0 %v715
    %v1138 = vpop.f32.mrb[0].mxu0
    %v1139 = vadd.f32 %v711, %v1138
    %v1140 = vpop.f32.mrb[0].mxu0
    %v1141 = vadd.f32 %v711, %v1140
    %1142 = vdwg.mxu0
    %1143 = vmatprep.subr.mxu0 %v401
    %1144 = vmatpush1.msra.mxu0 %v400
    %1145 = vmatprep.subr.mxu0 %v417
    %1146 = vmatpush1.msra.mxu0 %v416
    %1147 = vmatprep.subr.mxu0 %v433
    %1148 = vmatpush1.msra.mxu0 %v432
    %1149 = vmatprep.subr.mxu0 %v449
    %1150 = vmatpush1.msra.mxu0 %v448
    %1151 = vmatprep.subr.mxu0 0.0
    %1152 = vmatpush1.msra.mxu0 0.0
    %1153 = vmatprep.subr.mxu0 0.0
    %1154 = vmatpush1.msra.mxu0 0.0
    %1155 = vmatprep.subr.mxu0 0.0
    %1156 = vmatpush1.msra.mxu0 0.0
    %1157 = vmatprep.subr.mxu0 0.0
    %1158 = vmatpush1.msra.mxu0 0.0
    %1159 = vmatprep.subr.mxu0 0.0
    %1160 = vmatpush1.msra.mxu0 0.0
    %1161 = vmatprep.subr.mxu0 0.0
    %1162 = vmatpush1.msra.mxu0 0.0
    %1163 = vmatprep.subr.mxu0 0.0
    %1164 = vmatpush1.msra.mxu0 0.0
    %1165 = vmatprep.subr.mxu0 0.0
    %1166 = vmatpush1.msra.mxu0 0.0
    %1167 = vmatprep.subr.mxu0 0.0
    %1168 = vmatpush1.msra.mxu0 0.0
    %1169 = vmatprep.subr.mxu0 0.0
    %1170 = vmatpush1.msra.mxu0 0.0
    %1171 = vmatprep.subr.mxu0 0.0
    %1172 = vmatpush1.msra.mxu0 0.0
    %1173 = vmatprep.subr.mxu0 0.0
    %1174 = vmatpush1.msra.mxu0 0.0
    %1175 = vmatprep.subr.mxu0 0.0
    %1176 = vmatpush1.msra.mxu0 0.0
    %1177 = vmatprep.subr.mxu0 0.0
    %1178 = vmatpush1.msra.mxu0 0.0
    %1179 = vmatprep.subr.mxu0 0.0
    %1180 = vmatpush1.msra.mxu0 0.0
    %1181 = vmatprep.subr.mxu0 0.0
    %1182 = vmatpush1.msra.mxu0 0.0
    %1183 = vmatprep.subr.mxu0 0.0
    %1184 = vmatpush1.msra.mxu0 0.0
    %1185 = vmatprep.subr.mxu0 0.0
    %1186 = vmatpush1.msra.mxu0 0.0
    %1187 = vmatprep.subr.mxu0 0.0
    %1188 = vmatpush1.msra.mxu0 0.0
    %1189 = vmatprep.subr.mxu0 0.0
    %1190 = vmatpush1.msra.mxu0 0.0
    %1191 = vmatprep.subr.mxu0 0.0
    %1192 = vmatpush1.msra.mxu0 0.0
    %1193 = vmatprep.subr.mxu0 0.0
    %1194 = vmatpush1.msra.mxu0 0.0
    %1195 = vmatprep.subr.mxu0 0.0
    %1196 = vmatpush1.msra.mxu0 0.0
    %1197 = vmatprep.subr.mxu0 0.0
    %1198 = vmatpush1.msra.mxu0 0.0
    %1199 = vmatprep.subr.mxu0 0.0
    %1200 = vmatpush1.msra.mxu0 0.0
    %1201 = vmatprep.subr.mxu0 0.0
    %1202 = vmatpush1.msra.mxu0 0.0
    %1203 = vmatprep.subr.mxu0 0.0
    %1204 = vmatpush1.msra.mxu0 0.0
    %1205 = vmatprep.subr.mxu0 0.0
    %1206 = vmatpush1.msra.mxu0 0.0
    %1207 = vmatprep.mubr.f32.mxu0 0.0
    %1208 = vmatmul.mubr.f32.gmra.mrb[0].mxu0 %v715
    %v1209 = vpop.f32.mrb[0].mxu0
    %v1210 = vadd.f32 %v711, %v1209
    %v1211 = vpop.f32.mrb[0].mxu0
    %v1212 = vadd.f32 %v711, %v1211
    %1213 = vdwg.mxu0
    %1214 = vmatprep.subr.mxu0 %v403
    %1215 = vmatpush1.msra.mxu0 %v402
    %1216 = vmatprep.subr.mxu0 %v419
    %1217 = vmatpush1.msra.mxu0 %v418
    %1218 = vmatprep.subr.mxu0 %v435
    %1219 = vmatpush1.msra.mxu0 %v434
    %1220 = vmatprep.subr.mxu0 %v451
    %1221 = vmatpush1.msra.mxu0 %v450
    %1222 = vmatprep.subr.mxu0 0.0
    %1223 = vmatpush1.msra.mxu0 0.0
    %1224 = vmatprep.subr.mxu0 0.0
    %1225 = vmatpush1.msra.mxu0 0.0
    %1226 = vmatprep.subr.mxu0 0.0
    %1227 = vmatpush1.msra.mxu0 0.0
    %1228 = vmatprep.subr.mxu0 0.0
    %1229 = vmatpush1.msra.mxu0 0.0
    %1230 = vmatprep.subr.mxu0 0.0
    %1231 = vmatpush1.msra.mxu0 0.0
    %1232 = vmatprep.subr.mxu0 0.0
    %1233 = vmatpush1.msra.mxu0 0.0
    %1234 = vmatprep.subr.mxu0 0.0
    %1235 = vmatpush1.msra.mxu0 0.0
    %1236 = vmatprep.subr.mxu0 0.0
    %1237 = vmatpush1.msra.mxu0 0.0
    %1238 = vmatprep.subr.mxu0 0.0
    %1239 = vmatpush1.msra.mxu0 0.0
    %1240 = vmatprep.subr.mxu0 0.0
    %1241 = vmatpush1.msra.mxu0 0.0
    %1242 = vmatprep.subr.mxu0 0.0
    %1243 = vmatpush1.msra.mxu0 0.0
    %1244 = vmatprep.subr.mxu0 0.0
    %1245 = vmatpush1.msra.mxu0 0.0
    %1246 = vmatprep.subr.mxu0 0.0
    %1247 = vmatpush1.msra.mxu0 0.0
    %1248 = vmatprep.subr.mxu0 0.0
    %1249 = vmatpush1.msra.mxu0 0.0
    %1250 = vmatprep.subr.mxu0 0.0
    %1251 = vmatpush1.msra.mxu0 0.0
    %1252 = vmatprep.subr.mxu0 0.0
    %1253 = vmatpush1.msra.mxu0 0.0
    %1254 = vmatprep.subr.mxu0 0.0
    %1255 = vmatpush1.msra.mxu0 0.0
    %1256 = vmatprep.subr.mxu0 0.0
    %1257 = vmatpush1.msra.mxu0 0.0
    %1258 = vmatprep.subr.mxu0 0.0
    %1259 = vmatpush1.msra.mxu0 0.0
    %1260 = vmatprep.subr.mxu0 0.0
    %1261 = vmatpush1.msra.mxu0 0.0
    %1262 = vmatprep.subr.mxu0 0.0
    %1263 = vmatpush1.msra.mxu0 0.0
    %1264 = vmatprep.subr.mxu0 0.0
    %1265 = vmatpush1.msra.mxu0 0.0
    %1266 = vmatprep.subr.mxu0 0.0
    %1267 = vmatpush1.msra.mxu0 0.0
    %1268 = vmatprep.subr.mxu0 0.0
    %1269 = vmatpush1.msra.mxu0 0.0
    %1270 = vmatprep.subr.mxu0 0.0
    %1271 = vmatpush1.msra.mxu0 0.0
    %1272 = vmatprep.subr.mxu0 0.0
    %1273 = vmatpush1.msra.mxu0 0.0
    %1274 = vmatprep.subr.mxu0 0.0
    %1275 = vmatpush1.msra.mxu0 0.0
    %1276 = vmatprep.subr.mxu0 0.0
    %1277 = vmatpush1.msra.mxu0 0.0
    %1278 = vmatprep.mubr.f32.mxu0 0.0
    %1279 = vmatmul.mubr.f32.gmra.mrb[0].mxu0 %v715
    %v1280 = vpop.f32.mrb[0].mxu0
    %v1281 = vadd.f32 %v711, %v1280
    %v1282 = vpop.f32.mrb[0].mxu0
    %v1283 = vadd.f32 %v711, %v1282
    %1284 = vdwg.mxu0
    %v1285 = vrot.slane %v784, 4
    %v1286 = vmax.f32 %v784, %v1285
    %v1287 = vrot.slane %v1286, 2
    %v1288 = vmax.f32 %v1286, %v1287
    %v1289 = vrot.slane %v1288, 1
    %v1290 = vmax.f32 %v1288, %v1289
    %v1291 = vrot.slane %v786, 4
    %v1292 = vmax.f32 %v786, %v1291
    %v1293 = vrot.slane %v1292, 2
    %v1294 = vmax.f32 %v1292, %v1293
    %v1295 = vrot.slane %v1294, 1
    %v1296 = vmax.f32 %v1294, %v1295
    %v1297 = vrot.slane %v855, 4
    %v1298 = vmax.f32 %v855, %v1297
    %v1299 = vrot.slane %v1298, 2
    %v1300 = vmax.f32 %v1298, %v1299
    %v1301 = vrot.slane %v1300, 1
    %v1302 = vmax.f32 %v1300, %v1301
    %v1303 = vrot.slane %v857, 4
    %v1304 = vmax.f32 %v857, %v1303
    %v1305 = vrot.slane %v1304, 2
    %v1306 = vmax.f32 %v1304, %v1305
    %v1307 = vrot.slane %v1306, 1
    %v1308 = vmax.f32 %v1306, %v1307
    %v1309 = vrot.slane %v926, 4
    %v1310 = vmax.f32 %v926, %v1309
    %v1311 = vrot.slane %v1310, 2
    %v1312 = vmax.f32 %v1310, %v1311
    %v1313 = vrot.slane %v1312, 1
    %v1314 = vmax.f32 %v1312, %v1313
    %v1315 = vrot.slane %v928, 4
    %v1316 = vmax.f32 %v928, %v1315
    %v1317 = vrot.slane %v1316, 2
    %v1318 = vmax.f32 %v1316, %v1317
    %v1319 = vrot.slane %v1318, 1
    %v1320 = vmax.f32 %v1318, %v1319
    %v1321 = vrot.slane %v997, 4
    %v1322 = vmax.f32 %v997, %v1321
    %v1323 = vrot.slane %v1322, 2
    %v1324 = vmax.f32 %v1322, %v1323
    %v1325 = vrot.slane %v1324, 1
    %v1326 = vmax.f32 %v1324, %v1325
    %v1327 = vrot.slane %v999, 4
    %v1328 = vmax.f32 %v999, %v1327
    %v1329 = vrot.slane %v1328, 2
    %v1330 = vmax.f32 %v1328, %v1329
    %v1331 = vrot.slane %v1330, 1
    %v1332 = vmax.f32 %v1330, %v1331
    %v1333 = vrot.slane %v1068, 4
    %v1334 = vmax.f32 %v1068, %v1333
    %v1335 = vrot.slane %v1334, 2
    %v1336 = vmax.f32 %v1334, %v1335
    %v1337 = vrot.slane %v1336, 1
    %v1338 = vmax.f32 %v1336, %v1337
    %v1339 = vrot.slane %v1070, 4
    %v1340 = vmax.f32 %v1070, %v1339
    %v1341 = vrot.slane %v1340, 2
    %v1342 = vmax.f32 %v1340, %v1341
    %v1343 = vrot.slane %v1342, 1
    %v1344 = vmax.f32 %v1342, %v1343
    %v1345 = vrot.slane %v1139, 4
    %v1346 = vmax.f32 %v1139, %v1345
    %v1347 = vrot.slane %v1346, 2
    %v1348 = vmax.f32 %v1346, %v1347
    %v1349 = vrot.slane %v1348, 1
    %v1350 = vmax.f32 %v1348, %v1349
    %v1351 = vrot.slane %v1141, 4
    %v1352 = vmax.f32 %v1141, %v1351
    %v1353 = vrot.slane %v1352, 2
    %v1354 = vmax.f32 %v1352, %v1353
    %v1355 = vrot.slane %v1354, 1
    %v1356 = vmax.f32 %v1354, %v1355
    %v1357 = vrot.slane %v1210, 4
    %v1358 = vmax.f32 %v1210, %v1357
    %v1359 = vrot.slane %v1358, 2
    %v1360 = vmax.f32 %v1358, %v1359
    %v1361 = vrot.slane %v1360, 1
    %v1362 = vmax.f32 %v1360, %v1361
    %v1363 = vrot.slane %v1212, 4
    %v1364 = vmax.f32 %v1212, %v1363
    %v1365 = vrot.slane %v1364, 2
    %v1366 = vmax.f32 %v1364, %v1365
    %v1367 = vrot.slane %v1366, 1
    %v1368 = vmax.f32 %v1366, %v1367
    %v1369 = vrot.slane %v1281, 4
    %v1370 = vmax.f32 %v1281, %v1369
    %v1371 = vrot.slane %v1370, 2
    %v1372 = vmax.f32 %v1370, %v1371
    %v1373 = vrot.slane %v1372, 1
    %v1374 = vmax.f32 %v1372, %v1373
    %v1375 = vrot.slane %v1283, 4
    %v1376 = vmax.f32 %v1283, %v1375
    %v1377 = vrot.slane %v1376, 2
    %v1378 = vmax.f32 %v1376, %v1377
    %v1379 = vrot.slane %v1378, 1
    %v1380 = vmax.f32 %v1378, %v1379
    %v1381 = vsub.f32 %v784, %v1290
    %v1382 = vsub.f32 %v786, %v1296
    %v1383 = vsub.f32 %v855, %v1302
    %v1384 = vsub.f32 %v857, %v1308
    %v1385 = vsub.f32 %v926, %v1314
    %v1386 = vsub.f32 %v928, %v1320
    %v1387 = vsub.f32 %v997, %v1326
    %v1388 = vsub.f32 %v999, %v1332
    %v1389 = vsub.f32 %v1068, %v1338
    %v1390 = vsub.f32 %v1070, %v1344
    %v1391 = vsub.f32 %v1139, %v1350
    %v1392 = vsub.f32 %v1141, %v1356
    %v1393 = vsub.f32 %v1210, %v1362
    %v1394 = vsub.f32 %v1212, %v1368
    %v1395 = vsub.f32 %v1281, %v1374
    %v1396 = vsub.f32 %v1283, %v1380
    %v1397 = vmul.f32 %v1381, 1.442695
    %v1398 = vpow.pop %v1397
    %v1399 = vmul.f32 %v1382, 1.442695
    %v1400 = vpow.pop %v1399
    %v1401 = vmul.f32 %v1383, 1.442695
    %v1402 = vpow.pop %v1401
    %v1403 = vmul.f32 %v1384, 1.442695
    %v1404 = vpow.pop %v1403
    %v1405 = vmul.f32 %v1385, 1.442695
    %v1406 = vpow.pop %v1405
    %v1407 = vmul.f32 %v1386, 1.442695
    %v1408 = vpow.pop %v1407
    %v1409 = vmul.f32 %v1387, 1.442695
    %v1410 = vpow.pop %v1409
    %v1411 = vmul.f32 %v1388, 1.442695
    %v1412 = vpow.pop %v1411
    %v1413 = vmul.f32 %v1389, 1.442695
    %v1414 = vpow.pop %v1413
    %v1415 = vmul.f32 %v1390, 1.442695
    %v1416 = vpow.pop %v1415
    %v1417 = vmul.f32 %v1391, 1.442695
    %v1418 = vpow.pop %v1417
    %v1419 = vmul.f32 %v1392, 1.442695
    %v1420 = vpow.pop %v1419
    %v1421 = vmul.f32 %v1393, 1.442695
    %v1422 = vpow.pop %v1421
    %v1423 = vmul.f32 %v1394, 1.442695
    %v1424 = vpow.pop %v1423
    %v1425 = vmul.f32 %v1395, 1.442695
    %v1426 = vpow.pop %v1425
    %v1427 = vmul.f32 %v1396, 1.442695
    %v1428 = vpow.pop %v1427
    %v1429 = vrot.slane %v1398, 4
    %v1430 = vadd.f32 %v1398, %v1429
    %v1431 = vrot.slane %v1430, 2
    %v1432 = vadd.f32 %v1430, %v1431
    %v1433 = vrot.slane %v1432, 1
    %v1434 = vadd.f32 %v1432, %v1433
    %v1435 = vrot.slane %v1400, 4
    %v1436 = vadd.f32 %v1400, %v1435
    %v1437 = vrot.slane %v1436, 2
    %v1438 = vadd.f32 %v1436, %v1437
    %v1439 = vrot.slane %v1438, 1
    %v1440 = vadd.f32 %v1438, %v1439
    %v1441 = vrot.slane %v1402, 4
    %v1442 = vadd.f32 %v1402, %v1441
    %v1443 = vrot.slane %v1442, 2
    %v1444 = vadd.f32 %v1442, %v1443
    %v1445 = vrot.slane %v1444, 1
    %v1446 = vadd.f32 %v1444, %v1445
    %v1447 = vrot.slane %v1404, 4
    %v1448 = vadd.f32 %v1404, %v1447
    %v1449 = vrot.slane %v1448, 2
    %v1450 = vadd.f32 %v1448, %v1449
    %v1451 = vrot.slane %v1450, 1
    %v1452 = vadd.f32 %v1450, %v1451
    %v1453 = vrot.slane %v1406, 4
    %v1454 = vadd.f32 %v1406, %v1453
    %v1455 = vrot.slane %v1454, 2
    %v1456 = vadd.f32 %v1454, %v1455
    %v1457 = vrot.slane %v1456, 1
    %v1458 = vadd.f32 %v1456, %v1457
    %v1459 = vrot.slane %v1408, 4
    %v1460 = vadd.f32 %v1408, %v1459
    %v1461 = vrot.slane %v1460, 2
    %v1462 = vadd.f32 %v1460, %v1461
    %v1463 = vrot.slane %v1462, 1
    %v1464 = vadd.f32 %v1462, %v1463
    %v1465 = vrot.slane %v1410, 4
    %v1466 = vadd.f32 %v1410, %v1465
    %v1467 = vrot.slane %v1466, 2
    %v1468 = vadd.f32 %v1466, %v1467
    %v1469 = vrot.slane %v1468, 1
    %v1470 = vadd.f32 %v1468, %v1469
    %v1471 = vrot.slane %v1412, 4
    %v1472 = vadd.f32 %v1412, %v1471
    %v1473 = vrot.slane %v1472, 2
    %v1474 = vadd.f32 %v1472, %v1473
    %v1475 = vrot.slane %v1474, 1
    %v1476 = vadd.f32 %v1474, %v1475
    %v1477 = vrot.slane %v1414, 4
    %v1478 = vadd.f32 %v1414, %v1477
    %v1479 = vrot.slane %v1478, 2
    %v1480 = vadd.f32 %v1478, %v1479
    %v1481 = vrot.slane %v1480, 1
    %v1482 = vadd.f32 %v1480, %v1481
    %v1483 = vrot.slane %v1416, 4
    %v1484 = vadd.f32 %v1416, %v1483
    %v1485 = vrot.slane %v1484, 2
    %v1486 = vadd.f32 %v1484, %v1485
    %v1487 = vrot.slane %v1486, 1
    %v1488 = vadd.f32 %v1486, %v1487
    %v1489 = vrot.slane %v1418, 4
    %v1490 = vadd.f32 %v1418, %v1489
    %v1491 = vrot.slane %v1490, 2
    %v1492 = vadd.f32 %v1490, %v1491
    %v1493 = vrot.slane %v1492, 1
    %v1494 = vadd.f32 %v1492, %v1493
    %v1495 = vrot.slane %v1420, 4
    %v1496 = vadd.f32 %v1420, %v1495
    %v1497 = vrot.slane %v1496, 2
    %v1498 = vadd.f32 %v1496, %v1497
    %v1499 = vrot.slane %v1498, 1
    %v1500 = vadd.f32 %v1498, %v1499
    %v1501 = vrot.slane %v1422, 4
    %v1502 = vadd.f32 %v1422, %v1501
    %v1503 = vrot.slane %v1502, 2
    %v1504 = vadd.f32 %v1502, %v1503
    %v1505 = vrot.slane %v1504, 1
    %v1506 = vadd.f32 %v1504, %v1505
    %v1507 = vrot.slane %v1424, 4
    %v1508 = vadd.f32 %v1424, %v1507
    %v1509 = vrot.slane %v1508, 2
    %v1510 = vadd.f32 %v1508, %v1509
    %v1511 = vrot.slane %v1510, 1
    %v1512 = vadd.f32 %v1510, %v1511
    %v1513 = vrot.slane %v1426, 4
    %v1514 = vadd.f32 %v1426, %v1513
    %v1515 = vrot.slane %v1514, 2
    %v1516 = vadd.f32 %v1514, %v1515
    %v1517 = vrot.slane %v1516, 1
    %v1518 = vadd.f32 %v1516, %v1517
    %v1519 = vrot.slane %v1428, 4
    %v1520 = vadd.f32 %v1428, %v1519
    %v1521 = vrot.slane %v1520, 2
    %v1522 = vadd.f32 %v1520, %v1521
    %v1523 = vrot.slane %v1522, 1
    %v1524 = vadd.f32 %v1522, %v1523
    %v1525 = vrcp.pop %v1434
    %v1526 = vrcp.pop %v1440
    %v1527 = vrcp.pop %v1446
    %v1528 = vrcp.pop %v1452
    %v1529 = vrcp.pop %v1458
    %v1530 = vrcp.pop %v1464
    %v1531 = vrcp.pop %v1470
    %v1532 = vrcp.pop %v1476
    %v1533 = vrcp.pop %v1482
    %v1534 = vrcp.pop %v1488
    %v1535 = vrcp.pop %v1494
    %v1536 = vrcp.pop %v1500
    %v1537 = vrcp.pop %v1506
    %v1538 = vrcp.pop %v1512
    %v1539 = vrcp.pop %v1518
    %v1540 = vrcp.pop %v1524
    %v1541 = vmul.f32 %v1398, %v1525
    %v1542 = vmul.f32 %v1400, %v1526
    %v1543 = vmul.f32 %v1402, %v1527
    %v1544 = vmul.f32 %v1404, %v1528
    %v1545 = vmul.f32 %v1406, %v1529
    %v1546 = vmul.f32 %v1408, %v1530
    %v1547 = vmul.f32 %v1410, %v1531
    %v1548 = vmul.f32 %v1412, %v1532
    %v1549 = vmul.f32 %v1414, %v1533
    %v1550 = vmul.f32 %v1416, %v1534
    %v1551 = vmul.f32 %v1418, %v1535
    %v1552 = vmul.f32 %v1420, %v1536
    %v1553 = vmul.f32 %v1422, %v1537
    %v1554 = vmul.f32 %v1424, %v1538
    %v1555 = vmul.f32 %v1426, %v1539
    %v1556 = vmul.f32 %v1428, %v1540
    %v1557 = vmul.f32 %v1541, %v195
    %v1558 = vmul.f32 %v1542, %v196
    %v1559 = vmul.f32 %v1543, %v197
    %v1560 = vmul.f32 %v1544, %v198
    %v1561 = vmul.f32 %v1545, %v199
    %v1562 = vmul.f32 %v1546, %v200
    %v1563 = vmul.f32 %v1547, %v201
    %v1564 = vmul.f32 %v1548, %v202
    %v1565 = vmul.f32 %v1549, %v203
    %v1566 = vmul.f32 %v1550, %v204
    %v1567 = vmul.f32 %v1551, %v205
    %v1568 = vmul.f32 %v1552, %v206
    %v1569 = vmul.f32 %v1553, %v207
    %v1570 = vmul.f32 %v1554, %v208
    %v1571 = vmul.f32 %v1555, %v209
    %v1572 = vmul.f32 %v1556, %v210
    %v1573 = vmul.f32 %v1541, %v211
    %v1574 = vmul.f32 %v1542, %v212
    %v1575 = vmul.f32 %v1543, %v213
    %v1576 = vmul.f32 %v1544, %v214
    %v1577 = vmul.f32 %v1545, %v215
    %v1578 = vmul.f32 %v1546, %v216
    %v1579 = vmul.f32 %v1547, %v217
    %v1580 = vmul.f32 %v1548, %v218
    %v1581 = vmul.f32 %v1549, %v219
    %v1582 = vmul.f32 %v1550, %v220
    %v1583 = vmul.f32 %v1551, %v221
    %v1584 = vmul.f32 %v1552, %v222
    %v1585 = vmul.f32 %v1553, %v223
    %v1586 = vmul.f32 %v1554, %v224
    %v1587 = vmul.f32 %v1555, %v225
    %v1588 = vmul.f32 %v1556, %v226
    %v1589 = vmul.f32 %v1541, %v227
    %v1590 = vmul.f32 %v1542, %v228
    %v1591 = vmul.f32 %v1543, %v229
    %v1592 = vmul.f32 %v1544, %v230
    %v1593 = vmul.f32 %v1545, %v231
    %v1594 = vmul.f32 %v1546, %v232
    %v1595 = vmul.f32 %v1547, %v233
    %v1596 = vmul.f32 %v1548, %v234
    %v1597 = vmul.f32 %v1549, %v235
    %v1598 = vmul.f32 %v1550, %v236
    %v1599 = vmul.f32 %v1551, %v237
    %v1600 = vmul.f32 %v1552, %v238
    %v1601 = vmul.f32 %v1553, %v239
    %v1602 = vmul.f32 %v1554, %v240
    %v1603 = vmul.f32 %v1555, %v241
    %v1604 = vmul.f32 %v1556, %v242
    %v1605 = vmul.f32 %v1541, %v243
    %v1606 = vmul.f32 %v1542, %v244
    %v1607 = vmul.f32 %v1543, %v245
    %v1608 = vmul.f32 %v1544, %v246
    %v1609 = vmul.f32 %v1545, %v247
    %v1610 = vmul.f32 %v1546, %v248
    %v1611 = vmul.f32 %v1547, %v249
    %v1612 = vmul.f32 %v1548, %v250
    %v1613 = vmul.f32 %v1549, %v251
    %v1614 = vmul.f32 %v1550, %v252
    %v1615 = vmul.f32 %v1551, %v253
    %v1616 = vmul.f32 %v1552, %v254
    %v1617 = vmul.f32 %v1553, %v255
    %v1618 = vmul.f32 %v1554, %v256
    %v1619 = vmul.f32 %v1555, %v257
    %v1620 = vmul.f32 %v1556, %v258
    %v1621 = vmul.f32 %v1541, %v259
    %v1622 = vmul.f32 %v1542, %v260
    %v1623 = vmul.f32 %v1543, %v261
    %v1624 = vmul.f32 %v1544, %v262
    %v1625 = vmul.f32 %v1545, %v263
    %v1626 = vmul.f32 %v1546, %v264
    %v1627 = vmul.f32 %v1547, %v265
    %v1628 = vmul.f32 %v1548, %v266
    %v1629 = vmul.f32 %v1549, %v267
    %v1630 = vmul.f32 %v1550, %v268
    %v1631 = vmul.f32 %v1551, %v269
    %v1632 = vmul.f32 %v1552, %v270
    %v1633 = vmul.f32 %v1553, %v271
    %v1634 = vmul.f32 %v1554, %v272
    %v1635 = vmul.f32 %v1555, %v273
    %v1636 = vmul.f32 %v1556, %v274
    %v1637 = vmul.f32 %v1541, %v275
    %v1638 = vmul.f32 %v1542, %v276
    %v1639 = vmul.f32 %v1543, %v277
    %v1640 = vmul.f32 %v1544, %v278
    %v1641 = vmul.f32 %v1545, %v279
    %v1642 = vmul.f32 %v1546, %v280
    %v1643 = vmul.f32 %v1547, %v281
    %v1644 = vmul.f32 %v1548, %v282
    %v1645 = vmul.f32 %v1549, %v283
    %v1646 = vmul.f32 %v1550, %v284
    %v1647 = vmul.f32 %v1551, %v285
    %v1648 = vmul.f32 %v1552, %v286
    %v1649 = vmul.f32 %v1553, %v287
    %v1650 = vmul.f32 %v1554, %v288
    %v1651 = vmul.f32 %v1555, %v289
    %v1652 = vmul.f32 %v1556, %v290
    %v1653 = vmul.f32 %v1541, %v291
    %v1654 = vmul.f32 %v1542, %v292
    %v1655 = vmul.f32 %v1543, %v293
    %v1656 = vmul.f32 %v1544, %v294
    %v1657 = vmul.f32 %v1545, %v295
    %v1658 = vmul.f32 %v1546, %v296
    %v1659 = vmul.f32 %v1547, %v297
    %v1660 = vmul.f32 %v1548, %v298
    %v1661 = vmul.f32 %v1549, %v299
    %v1662 = vmul.f32 %v1550, %v300
    %v1663 = vmul.f32 %v1551, %v301
    %v1664 = vmul.f32 %v1552, %v302
    %v1665 = vmul.f32 %v1553, %v303
    %v1666 = vmul.f32 %v1554, %v304
    %v1667 = vmul.f32 %v1555, %v305
    %v1668 = vmul.f32 %v1556, %v306
    %v1669 = vmul.f32 %v1541, %v307
    %v1670 = vmul.f32 %v1542, %v308
    %v1671 = vmul.f32 %v1543, %v309
    %v1672 = vmul.f32 %v1544, %v310
    %v1673 = vmul.f32 %v1545, %v311
    %v1674 = vmul.f32 %v1546, %v312
    %v1675 = vmul.f32 %v1547, %v313
    %v1676 = vmul.f32 %v1548, %v314
    %v1677 = vmul.f32 %v1549, %v315
    %v1678 = vmul.f32 %v1550, %v316
    %v1679 = vmul.f32 %v1551, %v317
    %v1680 = vmul.f32 %v1552, %v318
    %v1681 = vmul.f32 %v1553, %v319
    %v1682 = vmul.f32 %v1554, %v320
    %v1683 = vmul.f32 %v1555, %v321
    %v1684 = vmul.f32 %v1556, %v322
    %1685 = vmatprep.subr.mxu0 0.0
    %1686 = vmatpush1.msra.mxu0 %v452
    %1687 = vmatprep.subr.mxu0 0.0
    %1688 = vmatpush1.msra.mxu0 %v453
    %1689 = vmatprep.subr.mxu0 0.0
    %1690 = vmatpush1.msra.mxu0 %v454
    %1691 = vmatprep.subr.mxu0 0.0
    %1692 = vmatpush1.msra.mxu0 %v455
    %1693 = vmatprep.subr.mxu0 0.0
    %1694 = vmatpush1.msra.mxu0 %v456
    %1695 = vmatprep.subr.mxu0 0.0
    %1696 = vmatpush1.msra.mxu0 %v457
    %1697 = vmatprep.subr.mxu0 0.0
    %1698 = vmatpush1.msra.mxu0 %v458
    %1699 = vmatprep.subr.mxu0 0.0
    %1700 = vmatpush1.msra.mxu0 %v459
    %1701 = vmatprep.subr.mxu0 0.0
    %1702 = vmatpush1.msra.mxu0 %v460
    %1703 = vmatprep.subr.mxu0 0.0
    %1704 = vmatpush1.msra.mxu0 %v461
    %1705 = vmatprep.subr.mxu0 0.0
    %1706 = vmatpush1.msra.mxu0 %v462
    %1707 = vmatprep.subr.mxu0 0.0
    %1708 = vmatpush1.msra.mxu0 %v463
    %1709 = vmatprep.subr.mxu0 0.0
    %1710 = vmatpush1.msra.mxu0 %v464
    %1711 = vmatprep.subr.mxu0 0.0
    %1712 = vmatpush1.msra.mxu0 %v465
    %1713 = vmatprep.subr.mxu0 0.0
    %1714 = vmatpush1.msra.mxu0 %v466
    %1715 = vmatprep.subr.mxu0 0.0
    %1716 = vmatpush1.msra.mxu0 %v467
    %1717 = vmatprep.subr.mxu0 0.0
    %1718 = vmatpush1.msra.mxu0 %v468
    %1719 = vmatprep.subr.mxu0 0.0
    %1720 = vmatpush1.msra.mxu0 %v469
    %1721 = vmatprep.subr.mxu0 0.0
    %1722 = vmatpush1.msra.mxu0 %v470
    %1723 = vmatprep.subr.mxu0 0.0
    %1724 = vmatpush1.msra.mxu0 %v471
    %1725 = vmatprep.subr.mxu0 0.0
    %1726 = vmatpush1.msra.mxu0 %v472
    %1727 = vmatprep.subr.mxu0 0.0
    %1728 = vmatpush1.msra.mxu0 %v473
    %1729 = vmatprep.subr.mxu0 0.0
    %1730 = vmatpush1.msra.mxu0 %v474
    %1731 = vmatprep.subr.mxu0 0.0
    %1732 = vmatpush1.msra.mxu0 %v475
    %1733 = vmatprep.subr.mxu0 0.0
    %1734 = vmatpush1.msra.mxu0 %v476
    %1735 = vmatprep.subr.mxu0 0.0
    %1736 = vmatpush1.msra.mxu0 %v477
    %1737 = vmatprep.subr.mxu0 0.0
    %1738 = vmatpush1.msra.mxu0 %v478
    %1739 = vmatprep.subr.mxu0 0.0
    %1740 = vmatpush1.msra.mxu0 %v479
    %1741 = vmatprep.subr.mxu0 0.0
    %1742 = vmatpush1.msra.mxu0 %v480
    %1743 = vmatprep.subr.mxu0 0.0
    %1744 = vmatpush1.msra.mxu0 %v481
    %1745 = vmatprep.subr.mxu0 0.0
    %1746 = vmatpush1.msra.mxu0 %v482
    %1747 = vmatprep.subr.mxu0 0.0
    %1748 = vmatpush1.msra.mxu0 %v483
    %1749 = vmatprep.mubr.f32.mxu0 %v1558
    %1750 = vmatmul.mubr.f32.gmra.mrb[0].mxu0 %v1557
    %v1751 = vpop.f32.mrb[0].mxu0
    %v1752 = vadd.f32 0.0, %v1751
    %v1753 = vpop.f32.mrb[0].mxu0
    %1754 = vmatprep.mubr.f32.mxu0 %v1574
    %1755 = vmatmul.mubr.f32.gmra.mrb[0].mxu0 %v1573
    %v1756 = vpop.f32.mrb[0].mxu0
    %v1757 = vadd.f32 0.0, %v1756
    %v1758 = vpop.f32.mrb[0].mxu0
    %1759 = vmatprep.mubr.f32.mxu0 %v1590
    %1760 = vmatmul.mubr.f32.gmra.mrb[0].mxu0 %v1589
    %v1761 = vpop.f32.mrb[0].mxu0
    %v1762 = vadd.f32 0.0, %v1761
    %v1763 = vpop.f32.mrb[0].mxu0
    %1764 = vmatprep.mubr.f32.mxu0 %v1606
    %1765 = vmatmul.mubr.f32.gmra.mrb[0].mxu0 %v1605
    %v1766 = vpop.f32.mrb[0].mxu0
    %v1767 = vadd.f32 0.0, %v1766
    %v1768 = vpop.f32.mrb[0].mxu0
    %1769 = vmatprep.mubr.f32.mxu0 %v1622
    %1770 = vmatmul.mubr.f32.gmra.mrb[0].mxu0 %v1621
    %v1771 = vpop.f32.mrb[0].mxu0
    %v1772 = vadd.f32 0.0, %v1771
    %v1773 = vpop.f32.mrb[0].mxu0
    %1774 = vmatprep.mubr.f32.mxu0 %v1638
    %1775 = vmatmul.mubr.f32.gmra.mrb[0].mxu0 %v1637
    %v1776 = vpop.f32.mrb[0].mxu0
    %v1777 = vadd.f32 0.0, %v1776
    %v1778 = vpop.f32.mrb[0].mxu0
    %1779 = vmatprep.mubr.f32.mxu0 %v1654
    %1780 = vmatmul.mubr.f32.gmra.mrb[0].mxu0 %v1653
    %v1781 = vpop.f32.mrb[0].mxu0
    %v1782 = vadd.f32 0.0, %v1781
    %v1783 = vpop.f32.mrb[0].mxu0
    %1784 = vmatprep.mubr.f32.mxu0 %v1670
    %1785 = vmatmul.mubr.f32.gmra.mrb[0].mxu0 %v1669
    %v1786 = vpop.f32.mrb[0].mxu0
    %v1787 = vadd.f32 0.0, %v1786
    %v1788 = vpop.f32.mrb[0].mxu0
    %1789 = vdwg.mxu0
    %1790 = vmatprep.subr.mxu0 0.0
    %1791 = vmatpush1.msra.mxu0 %v484
    %1792 = vmatprep.subr.mxu0 0.0
    %1793 = vmatpush1.msra.mxu0 %v485
    %1794 = vmatprep.subr.mxu0 0.0
    %1795 = vmatpush1.msra.mxu0 %v486
    %1796 = vmatprep.subr.mxu0 0.0
    %1797 = vmatpush1.msra.mxu0 %v487
    %1798 = vmatprep.subr.mxu0 0.0
    %1799 = vmatpush1.msra.mxu0 %v488
    %1800 = vmatprep.subr.mxu0 0.0
    %1801 = vmatpush1.msra.mxu0 %v489
    %1802 = vmatprep.subr.mxu0 0.0
    %1803 = vmatpush1.msra.mxu0 %v490
    %1804 = vmatprep.subr.mxu0 0.0
    %1805 = vmatpush1.msra.mxu0 %v491
    %1806 = vmatprep.subr.mxu0 0.0
    %1807 = vmatpush1.msra.mxu0 %v492
    %1808 = vmatprep.subr.mxu0 0.0
    %1809 = vmatpush1.msra.mxu0 %v493
    %1810 = vmatprep.subr.mxu0 0.0
    %1811 = vmatpush1.msra.mxu0 %v494
    %1812 = vmatprep.subr.mxu0 0.0
    %1813 = vmatpush1.msra.mxu0 %v495
    %1814 = vmatprep.subr.mxu0 0.0
    %1815 = vmatpush1.msra.mxu0 %v496
    %1816 = vmatprep.subr.mxu0 0.0
    %1817 = vmatpush1.msra.mxu0 %v497
    %1818 = vmatprep.subr.mxu0 0.0
    %1819 = vmatpush1.msra.mxu0 %v498
    %1820 = vmatprep.subr.mxu0 0.0
    %1821 = vmatpush1.msra.mxu0 %v499
    %1822 = vmatprep.subr.mxu0 0.0
    %1823 = vmatpush1.msra.mxu0 %v500
    %1824 = vmatprep.subr.mxu0 0.0
    %1825 = vmatpush1.msra.mxu0 %v501
    %1826 = vmatprep.subr.mxu0 0.0
    %1827 = vmatpush1.msra.mxu0 %v502
    %1828 = vmatprep.subr.mxu0 0.0
    %1829 = vmatpush1.msra.mxu0 %v503
    %1830 = vmatprep.subr.mxu0 0.0
    %1831 = vmatpush1.msra.mxu0 %v504
    %1832 = vmatprep.subr.mxu0 0.0
    %1833 = vmatpush1.msra.mxu0 %v505
    %1834 = vmatprep.subr.mxu0 0.0
    %1835 = vmatpush1.msra.mxu0 %v506
    %1836 = vmatprep.subr.mxu0 0.0
    %1837 = vmatpush1.msra.mxu0 %v507
    %1838 = vmatprep.subr.mxu0 0.0
    %1839 = vmatpush1.msra.mxu0 %v508
    %1840 = vmatprep.subr.mxu0 0.0
    %1841 = vmatpush1.msra.mxu0 %v509
    %1842 = vmatprep.subr.mxu0 0.0
    %1843 = vmatpush1.msra.mxu0 %v510
    %1844 = vmatprep.subr.mxu0 0.0
    %1845 = vmatpush1.msra.mxu0 %v511
    %1846 = vmatprep.subr.mxu0 0.0
    %1847 = vmatpush1.msra.mxu0 %v512
    %1848 = vmatprep.subr.mxu0 0.0
    %1849 = vmatpush1.msra.mxu0 %v513
    %1850 = vmatprep.subr.mxu0 0.0
    %1851 = vmatpush1.msra.mxu0 %v514
    %1852 = vmatprep.subr.mxu0 0.0
    %1853 = vmatpush1.msra.mxu0 %v515
    %1854 = vmatprep.mubr.f32.mxu0 %v1560
    %1855 = vmatmul.mubr.f32.gmra.mrb[0].mxu0 %v1559
    %v1856 = vpop.f32.mrb[0].mxu0
    %v1857 = vadd.f32 %v1752, %v1856
    %v1858 = vpop.f32.mrb[0].mxu0
    %1859 = vmatprep.mubr.f32.mxu0 %v1576
    %1860 = vmatmul.mubr.f32.gmra.mrb[0].mxu0 %v1575
    %v1861 = vpop.f32.mrb[0].mxu0
    %v1862 = vadd.f32 %v1757, %v1861
    %v1863 = vpop.f32.mrb[0].mxu0
    %1864 = vmatprep.mubr.f32.mxu0 %v1592
    %1865 = vmatmul.mubr.f32.gmra.mrb[0].mxu0 %v1591
    %v1866 = vpop.f32.mrb[0].mxu0
    %v1867 = vadd.f32 %v1762, %v1866
    %v1868 = vpop.f32.mrb[0].mxu0
    %1869 = vmatprep.mubr.f32.mxu0 %v1608
    %1870 = vmatmul.mubr.f32.gmra.mrb[0].mxu0 %v1607
    %v1871 = vpop.f32.mrb[0].mxu0
    %v1872 = vadd.f32 %v1767, %v1871
    %v1873 = vpop.f32.mrb[0].mxu0
    %1874 = vmatprep.mubr.f32.mxu0 %v1624
    %1875 = vmatmul.mubr.f32.gmra.mrb[0].mxu0 %v1623
    %v1876 = vpop.f32.mrb[0].mxu0
    %v1877 = vadd.f32 %v1772, %v1876
    %v1878 = vpop.f32.mrb[0].mxu0
    %1879 = vmatprep.mubr.f32.mxu0 %v1640
    %1880 = vmatmul.mubr.f32.gmra.mrb[0].mxu0 %v1639
    %v1881 = vpop.f32.mrb[0].mxu0
    %v1882 = vadd.f32 %v1777, %v1881
    %v1883 = vpop.f32.mrb[0].mxu0
    %1884 = vmatprep.mubr.f32.mxu0 %v1656
    %1885 = vmatmul.mubr.f32.gmra.mrb[0].mxu0 %v1655
    %v1886 = vpop.f32.mrb[0].mxu0
    %v1887 = vadd.f32 %v1782, %v1886
    %v1888 = vpop.f32.mrb[0].mxu0
    %1889 = vmatprep.mubr.f32.mxu0 %v1672
    %1890 = vmatmul.mubr.f32.gmra.mrb[0].mxu0 %v1671
    %v1891 = vpop.f32.mrb[0].mxu0
    %v1892 = vadd.f32 %v1787, %v1891
    %v1893 = vpop.f32.mrb[0].mxu0
    %1894 = vdwg.mxu0
    %1895 = vmatprep.subr.mxu0 0.0
    %1896 = vmatpush1.msra.mxu0 %v516
    %1897 = vmatprep.subr.mxu0 0.0
    %1898 = vmatpush1.msra.mxu0 %v517
    %1899 = vmatprep.subr.mxu0 0.0
    %1900 = vmatpush1.msra.mxu0 %v518
    %1901 = vmatprep.subr.mxu0 0.0
    %1902 = vmatpush1.msra.mxu0 %v519
    %1903 = vmatprep.subr.mxu0 0.0
    %1904 = vmatpush1.msra.mxu0 %v520
    %1905 = vmatprep.subr.mxu0 0.0
    %1906 = vmatpush1.msra.mxu0 %v521
    %1907 = vmatprep.subr.mxu0 0.0
    %1908 = vmatpush1.msra.mxu0 %v522
    %1909 = vmatprep.subr.mxu0 0.0
    %1910 = vmatpush1.msra.mxu0 %v523
    %1911 = vmatprep.subr.mxu0 0.0
    %1912 = vmatpush1.msra.mxu0 %v524
    %1913 = vmatprep.subr.mxu0 0.0
    %1914 = vmatpush1.msra.mxu0 %v525
    %1915 = vmatprep.subr.mxu0 0.0
    %1916 = vmatpush1.msra.mxu0 %v526
    %1917 = vmatprep.subr.mxu0 0.0
    %1918 = vmatpush1.msra.mxu0 %v527
    %1919 = vmatprep.subr.mxu0 0.0
    %1920 = vmatpush1.msra.mxu0 %v528
    %1921 = vmatprep.subr.mxu0 0.0
    %1922 = vmatpush1.msra.mxu0 %v529
    %1923 = vmatprep.subr.mxu0 0.0
    %1924 = vmatpush1.msra.mxu0 %v530
    %1925 = vmatprep.subr.mxu0 0.0
    %1926 = vmatpush1.msra.mxu0 %v531
    %1927 = vmatprep.subr.mxu0 0.0
    %1928 = vmatpush1.msra.mxu0 %v532
    %1929 = vmatprep.subr.mxu0 0.0
    %1930 = vmatpush1.msra.mxu0 %v533
    %1931 = vmatprep.subr.mxu0 0.0
    %1932 = vmatpush1.msra.mxu0 %v534
    %1933 = vmatprep.subr.mxu0 0.0
    %1934 = vmatpush1.msra.mxu0 %v535
    %1935 = vmatprep.subr.mxu0 0.0
    %1936 = vmatpush1.msra.mxu0 %v536
    %1937 = vmatprep.subr.mxu0 0.0
    %1938 = vmatpush1.msra.mxu0 %v537
    %1939 = vmatprep.subr.mxu0 0.0
    %1940 = vmatpush1.msra.mxu0 %v538
    %1941 = vmatprep.subr.mxu0 0.0
    %1942 = vmatpush1.msra.mxu0 %v539
    %1943 = vmatprep.subr.mxu0 0.0
    %1944 = vmatpush1.msra.mxu0 %v540
    %1945 = vmatprep.subr.mxu0 0.0
    %1946 = vmatpush1.msra.mxu0 %v541
    %1947 = vmatprep.subr.mxu0 0.0
    %1948 = vmatpush1.msra.mxu0 %v542
    %1949 = vmatprep.subr.mxu0 0.0
    %1950 = vmatpush1.msra.mxu0 %v543
    %1951 = vmatprep.subr.mxu0 0.0
    %1952 = vmatpush1.msra.mxu0 %v544
    %1953 = vmatprep.subr.mxu0 0.0
    %1954 = vmatpush1.msra.mxu0 %v545
    %1955 = vmatprep.subr.mxu0 0.0
    %1956 = vmatpush1.msra.mxu0 %v546
    %1957 = vmatprep.subr.mxu0 0.0
    %1958 = vmatpush1.msra.mxu0 %v547
    %1959 = vmatprep.mubr.f32.mxu0 %v1562
    %1960 = vmatmul.mubr.f32.gmra.mrb[0].mxu0 %v1561
    %v1961 = vpop.f32.mrb[0].mxu0
    %v1962 = vadd.f32 %v1857, %v1961
    %v1963 = vpop.f32.mrb[0].mxu0
    %1964 = vmatprep.mubr.f32.mxu0 %v1578
    %1965 = vmatmul.mubr.f32.gmra.mrb[0].mxu0 %v1577
    %v1966 = vpop.f32.mrb[0].mxu0
    %v1967 = vadd.f32 %v1862, %v1966
    %v1968 = vpop.f32.mrb[0].mxu0
    %1969 = vmatprep.mubr.f32.mxu0 %v1594
    %1970 = vmatmul.mubr.f32.gmra.mrb[0].mxu0 %v1593
    %v1971 = vpop.f32.mrb[0].mxu0
    %v1972 = vadd.f32 %v1867, %v1971
    %v1973 = vpop.f32.mrb[0].mxu0
    %1974 = vmatprep.mubr.f32.mxu0 %v1610
    %1975 = vmatmul.mubr.f32.gmra.mrb[0].mxu0 %v1609
    %v1976 = vpop.f32.mrb[0].mxu0
    %v1977 = vadd.f32 %v1872, %v1976
    %v1978 = vpop.f32.mrb[0].mxu0
    %1979 = vmatprep.mubr.f32.mxu0 %v1626
    %1980 = vmatmul.mubr.f32.gmra.mrb[0].mxu0 %v1625
    %v1981 = vpop.f32.mrb[0].mxu0
    %v1982 = vadd.f32 %v1877, %v1981
    %v1983 = vpop.f32.mrb[0].mxu0
    %1984 = vmatprep.mubr.f32.mxu0 %v1642
    %1985 = vmatmul.mubr.f32.gmra.mrb[0].mxu0 %v1641
    %v1986 = vpop.f32.mrb[0].mxu0
    %v1987 = vadd.f32 %v1882, %v1986
    %v1988 = vpop.f32.mrb[0].mxu0
    %1989 = vmatprep.mubr.f32.mxu0 %v1658
    %1990 = vmatmul.mubr.f32.gmra.mrb[0].mxu0 %v1657
    %v1991 = vpop.f32.mrb[0].mxu0
    %v1992 = vadd.f32 %v1887, %v1991
    %v1993 = vpop.f32.mrb[0].mxu0
    %1994 = vmatprep.mubr.f32.mxu0 %v1674
    %1995 = vmatmul.mubr.f32.gmra.mrb[0].mxu0 %v1673
    %v1996 = vpop.f32.mrb[0].mxu0
    %v1997 = vadd.f32 %v1892, %v1996
    %v1998 = vpop.f32.mrb[0].mxu0
    %1999 = vdwg.mxu0
    %2000 = vmatprep.subr.mxu0 0.0
    %2001 = vmatpush1.msra.mxu0 %v548
    %2002 = vmatprep.subr.mxu0 0.0
    %2003 = vmatpush1.msra.mxu0 %v549
    %2004 = vmatprep.subr.mxu0 0.0
    %2005 = vmatpush1.msra.mxu0 %v550
    %2006 = vmatprep.subr.mxu0 0.0
    %2007 = vmatpush1.msra.mxu0 %v551
    %2008 = vmatprep.subr.mxu0 0.0
    %2009 = vmatpush1.msra.mxu0 %v552
    %2010 = vmatprep.subr.mxu0 0.0
    %2011 = vmatpush1.msra.mxu0 %v553
    %2012 = vmatprep.subr.mxu0 0.0
    %2013 = vmatpush1.msra.mxu0 %v554
    %2014 = vmatprep.subr.mxu0 0.0
    %2015 = vmatpush1.msra.mxu0 %v555
    %2016 = vmatprep.subr.mxu0 0.0
    %2017 = vmatpush1.msra.mxu0 %v556
    %2018 = vmatprep.subr.mxu0 0.0
    %2019 = vmatpush1.msra.mxu0 %v557
    %2020 = vmatprep.subr.mxu0 0.0
    %2021 = vmatpush1.msra.mxu0 %v558
    %2022 = vmatprep.subr.mxu0 0.0
    %2023 = vmatpush1.msra.mxu0 %v559
    %2024 = vmatprep.subr.mxu0 0.0
    %2025 = vmatpush1.msra.mxu0 %v560
    %2026 = vmatprep.subr.mxu0 0.0
    %2027 = vmatpush1.msra.mxu0 %v561
    %2028 = vmatprep.subr.mxu0 0.0
    %2029 = vmatpush1.msra.mxu0 %v562
    %2030 = vmatprep.subr.mxu0 0.0
    %2031 = vmatpush1.msra.mxu0 %v563
    %2032 = vmatprep.subr.mxu0 0.0
    %2033 = vmatpush1.msra.mxu0 %v564
    %2034 = vmatprep.subr.mxu0 0.0
    %2035 = vmatpush1.msra.mxu0 %v565
    %2036 = vmatprep.subr.mxu0 0.0
    %2037 = vmatpush1.msra.mxu0 %v566
    %2038 = vmatprep.subr.mxu0 0.0
    %2039 = vmatpush1.msra.mxu0 %v567
    %2040 = vmatprep.subr.mxu0 0.0
    %2041 = vmatpush1.msra.mxu0 %v568
    %2042 = vmatprep.subr.mxu0 0.0
    %2043 = vmatpush1.msra.mxu0 %v569
    %2044 = vmatprep.subr.mxu0 0.0
    %2045 = vmatpush1.msra.mxu0 %v570
    %2046 = vmatprep.subr.mxu0 0.0
    %2047 = vmatpush1.msra.mxu0 %v571
    %2048 = vmatprep.subr.mxu0 0.0
    %2049 = vmatpush1.msra.mxu0 %v572
    %2050 = vmatprep.subr.mxu0 0.0
    %2051 = vmatpush1.msra.mxu0 %v573
    %2052 = vmatprep.subr.mxu0 0.0
    %2053 = vmatpush1.msra.mxu0 %v574
    %2054 = vmatprep.subr.mxu0 0.0
    %2055 = vmatpush1.msra.mxu0 %v575
    %2056 = vmatprep.subr.mxu0 0.0
    %2057 = vmatpush1.msra.mxu0 %v576
    %2058 = vmatprep.subr.mxu0 0.0
    %2059 = vmatpush1.msra.mxu0 %v577
    %2060 = vmatprep.subr.mxu0 0.0
    %2061 = vmatpush1.msra.mxu0 %v578
    %2062 = vmatprep.subr.mxu0 0.0
    %2063 = vmatpush1.msra.mxu0 %v579
    %2064 = vmatprep.mubr.f32.mxu0 %v1564
    %2065 = vmatmul.mubr.f32.gmra.mrb[0].mxu0 %v1563
    %v2066 = vpop.f32.mrb[0].mxu0
    %v2067 = vadd.f32 %v1962, %v2066
    %v2068 = vpop.f32.mrb[0].mxu0
    %2069 = vmatprep.mubr.f32.mxu0 %v1580
    %2070 = vmatmul.mubr.f32.gmra.mrb[0].mxu0 %v1579
    %v2071 = vpop.f32.mrb[0].mxu0
    %v2072 = vadd.f32 %v1967, %v2071
    %v2073 = vpop.f32.mrb[0].mxu0
    %2074 = vmatprep.mubr.f32.mxu0 %v1596
    %2075 = vmatmul.mubr.f32.gmra.mrb[0].mxu0 %v1595
    %v2076 = vpop.f32.mrb[0].mxu0
    %v2077 = vadd.f32 %v1972, %v2076
    %v2078 = vpop.f32.mrb[0].mxu0
    %2079 = vmatprep.mubr.f32.mxu0 %v1612
    %2080 = vmatmul.mubr.f32.gmra.mrb[0].mxu0 %v1611
    %v2081 = vpop.f32.mrb[0].mxu0
    %v2082 = vadd.f32 %v1977, %v2081
    %v2083 = vpop.f32.mrb[0].mxu0
    %2084 = vmatprep.mubr.f32.mxu0 %v1628
    %2085 = vmatmul.mubr.f32.gmra.mrb[0].mxu0 %v1627
    %v2086 = vpop.f32.mrb[0].mxu0
    %v2087 = vadd.f32 %v1982, %v2086
    %v2088 = vpop.f32.mrb[0].mxu0
    %2089 = vmatprep.mubr.f32.mxu0 %v1644
    %2090 = vmatmul.mubr.f32.gmra.mrb[0].mxu0 %v1643
    %v2091 = vpop.f32.mrb[0].mxu0
    %v2092 = vadd.f32 %v1987, %v2091
    %v2093 = vpop.f32.mrb[0].mxu0
    %2094 = vmatprep.mubr.f32.mxu0 %v1660
    %2095 = vmatmul.mubr.f32.gmra.mrb[0].mxu0 %v1659
    %v2096 = vpop.f32.mrb[0].mxu0
    %v2097 = vadd.f32 %v1992, %v2096
    %v2098 = vpop.f32.mrb[0].mxu0
    %2099 = vmatprep.mubr.f32.mxu0 %v1676
    %2100 = vmatmul.mubr.f32.gmra.mrb[0].mxu0 %v1675
    %v2101 = vpop.f32.mrb[0].mxu0
    %v2102 = vadd.f32 %v1997, %v2101
    %v2103 = vpop.f32.mrb[0].mxu0
    %2104 = vdwg.mxu0
    %2105 = vmatprep.subr.mxu0 0.0
    %2106 = vmatpush1.msra.mxu0 %v580
    %2107 = vmatprep.subr.mxu0 0.0
    %2108 = vmatpush1.msra.mxu0 %v581
    %2109 = vmatprep.subr.mxu0 0.0
    %2110 = vmatpush1.msra.mxu0 %v582
    %2111 = vmatprep.subr.mxu0 0.0
    %2112 = vmatpush1.msra.mxu0 %v583
    %2113 = vmatprep.subr.mxu0 0.0
    %2114 = vmatpush1.msra.mxu0 %v584
    %2115 = vmatprep.subr.mxu0 0.0
    %2116 = vmatpush1.msra.mxu0 %v585
    %2117 = vmatprep.subr.mxu0 0.0
    %2118 = vmatpush1.msra.mxu0 %v586
    %2119 = vmatprep.subr.mxu0 0.0
    %2120 = vmatpush1.msra.mxu0 %v587
    %2121 = vmatprep.subr.mxu0 0.0
    %2122 = vmatpush1.msra.mxu0 %v588
    %2123 = vmatprep.subr.mxu0 0.0
    %2124 = vmatpush1.msra.mxu0 %v589
    %2125 = vmatprep.subr.mxu0 0.0
    %2126 = vmatpush1.msra.mxu0 %v590
    %2127 = vmatprep.subr.mxu0 0.0
    %2128 = vmatpush1.msra.mxu0 %v591
    %2129 = vmatprep.subr.mxu0 0.0
    %2130 = vmatpush1.msra.mxu0 %v592
    %2131 = vmatprep.subr.mxu0 0.0
    %2132 = vmatpush1.msra.mxu0 %v593
    %2133 = vmatprep.subr.mxu0 0.0
    %2134 = vmatpush1.msra.mxu0 %v594
    %2135 = vmatprep.subr.mxu0 0.0
    %2136 = vmatpush1.msra.mxu0 %v595
    %2137 = vmatprep.subr.mxu0 0.0
    %2138 = vmatpush1.msra.mxu0 %v596
    %2139 = vmatprep.subr.mxu0 0.0
    %2140 = vmatpush1.msra.mxu0 %v597
    %2141 = vmatprep.subr.mxu0 0.0
    %2142 = vmatpush1.msra.mxu0 %v598
    %2143 = vmatprep.subr.mxu0 0.0
    %2144 = vmatpush1.msra.mxu0 %v599
    %2145 = vmatprep.subr.mxu0 0.0
    %2146 = vmatpush1.msra.mxu0 %v600
    %2147 = vmatprep.subr.mxu0 0.0
    %2148 = vmatpush1.msra.mxu0 %v601
    %2149 = vmatprep.subr.mxu0 0.0
    %2150 = vmatpush1.msra.mxu0 %v602
    %2151 = vmatprep.subr.mxu0 0.0
    %2152 = vmatpush1.msra.mxu0 %v603
    %2153 = vmatprep.subr.mxu0 0.0
    %2154 = vmatpush1.msra.mxu0 %v604
    %2155 = vmatprep.subr.mxu0 0.0
    %2156 = vmatpush1.msra.mxu0 %v605
    %2157 = vmatprep.subr.mxu0 0.0
    %2158 = vmatpush1.msra.mxu0 %v606
    %2159 = vmatprep.subr.mxu0 0.0
    %2160 = vmatpush1.msra.mxu0 %v607
    %2161 = vmatprep.subr.mxu0 0.0
    %2162 = vmatpush1.msra.mxu0 %v608
    %2163 = vmatprep.subr.mxu0 0.0
    %2164 = vmatpush1.msra.mxu0 %v609
    %2165 = vmatprep.subr.mxu0 0.0
    %2166 = vmatpush1.msra.mxu0 %v610
    %2167 = vmatprep.subr.mxu0 0.0
    %2168 = vmatpush1.msra.mxu0 %v611
    %2169 = vmatprep.mubr.f32.mxu0 %v1566
    %2170 = vmatmul.mubr.f32.gmra.mrb[0].mxu0 %v1565
    %v2171 = vpop.f32.mrb[0].mxu0
    %v2172 = vadd.f32 %v2067, %v2171
    %v2173 = vpop.f32.mrb[0].mxu0
    %2174 = vmatprep.mubr.f32.mxu0 %v1582
    %2175 = vmatmul.mubr.f32.gmra.mrb[0].mxu0 %v1581
    %v2176 = vpop.f32.mrb[0].mxu0
    %v2177 = vadd.f32 %v2072, %v2176
    %v2178 = vpop.f32.mrb[0].mxu0
    %2179 = vmatprep.mubr.f32.mxu0 %v1598
    %2180 = vmatmul.mubr.f32.gmra.mrb[0].mxu0 %v1597
    %v2181 = vpop.f32.mrb[0].mxu0
    %v2182 = vadd.f32 %v2077, %v2181
    %v2183 = vpop.f32.mrb[0].mxu0
    %2184 = vmatprep.mubr.f32.mxu0 %v1614
    %2185 = vmatmul.mubr.f32.gmra.mrb[0].mxu0 %v1613
    %v2186 = vpop.f32.mrb[0].mxu0
    %v2187 = vadd.f32 %v2082, %v2186
    %v2188 = vpop.f32.mrb[0].mxu0
    %2189 = vmatprep.mubr.f32.mxu0 %v1630
    %2190 = vmatmul.mubr.f32.gmra.mrb[0].mxu0 %v1629
    %v2191 = vpop.f32.mrb[0].mxu0
    %v2192 = vadd.f32 %v2087, %v2191
    %v2193 = vpop.f32.mrb[0].mxu0
    %2194 = vmatprep.mubr.f32.mxu0 %v1646
    %2195 = vmatmul.mubr.f32.gmra.mrb[0].mxu0 %v1645
    %v2196 = vpop.f32.mrb[0].mxu0
    %v2197 = vadd.f32 %v2092, %v2196
    %v2198 = vpop.f32.mrb[0].mxu0
    %2199 = vmatprep.mubr.f32.mxu0 %v1662
    %2200 = vmatmul.mubr.f32.gmra.mrb[0].mxu0 %v1661
    %v2201 = vpop.f32.mrb[0].mxu0
    %v2202 = vadd.f32 %v2097, %v2201
    %v2203 = vpop.f32.mrb[0].mxu0
    %2204 = vmatprep.mubr.f32.mxu0 %v1678
    %2205 = vmatmul.mubr.f32.gmra.mrb[0].mxu0 %v1677
    %v2206 = vpop.f32.mrb[0].mxu0
    %v2207 = vadd.f32 %v2102, %v2206
    %v2208 = vpop.f32.mrb[0].mxu0
    %2209 = vdwg.mxu0
    %2210 = vmatprep.subr.mxu0 0.0
    %2211 = vmatpush1.msra.mxu0 %v612
    %2212 = vmatprep.subr.mxu0 0.0
    %2213 = vmatpush1.msra.mxu0 %v613
    %2214 = vmatprep.subr.mxu0 0.0
    %2215 = vmatpush1.msra.mxu0 %v614
    %2216 = vmatprep.subr.mxu0 0.0
    %2217 = vmatpush1.msra.mxu0 %v615
    %2218 = vmatprep.subr.mxu0 0.0
    %2219 = vmatpush1.msra.mxu0 %v616
    %2220 = vmatprep.subr.mxu0 0.0
    %2221 = vmatpush1.msra.mxu0 %v617
    %2222 = vmatprep.subr.mxu0 0.0
    %2223 = vmatpush1.msra.mxu0 %v618
    %2224 = vmatprep.subr.mxu0 0.0
    %2225 = vmatpush1.msra.mxu0 %v619
    %2226 = vmatprep.subr.mxu0 0.0
    %2227 = vmatpush1.msra.mxu0 %v620
    %2228 = vmatprep.subr.mxu0 0.0
    %2229 = vmatpush1.msra.mxu0 %v621
    %2230 = vmatprep.subr.mxu0 0.0
    %2231 = vmatpush1.msra.mxu0 %v622
    %2232 = vmatprep.subr.mxu0 0.0
    %2233 = vmatpush1.msra.mxu0 %v623
    %2234 = vmatprep.subr.mxu0 0.0
    %2235 = vmatpush1.msra.mxu0 %v624
    %2236 = vmatprep.subr.mxu0 0.0
    %2237 = vmatpush1.msra.mxu0 %v625
    %2238 = vmatprep.subr.mxu0 0.0
    %2239 = vmatpush1.msra.mxu0 %v626
    %2240 = vmatprep.subr.mxu0 0.0
    %2241 = vmatpush1.msra.mxu0 %v627
    %2242 = vmatprep.subr.mxu0 0.0
    %2243 = vmatpush1.msra.mxu0 %v628
    %2244 = vmatprep.subr.mxu0 0.0
    %2245 = vmatpush1.msra.mxu0 %v629
    %2246 = vmatprep.subr.mxu0 0.0
    %2247 = vmatpush1.msra.mxu0 %v630
    %2248 = vmatprep.subr.mxu0 0.0
    %2249 = vmatpush1.msra.mxu0 %v631
    %2250 = vmatprep.subr.mxu0 0.0
    %2251 = vmatpush1.msra.mxu0 %v632
    %2252 = vmatprep.subr.mxu0 0.0
    %2253 = vmatpush1.msra.mxu0 %v633
    %2254 = vmatprep.subr.mxu0 0.0
    %2255 = vmatpush1.msra.mxu0 %v634
    %2256 = vmatprep.subr.mxu0 0.0
    %2257 = vmatpush1.msra.mxu0 %v635
    %2258 = vmatprep.subr.mxu0 0.0
    %2259 = vmatpush1.msra.mxu0 %v636
    %2260 = vmatprep.subr.mxu0 0.0
    %2261 = vmatpush1.msra.mxu0 %v637
    %2262 = vmatprep.subr.mxu0 0.0
    %2263 = vmatpush1.msra.mxu0 %v638
    %2264 = vmatprep.subr.mxu0 0.0
    %2265 = vmatpush1.msra.mxu0 %v639
    %2266 = vmatprep.subr.mxu0 0.0
    %2267 = vmatpush1.msra.mxu0 %v640
    %2268 = vmatprep.subr.mxu0 0.0
    %2269 = vmatpush1.msra.mxu0 %v641
    %2270 = vmatprep.subr.mxu0 0.0
    %2271 = vmatpush1.msra.mxu0 %v642
    %2272 = vmatprep.subr.mxu0 0.0
    %2273 = vmatpush1.msra.mxu0 %v643
    %2274 = vmatprep.mubr.f32.mxu0 %v1568
    %2275 = vmatmul.mubr.f32.gmra.mrb[0].mxu0 %v1567
    %v2276 = vpop.f32.mrb[0].mxu0
    %v2277 = vadd.f32 %v2172, %v2276
    %v2278 = vpop.f32.mrb[0].mxu0
    %2279 = vmatprep.mubr.f32.mxu0 %v1584
    %2280 = vmatmul.mubr.f32.gmra.mrb[0].mxu0 %v1583
    %v2281 = vpop.f32.mrb[0].mxu0
    %v2282 = vadd.f32 %v2177, %v2281
    %v2283 = vpop.f32.mrb[0].mxu0
    %2284 = vmatprep.mubr.f32.mxu0 %v1600
    %2285 = vmatmul.mubr.f32.gmra.mrb[0].mxu0 %v1599
    %v2286 = vpop.f32.mrb[0].mxu0
    %v2287 = vadd.f32 %v2182, %v2286
    %v2288 = vpop.f32.mrb[0].mxu0
    %2289 = vmatprep.mubr.f32.mxu0 %v1616
    %2290 = vmatmul.mubr.f32.gmra.mrb[0].mxu0 %v1615
    %v2291 = vpop.f32.mrb[0].mxu0
    %v2292 = vadd.f32 %v2187, %v2291
    %v2293 = vpop.f32.mrb[0].mxu0
    %2294 = vmatprep.mubr.f32.mxu0 %v1632
    %2295 = vmatmul.mubr.f32.gmra.mrb[0].mxu0 %v1631
    %v2296 = vpop.f32.mrb[0].mxu0
    %v2297 = vadd.f32 %v2192, %v2296
    %v2298 = vpop.f32.mrb[0].mxu0
    %2299 = vmatprep.mubr.f32.mxu0 %v1648
    %2300 = vmatmul.mubr.f32.gmra.mrb[0].mxu0 %v1647
    %v2301 = vpop.f32.mrb[0].mxu0
    %v2302 = vadd.f32 %v2197, %v2301
    %v2303 = vpop.f32.mrb[0].mxu0
    %2304 = vmatprep.mubr.f32.mxu0 %v1664
    %2305 = vmatmul.mubr.f32.gmra.mrb[0].mxu0 %v1663
    %v2306 = vpop.f32.mrb[0].mxu0
    %v2307 = vadd.f32 %v2202, %v2306
    %v2308 = vpop.f32.mrb[0].mxu0
    %2309 = vmatprep.mubr.f32.mxu0 %v1680
    %2310 = vmatmul.mubr.f32.gmra.mrb[0].mxu0 %v1679
    %v2311 = vpop.f32.mrb[0].mxu0
    %v2312 = vadd.f32 %v2207, %v2311
    %v2313 = vpop.f32.mrb[0].mxu0
    %2314 = vdwg.mxu0
    %2315 = vmatprep.subr.mxu0 0.0
    %2316 = vmatpush1.msra.mxu0 %v644
    %2317 = vmatprep.subr.mxu0 0.0
    %2318 = vmatpush1.msra.mxu0 %v645
    %2319 = vmatprep.subr.mxu0 0.0
    %2320 = vmatpush1.msra.mxu0 %v646
    %2321 = vmatprep.subr.mxu0 0.0
    %2322 = vmatpush1.msra.mxu0 %v647
    %2323 = vmatprep.subr.mxu0 0.0
    %2324 = vmatpush1.msra.mxu0 %v648
    %2325 = vmatprep.subr.mxu0 0.0
    %2326 = vmatpush1.msra.mxu0 %v649
    %2327 = vmatprep.subr.mxu0 0.0
    %2328 = vmatpush1.msra.mxu0 %v650
    %2329 = vmatprep.subr.mxu0 0.0
    %2330 = vmatpush1.msra.mxu0 %v651
    %2331 = vmatprep.subr.mxu0 0.0
    %2332 = vmatpush1.msra.mxu0 %v652
    %2333 = vmatprep.subr.mxu0 0.0
    %2334 = vmatpush1.msra.mxu0 %v653
    %2335 = vmatprep.subr.mxu0 0.0
    %2336 = vmatpush1.msra.mxu0 %v654
    %2337 = vmatprep.subr.mxu0 0.0
    %2338 = vmatpush1.msra.mxu0 %v655
    %2339 = vmatprep.subr.mxu0 0.0
    %2340 = vmatpush1.msra.mxu0 %v656
    %2341 = vmatprep.subr.mxu0 0.0
    %2342 = vmatpush1.msra.mxu0 %v657
    %2343 = vmatprep.subr.mxu0 0.0
    %2344 = vmatpush1.msra.mxu0 %v658
    %2345 = vmatprep.subr.mxu0 0.0
    %2346 = vmatpush1.msra.mxu0 %v659
    %2347 = vmatprep.subr.mxu0 0.0
    %2348 = vmatpush1.msra.mxu0 %v660
    %2349 = vmatprep.subr.mxu0 0.0
    %2350 = vmatpush1.msra.mxu0 %v661
    %2351 = vmatprep.subr.mxu0 0.0
    %2352 = vmatpush1.msra.mxu0 %v662
    %2353 = vmatprep.subr.mxu0 0.0
    %2354 = vmatpush1.msra.mxu0 %v663
    %2355 = vmatprep.subr.mxu0 0.0
    %2356 = vmatpush1.msra.mxu0 %v664
    %2357 = vmatprep.subr.mxu0 0.0
    %2358 = vmatpush1.msra.mxu0 %v665
    %2359 = vmatprep.subr.mxu0 0.0
    %2360 = vmatpush1.msra.mxu0 %v666
    %2361 = vmatprep.subr.mxu0 0.0
    %2362 = vmatpush1.msra.mxu0 %v667
    %2363 = vmatprep.subr.mxu0 0.0
    %2364 = vmatpush1.msra.mxu0 %v668
    %2365 = vmatprep.subr.mxu0 0.0
    %2366 = vmatpush1.msra.mxu0 %v669
    %2367 = vmatprep.subr.mxu0 0.0
    %2368 = vmatpush1.msra.mxu0 %v670
    %2369 = vmatprep.subr.mxu0 0.0
    %2370 = vmatpush1.msra.mxu0 %v671
    %2371 = vmatprep.subr.mxu0 0.0
    %2372 = vmatpush1.msra.mxu0 %v672
    %2373 = vmatprep.subr.mxu0 0.0
    %2374 = vmatpush1.msra.mxu0 %v673
    %2375 = vmatprep.subr.mxu0 0.0
    %2376 = vmatpush1.msra.mxu0 %v674
    %2377 = vmatprep.subr.mxu0 0.0
    %2378 = vmatpush1.msra.mxu0 %v675
    %2379 = vmatprep.mubr.f32.mxu0 %v1570
    %2380 = vmatmul.mubr.f32.gmra.mrb[0].mxu0 %v1569
    %v2381 = vpop.f32.mrb[0].mxu0
    %v2382 = vadd.f32 %v2277, %v2381
    %v2383 = vpop.f32.mrb[0].mxu0
    %2384 = vmatprep.mubr.f32.mxu0 %v1586
    %2385 = vmatmul.mubr.f32.gmra.mrb[0].mxu0 %v1585
    %v2386 = vpop.f32.mrb[0].mxu0
    %v2387 = vadd.f32 %v2282, %v2386
    %v2388 = vpop.f32.mrb[0].mxu0
    %2389 = vmatprep.mubr.f32.mxu0 %v1602
    %2390 = vmatmul.mubr.f32.gmra.mrb[0].mxu0 %v1601
    %v2391 = vpop.f32.mrb[0].mxu0
    %v2392 = vadd.f32 %v2287, %v2391
    %v2393 = vpop.f32.mrb[0].mxu0
    %2394 = vmatprep.mubr.f32.mxu0 %v1618
    %2395 = vmatmul.mubr.f32.gmra.mrb[0].mxu0 %v1617
    %v2396 = vpop.f32.mrb[0].mxu0
    %v2397 = vadd.f32 %v2292, %v2396
    %v2398 = vpop.f32.mrb[0].mxu0
    %2399 = vmatprep.mubr.f32.mxu0 %v1634
    %2400 = vmatmul.mubr.f32.gmra.mrb[0].mxu0 %v1633
    %v2401 = vpop.f32.mrb[0].mxu0
    %v2402 = vadd.f32 %v2297, %v2401
    %v2403 = vpop.f32.mrb[0].mxu0
    %2404 = vmatprep.mubr.f32.mxu0 %v1650
    %2405 = vmatmul.mubr.f32.gmra.mrb[0].mxu0 %v1649
    %v2406 = vpop.f32.mrb[0].mxu0
    %v2407 = vadd.f32 %v2302, %v2406
    %v2408 = vpop.f32.mrb[0].mxu0
    %2409 = vmatprep.mubr.f32.mxu0 %v1666
    %2410 = vmatmul.mubr.f32.gmra.mrb[0].mxu0 %v1665
    %v2411 = vpop.f32.mrb[0].mxu0
    %v2412 = vadd.f32 %v2307, %v2411
    %v2413 = vpop.f32.mrb[0].mxu0
    %2414 = vmatprep.mubr.f32.mxu0 %v1682
    %2415 = vmatmul.mubr.f32.gmra.mrb[0].mxu0 %v1681
    %v2416 = vpop.f32.mrb[0].mxu0
    %v2417 = vadd.f32 %v2312, %v2416
    %v2418 = vpop.f32.mrb[0].mxu0
    %2419 = vdwg.mxu0
    %2420 = vmatprep.subr.mxu0 0.0
    %2421 = vmatpush1.msra.mxu0 %v676
    %2422 = vmatprep.subr.mxu0 0.0
    %2423 = vmatpush1.msra.mxu0 %v677
    %2424 = vmatprep.subr.mxu0 0.0
    %2425 = vmatpush1.msra.mxu0 %v678
    %2426 = vmatprep.subr.mxu0 0.0
    %2427 = vmatpush1.msra.mxu0 %v679
    %2428 = vmatprep.subr.mxu0 0.0
    %2429 = vmatpush1.msra.mxu0 %v680
    %2430 = vmatprep.subr.mxu0 0.0
    %2431 = vmatpush1.msra.mxu0 %v681
    %2432 = vmatprep.subr.mxu0 0.0
    %2433 = vmatpush1.msra.mxu0 %v682
    %2434 = vmatprep.subr.mxu0 0.0
    %2435 = vmatpush1.msra.mxu0 %v683
    %2436 = vmatprep.subr.mxu0 0.0
    %2437 = vmatpush1.msra.mxu0 %v684
    %2438 = vmatprep.subr.mxu0 0.0
    %2439 = vmatpush1.msra.mxu0 %v685
    %2440 = vmatprep.subr.mxu0 0.0
    %2441 = vmatpush1.msra.mxu0 %v686
    %2442 = vmatprep.subr.mxu0 0.0
    %2443 = vmatpush1.msra.mxu0 %v687
    %2444 = vmatprep.subr.mxu0 0.0
    %2445 = vmatpush1.msra.mxu0 %v688
    %2446 = vmatprep.subr.mxu0 0.0
    %2447 = vmatpush1.msra.mxu0 %v689
    %2448 = vmatprep.subr.mxu0 0.0
    %2449 = vmatpush1.msra.mxu0 %v690
    %2450 = vmatprep.subr.mxu0 0.0
    %2451 = vmatpush1.msra.mxu0 %v691
    %2452 = vmatprep.subr.mxu0 0.0
    %2453 = vmatpush1.msra.mxu0 %v692
    %2454 = vmatprep.subr.mxu0 0.0
    %2455 = vmatpush1.msra.mxu0 %v693
    %2456 = vmatprep.subr.mxu0 0.0
    %2457 = vmatpush1.msra.mxu0 %v694
    %2458 = vmatprep.subr.mxu0 0.0
    %2459 = vmatpush1.msra.mxu0 %v695
    %2460 = vmatprep.subr.mxu0 0.0
    %2461 = vmatpush1.msra.mxu0 %v696
    %2462 = vmatprep.subr.mxu0 0.0
    %2463 = vmatpush1.msra.mxu0 %v697
    %2464 = vmatprep.subr.mxu0 0.0
    %2465 = vmatpush1.msra.mxu0 %v698
    %2466 = vmatprep.subr.mxu0 0.0
    %2467 = vmatpush1.msra.mxu0 %v699
    %2468 = vmatprep.subr.mxu0 0.0
    %2469 = vmatpush1.msra.mxu0 %v700
    %2470 = vmatprep.subr.mxu0 0.0
    %2471 = vmatpush1.msra.mxu0 %v701
    %2472 = vmatprep.subr.mxu0 0.0
    %2473 = vmatpush1.msra.mxu0 %v702
    %2474 = vmatprep.subr.mxu0 0.0
    %2475 = vmatpush1.msra.mxu0 %v703
    %2476 = vmatprep.subr.mxu0 0.0
    %2477 = vmatpush1.msra.mxu0 %v704
    %2478 = vmatprep.subr.mxu0 0.0
    %2479 = vmatpush1.msra.mxu0 %v705
    %2480 = vmatprep.subr.mxu0 0.0
    %2481 = vmatpush1.msra.mxu0 %v706
    %2482 = vmatprep.subr.mxu0 0.0
    %2483 = vmatpush1.msra.mxu0 %v707
    %2484 = vmatprep.mubr.f32.mxu0 %v1572
    %2485 = vmatmul.mubr.f32.gmra.mrb[0].mxu0 %v1571
    %v2486 = vpop.f32.mrb[0].mxu0
    %v2487 = vadd.f32 %v2382, %v2486
    %v2488 = vpop.f32.mrb[0].mxu0
    %2489 = vmatprep.mubr.f32.mxu0 %v1588
    %2490 = vmatmul.mubr.f32.gmra.mrb[0].mxu0 %v1587
    %v2491 = vpop.f32.mrb[0].mxu0
    %v2492 = vadd.f32 %v2387, %v2491
    %v2493 = vpop.f32.mrb[0].mxu0
    %2494 = vmatprep.mubr.f32.mxu0 %v1604
    %2495 = vmatmul.mubr.f32.gmra.mrb[0].mxu0 %v1603
    %v2496 = vpop.f32.mrb[0].mxu0
    %v2497 = vadd.f32 %v2392, %v2496
    %v2498 = vpop.f32.mrb[0].mxu0
    %2499 = vmatprep.mubr.f32.mxu0 %v1620
    %2500 = vmatmul.mubr.f32.gmra.mrb[0].mxu0 %v1619
    %v2501 = vpop.f32.mrb[0].mxu0
    %v2502 = vadd.f32 %v2397, %v2501
    %v2503 = vpop.f32.mrb[0].mxu0
    %2504 = vmatprep.mubr.f32.mxu0 %v1636
    %2505 = vmatmul.mubr.f32.gmra.mrb[0].mxu0 %v1635
    %v2506 = vpop.f32.mrb[0].mxu0
    %v2507 = vadd.f32 %v2402, %v2506
    %v2508 = vpop.f32.mrb[0].mxu0
    %2509 = vmatprep.mubr.f32.mxu0 %v1652
    %2510 = vmatmul.mubr.f32.gmra.mrb[0].mxu0 %v1651
    %v2511 = vpop.f32.mrb[0].mxu0
    %v2512 = vadd.f32 %v2407, %v2511
    %v2513 = vpop.f32.mrb[0].mxu0
    %2514 = vmatprep.mubr.f32.mxu0 %v1668
    %2515 = vmatmul.mubr.f32.gmra.mrb[0].mxu0 %v1667
    %v2516 = vpop.f32.mrb[0].mxu0
    %v2517 = vadd.f32 %v2412, %v2516
    %v2518 = vpop.f32.mrb[0].mxu0
    %2519 = vmatprep.mubr.f32.mxu0 %v1684
    %2520 = vmatmul.mubr.f32.gmra.mrb[0].mxu0 %v1683
    %v2521 = vpop.f32.mrb[0].mxu0
    %v2522 = vadd.f32 %v2417, %v2521
    %v2523 = vpop.f32.mrb[0].mxu0
    %2524 = vdwg.mxu0
    %v2526 = vsel %vm713, %v2487, 0
    %v2529 = vsel %vm713, %v2492, 0
    %v2532 = vsel %vm713, %v2497, 0
    %v2535 = vsel %vm713, %v2502, 0
    %v2538 = vsel %vm713, %v2507, 0
    %v2541 = vsel %vm713, %v2512, 0
    %v2544 = vsel %vm713, %v2517, 0
    %v2547 = vsel %vm713, %v2522, 0
    %2549 = vmatprep.subr.mxu0 %v172
    %2550 = vmatpush1.msra.mxu0 %v171
    %2551 = vmatprep.subr.mxu0 %v174
    %2552 = vmatpush1.msra.mxu0 %v173
    %2553 = vmatprep.subr.mxu0 %v176
    %2554 = vmatpush1.msra.mxu0 %v175
    %2555 = vmatprep.subr.mxu0 %v178
    %2556 = vmatpush1.msra.mxu0 %v177
    %2557 = vmatprep.subr.mxu0 0.0
    %2558 = vmatpush1.msra.mxu0 0.0
    %2559 = vmatprep.subr.mxu0 0.0
    %2560 = vmatpush1.msra.mxu0 0.0
    %2561 = vmatprep.subr.mxu0 0.0
    %2562 = vmatpush1.msra.mxu0 0.0
    %2563 = vmatprep.subr.mxu0 0.0
    %2564 = vmatpush1.msra.mxu0 0.0
    %2565 = vmatprep.subr.mxu0 0.0
    %2566 = vmatpush1.msra.mxu0 0.0
    %2567 = vmatprep.subr.mxu0 0.0
    %2568 = vmatpush1.msra.mxu0 0.0
    %2569 = vmatprep.subr.mxu0 0.0
    %2570 = vmatpush1.msra.mxu0 0.0
    %2571 = vmatprep.subr.mxu0 0.0
    %2572 = vmatpush1.msra.mxu0 0.0
    %2573 = vmatprep.subr.mxu0 0.0
    %2574 = vmatpush1.msra.mxu0 0.0
    %2575 = vmatprep.subr.mxu0 0.0
    %2576 = vmatpush1.msra.mxu0 0.0
    %2577 = vmatprep.subr.mxu0 0.0
    %2578 = vmatpush1.msra.mxu0 0.0
    %2579 = vmatprep.subr.mxu0 0.0
    %2580 = vmatpush1.msra.mxu0 0.0
    %2581 = vmatprep.subr.mxu0 0.0
    %2582 = vmatpush1.msra.mxu0 0.0
    %2583 = vmatprep.subr.mxu0 0.0
    %2584 = vmatpush1.msra.mxu0 0.0
    %2585 = vmatprep.subr.mxu0 0.0
    %2586 = vmatpush1.msra.mxu0 0.0
    %2587 = vmatprep.subr.mxu0 0.0
    %2588 = vmatpush1.msra.mxu0 0.0
    %2589 = vmatprep.subr.mxu0 0.0
    %2590 = vmatpush1.msra.mxu0 0.0
    %2591 = vmatprep.subr.mxu0 0.0
    %2592 = vmatpush1.msra.mxu0 0.0
    %2593 = vmatprep.subr.mxu0 0.0
    %2594 = vmatpush1.msra.mxu0 0.0
    %2595 = vmatprep.subr.mxu0 0.0
    %2596 = vmatpush1.msra.mxu0 0.0
    %2597 = vmatprep.subr.mxu0 0.0
    %2598 = vmatpush1.msra.mxu0 0.0
    %2599 = vmatprep.subr.mxu0 0.0
    %2600 = vmatpush1.msra.mxu0 0.0
    %2601 = vmatprep.subr.mxu0 0.0
    %2602 = vmatpush1.msra.mxu0 0.0
    %2603 = vmatprep.subr.mxu0 0.0
    %2604 = vmatpush1.msra.mxu0 0.0
    %2605 = vmatprep.subr.mxu0 0.0
    %2606 = vmatpush1.msra.mxu0 0.0
    %2607 = vmatprep.subr.mxu0 0.0
    %2608 = vmatpush1.msra.mxu0 0.0
    %2609 = vmatprep.subr.mxu0 0.0
    %2610 = vmatpush1.msra.mxu0 0.0
    %2611 = vmatprep.subr.mxu0 0.0
    %2612 = vmatpush1.msra.mxu0 0.0
    %2613 = vmatprep.mubr.f32.mxu0 0.0
    %2614 = vmatmul.mubr.f32.gmra.mrb[0].mxu0 %v2526
    %v2615 = vpop.f32.mrb[0].mxu0
    %v2616 = vadd.f32 0.0, %v2615
    %v2617 = vpop.f32.mrb[0].mxu0
    %v2618 = vadd.f32 0.0, %v2617
    %2619 = vmatprep.mubr.f32.mxu0 0.0
    %2620 = vmatmul.mubr.f32.gmra.mrb[0].mxu0 %v2529
    %v2621 = vpop.f32.mrb[0].mxu0
    %v2622 = vadd.f32 0.0, %v2621
    %v2623 = vpop.f32.mrb[0].mxu0
    %v2624 = vadd.f32 0.0, %v2623
    %2625 = vmatprep.mubr.f32.mxu0 0.0
    %2626 = vmatmul.mubr.f32.gmra.mrb[0].mxu0 %v2532
    %v2627 = vpop.f32.mrb[0].mxu0
    %v2628 = vadd.f32 0.0, %v2627
    %v2629 = vpop.f32.mrb[0].mxu0
    %v2630 = vadd.f32 0.0, %v2629
    %2631 = vmatprep.mubr.f32.mxu0 0.0
    %2632 = vmatmul.mubr.f32.gmra.mrb[0].mxu0 %v2535
    %v2633 = vpop.f32.mrb[0].mxu0
    %v2634 = vadd.f32 0.0, %v2633
    %v2635 = vpop.f32.mrb[0].mxu0
    %v2636 = vadd.f32 0.0, %v2635
    %2637 = vmatprep.mubr.f32.mxu0 0.0
    %2638 = vmatmul.mubr.f32.gmra.mrb[0].mxu0 %v2538
    %v2639 = vpop.f32.mrb[0].mxu0
    %v2640 = vadd.f32 0.0, %v2639
    %v2641 = vpop.f32.mrb[0].mxu0
    %v2642 = vadd.f32 0.0, %v2641
    %2643 = vmatprep.mubr.f32.mxu0 0.0
    %2644 = vmatmul.mubr.f32.gmra.mrb[0].mxu0 %v2541
    %v2645 = vpop.f32.mrb[0].mxu0
    %v2646 = vadd.f32 0.0, %v2645
    %v2647 = vpop.f32.mrb[0].mxu0
    %v2648 = vadd.f32 0.0, %v2647
    %2649 = vmatprep.mubr.f32.mxu0 0.0
    %2650 = vmatmul.mubr.f32.gmra.mrb[0].mxu0 %v2544
    %v2651 = vpop.f32.mrb[0].mxu0
    %v2652 = vadd.f32 0.0, %v2651
    %v2653 = vpop.f32.mrb[0].mxu0
    %v2654 = vadd.f32 0.0, %v2653
    %2655 = vmatprep.mubr.f32.mxu0 0.0
    %2656 = vmatmul.mubr.f32.gmra.mrb[0].mxu0 %v2547
    %v2657 = vpop.f32.mrb[0].mxu0
    %v2658 = vadd.f32 0.0, %v2657
    %v2659 = vpop.f32.mrb[0].mxu0
    %v2660 = vadd.f32 0.0, %v2659
    %2661 = vdwg.mxu0
    %v2662 = vmul.f32 %v2616, %v179
    %v2663 = vmul.f32 %v2618, %v180
    %v2664 = vmul.f32 %v2622, %v181
    %v2665 = vmul.f32 %v2624, %v182
    %v2666 = vmul.f32 %v2628, %v183
    %v2667 = vmul.f32 %v2630, %v184
    %v2668 = vmul.f32 %v2634, %v185
    %v2669 = vmul.f32 %v2636, %v186
    %v2670 = vmul.f32 %v2640, %v187
    %v2671 = vmul.f32 %v2642, %v188
    %v2672 = vmul.f32 %v2646, %v189
    %v2673 = vmul.f32 %v2648, %v190
    %v2674 = vmul.f32 %v2652, %v191
    %v2675 = vmul.f32 %v2654, %v192
    %v2676 = vmul.f32 %v2658, %v193
    %v2677 = vmul.f32 %v2660, %v194
    %vm2678 = vcmask 523264
    %v2680 = vsel %vm2678, %v2663, 0
    %v2683 = vsel %vm2678, %v2665, 0
    %v2686 = vsel %vm2678, %v2667, 0
    %v2689 = vsel %vm2678, %v2669, 0
    %v2692 = vsel %vm2678, %v2671, 0
    %v2695 = vsel %vm2678, %v2673, 0
    %v2698 = vsel %vm2678, %v2675, 0
    %v2701 = vsel %vm2678, %v2677, 0
    %2703 = vmatprep.subr.mxu0 0.0
    %2704 = vmatpush1.msra.mxu0 %v42
    %2705 = vmatprep.subr.mxu0 0.0
    %2706 = vmatpush1.msra.mxu0 %v43
    %2707 = vmatprep.subr.mxu0 0.0
    %2708 = vmatpush1.msra.mxu0 %v44
    %2709 = vmatprep.subr.mxu0 0.0
    %2710 = vmatpush1.msra.mxu0 %v45
    %2711 = vmatprep.subr.mxu0 0.0
    %2712 = vmatpush1.msra.mxu0 %v46
    %2713 = vmatprep.subr.mxu0 0.0
    %2714 = vmatpush1.msra.mxu0 %v47
    %2715 = vmatprep.subr.mxu0 0.0
    %2716 = vmatpush1.msra.mxu0 %v48
    %2717 = vmatprep.subr.mxu0 0.0
    %2718 = vmatpush1.msra.mxu0 %v49
    %2719 = vmatprep.subr.mxu0 0.0
    %2720 = vmatpush1.msra.mxu0 %v50
    %2721 = vmatprep.subr.mxu0 0.0
    %2722 = vmatpush1.msra.mxu0 %v51
    %2723 = vmatprep.subr.mxu0 0.0
    %2724 = vmatpush1.msra.mxu0 %v52
    %2725 = vmatprep.subr.mxu0 0.0
    %2726 = vmatpush1.msra.mxu0 %v53
    %2727 = vmatprep.subr.mxu0 0.0
    %2728 = vmatpush1.msra.mxu0 %v54
    %2729 = vmatprep.subr.mxu0 0.0
    %2730 = vmatpush1.msra.mxu0 %v55
    %2731 = vmatprep.subr.mxu0 0.0
    %2732 = vmatpush1.msra.mxu0 %v56
    %2733 = vmatprep.subr.mxu0 0.0
    %2734 = vmatpush1.msra.mxu0 %v57
    %2735 = vmatprep.subr.mxu0 0.0
    %2736 = vmatpush1.msra.mxu0 %v58
    %2737 = vmatprep.subr.mxu0 0.0
    %2738 = vmatpush1.msra.mxu0 %v59
    %2739 = vmatprep.subr.mxu0 0.0
    %2740 = vmatpush1.msra.mxu0 %v60
    %2741 = vmatprep.subr.mxu0 0.0
    %2742 = vmatpush1.msra.mxu0 %v61
    %2743 = vmatprep.subr.mxu0 0.0
    %2744 = vmatpush1.msra.mxu0 %v62
    %2745 = vmatprep.subr.mxu0 0.0
    %2746 = vmatpush1.msra.mxu0 %v63
    %2747 = vmatprep.subr.mxu0 0.0
    %2748 = vmatpush1.msra.mxu0 %v64
    %2749 = vmatprep.subr.mxu0 0.0
    %2750 = vmatpush1.msra.mxu0 %v65
    %2751 = vmatprep.subr.mxu0 0.0
    %2752 = vmatpush1.msra.mxu0 0.0
    %2753 = vmatprep.subr.mxu0 0.0
    %2754 = vmatpush1.msra.mxu0 0.0
    %2755 = vmatprep.subr.mxu0 0.0
    %2756 = vmatpush1.msra.mxu0 0.0
    %2757 = vmatprep.subr.mxu0 0.0
    %2758 = vmatpush1.msra.mxu0 0.0
    %2759 = vmatprep.subr.mxu0 0.0
    %2760 = vmatpush1.msra.mxu0 0.0
    %2761 = vmatprep.subr.mxu0 0.0
    %2762 = vmatpush1.msra.mxu0 0.0
    %2763 = vmatprep.subr.mxu0 0.0
    %2764 = vmatpush1.msra.mxu0 0.0
    %2765 = vmatprep.subr.mxu0 0.0
    %2766 = vmatpush1.msra.mxu0 0.0
    %2767 = vmatprep.mubr.f32.mxu0 %v2680
    %2768 = vmatmul.mubr.f32.gmra.mrb[0].mxu0 %v2662
    %v2769 = vpop.f32.mrb[0].mxu0
    %v2770 = vadd.f32 0.0, %v2769
    %v2771 = vpop.f32.mrb[0].mxu0
    %2772 = vmatprep.mubr.f32.mxu0 %v2683
    %2773 = vmatmul.mubr.f32.gmra.mrb[0].mxu0 %v2664
    %v2774 = vpop.f32.mrb[0].mxu0
    %v2775 = vadd.f32 0.0, %v2774
    %v2776 = vpop.f32.mrb[0].mxu0
    %2777 = vmatprep.mubr.f32.mxu0 %v2686
    %2778 = vmatmul.mubr.f32.gmra.mrb[0].mxu0 %v2666
    %v2779 = vpop.f32.mrb[0].mxu0
    %v2780 = vadd.f32 0.0, %v2779
    %v2781 = vpop.f32.mrb[0].mxu0
    %2782 = vmatprep.mubr.f32.mxu0 %v2689
    %2783 = vmatmul.mubr.f32.gmra.mrb[0].mxu0 %v2668
    %v2784 = vpop.f32.mrb[0].mxu0
    %v2785 = vadd.f32 0.0, %v2784
    %v2786 = vpop.f32.mrb[0].mxu0
    %2787 = vmatprep.mubr.f32.mxu0 %v2692
    %2788 = vmatmul.mubr.f32.gmra.mrb[0].mxu0 %v2670
    %v2789 = vpop.f32.mrb[0].mxu0
    %v2790 = vadd.f32 0.0, %v2789
    %v2791 = vpop.f32.mrb[0].mxu0
    %2792 = vmatprep.mubr.f32.mxu0 %v2695
    %2793 = vmatmul.mubr.f32.gmra.mrb[0].mxu0 %v2672
    %v2794 = vpop.f32.mrb[0].mxu0
    %v2795 = vadd.f32 0.0, %v2794
    %v2796 = vpop.f32.mrb[0].mxu0
    %2797 = vmatprep.mubr.f32.mxu0 %v2698
    %2798 = vmatmul.mubr.f32.gmra.mrb[0].mxu0 %v2674
    %v2799 = vpop.f32.mrb[0].mxu0
    %v2800 = vadd.f32 0.0, %v2799
    %v2801 = vpop.f32.mrb[0].mxu0
    %2802 = vmatprep.mubr.f32.mxu0 %v2701
    %2803 = vmatmul.mubr.f32.gmra.mrb[0].mxu0 %v2676
    %v2804 = vpop.f32.mrb[0].mxu0
    %v2805 = vadd.f32 0.0, %v2804
    %v2806 = vpop.f32.mrb[0].mxu0
    %2807 = vdwg.mxu0
    %v2808 = vmul.f32 %v2770, %v90
    %v2809 = vmul.f32 %v2775, %v91
    %v2810 = vmul.f32 %v2780, %v92
    %v2811 = vmul.f32 %v2785, %v93
    %v2812 = vmul.f32 %v2790, %v94
    %v2813 = vmul.f32 %v2795, %v95
    %v2814 = vmul.f32 %v2800, %v96
    %v2815 = vmul.f32 %v2805, %v97
    %v2816 = vadd.f32 %v2808, %v98
    %v2817 = vadd.f32 %v2809, %v99
    %v2818 = vadd.f32 %v2810, %v100
    %v2819 = vadd.f32 %v2811, %v101
    %v2820 = vadd.f32 %v2812, %v102
    %v2821 = vadd.f32 %v2813, %v103
    %v2822 = vadd.f32 %v2814, %v104
    %v2823 = vadd.f32 %v2815, %v105
    %v2824 = vmax.f32 %v2816, 0.0
    %v2825 = vmax.f32 %v2817, 0.0
    %v2826 = vmax.f32 %v2818, 0.0
    %v2827 = vmax.f32 %v2819, 0.0
    %v2828 = vmax.f32 %v2820, 0.0
    %v2829 = vmax.f32 %v2821, 0.0
    %v2830 = vmax.f32 %v2822, 0.0
    %v2831 = vmax.f32 %v2823, 0.0
    %v2832 = vlaneseq
    %v2833 = vshrl.u32 %v2832, 7
    %v2834 = vsub.s32 0, %v2833
    %v2835 = vrot.slane %v170, %v2834
    %v2837 = vsel %vm713, %v2824, 0
    %v2840 = vsel %vm713, %v2825, 0
    %v2843 = vsel %vm713, %v2826, 0
    %v2846 = vsel %vm713, %v2827, 0
    %v2849 = vsel %vm713, %v2828, 0
    %v2852 = vsel %vm713, %v2829, 0
    %v2855 = vsel %vm713, %v2830, 0
    %v2858 = vsel %vm713, %v2831, 0
    %2860 = vmatprep.subr.mxu0 0.0
    %2861 = vmatpush1.msra.mxu0 %v26
    %2862 = vmatprep.subr.mxu0 0.0
    %2863 = vmatpush1.msra.mxu0 %v27
    %2864 = vmatprep.subr.mxu0 0.0
    %2865 = vmatpush1.msra.mxu0 %v28
    %2866 = vmatprep.subr.mxu0 0.0
    %2867 = vmatpush1.msra.mxu0 %v29
    %2868 = vmatprep.subr.mxu0 0.0
    %2869 = vmatpush1.msra.mxu0 0.0
    %2870 = vmatprep.subr.mxu0 0.0
    %2871 = vmatpush1.msra.mxu0 0.0
    %2872 = vmatprep.subr.mxu0 0.0
    %2873 = vmatpush1.msra.mxu0 0.0
    %2874 = vmatprep.subr.mxu0 0.0
    %2875 = vmatpush1.msra.mxu0 0.0
    %2876 = vmatprep.subr.mxu0 0.0
    %2877 = vmatpush1.msra.mxu0 0.0
    %2878 = vmatprep.subr.mxu0 0.0
    %2879 = vmatpush1.msra.mxu0 0.0
    %2880 = vmatprep.subr.mxu0 0.0
    %2881 = vmatpush1.msra.mxu0 0.0
    %2882 = vmatprep.subr.mxu0 0.0
    %2883 = vmatpush1.msra.mxu0 0.0
    %2884 = vmatprep.subr.mxu0 0.0
    %2885 = vmatpush1.msra.mxu0 0.0
    %2886 = vmatprep.subr.mxu0 0.0
    %2887 = vmatpush1.msra.mxu0 0.0
    %2888 = vmatprep.subr.mxu0 0.0
    %2889 = vmatpush1.msra.mxu0 0.0
    %2890 = vmatprep.subr.mxu0 0.0
    %2891 = vmatpush1.msra.mxu0 0.0
    %2892 = vmatprep.subr.mxu0 0.0
    %2893 = vmatpush1.msra.mxu0 0.0
    %2894 = vmatprep.subr.mxu0 0.0
    %2895 = vmatpush1.msra.mxu0 0.0
    %2896 = vmatprep.subr.mxu0 0.0
    %2897 = vmatpush1.msra.mxu0 0.0
    %2898 = vmatprep.subr.mxu0 0.0
    %2899 = vmatpush1.msra.mxu0 0.0
    %2900 = vmatprep.subr.mxu0 0.0
    %2901 = vmatpush1.msra.mxu0 0.0
    %2902 = vmatprep.subr.mxu0 0.0
    %2903 = vmatpush1.msra.mxu0 0.0
    %2904 = vmatprep.subr.mxu0 0.0
    %2905 = vmatpush1.msra.mxu0 0.0
    %2906 = vmatprep.subr.mxu0 0.0
    %2907 = vmatpush1.msra.mxu0 0.0
    %2908 = vmatprep.subr.mxu0 0.0
    %2909 = vmatpush1.msra.mxu0 0.0
    %2910 = vmatprep.subr.mxu0 0.0
    %2911 = vmatpush1.msra.mxu0 0.0
    %2912 = vmatprep.subr.mxu0 0.0
    %2913 = vmatpush1.msra.mxu0 0.0
    %2914 = vmatprep.subr.mxu0 0.0
    %2915 = vmatpush1.msra.mxu0 0.0
    %2916 = vmatprep.subr.mxu0 0.0
    %2917 = vmatpush1.msra.mxu0 0.0
    %2918 = vmatprep.subr.mxu0 0.0
    %2919 = vmatpush1.msra.mxu0 0.0
    %2920 = vmatprep.subr.mxu0 0.0
    %2921 = vmatpush1.msra.mxu0 0.0
    %2922 = vmatprep.subr.mxu0 0.0
    %2923 = vmatpush1.msra.mxu0 0.0
    %2924 = vmatprep.mubr.f32.mxu0 0.0
    %2925 = vmatmul.mubr.f32.gmra.mrb[0].mxu0 %v2837
    %v2926 = vpop.f32.mrb[0].mxu0
    %v2927 = vadd.f32 %v2835, %v2926
    %v2928 = vpop.f32.mrb[0].mxu0
    %2929 = vmatprep.mubr.f32.mxu0 0.0
    %2930 = vmatmul.mubr.f32.gmra.mrb[0].mxu0 %v2840
    %v2931 = vpop.f32.mrb[0].mxu0
    %v2932 = vadd.f32 %v2835, %v2931
    %v2933 = vpop.f32.mrb[0].mxu0
    %2934 = vmatprep.mubr.f32.mxu0 0.0
    %2935 = vmatmul.mubr.f32.gmra.mrb[0].mxu0 %v2843
    %v2936 = vpop.f32.mrb[0].mxu0
    %v2937 = vadd.f32 %v2835, %v2936
    %v2938 = vpop.f32.mrb[0].mxu0
    %2939 = vmatprep.mubr.f32.mxu0 0.0
    %2940 = vmatmul.mubr.f32.gmra.mrb[0].mxu0 %v2846
    %v2941 = vpop.f32.mrb[0].mxu0
    %v2942 = vadd.f32 %v2835, %v2941
    %v2943 = vpop.f32.mrb[0].mxu0
    %2944 = vmatprep.mubr.f32.mxu0 0.0
    %2945 = vmatmul.mubr.f32.gmra.mrb[0].mxu0 %v2849
    %v2946 = vpop.f32.mrb[0].mxu0
    %v2947 = vadd.f32 %v2835, %v2946
    %v2948 = vpop.f32.mrb[0].mxu0
    %2949 = vmatprep.mubr.f32.mxu0 0.0
    %2950 = vmatmul.mubr.f32.gmra.mrb[0].mxu0 %v2852
    %v2951 = vpop.f32.mrb[0].mxu0
    %v2952 = vadd.f32 %v2835, %v2951
    %v2953 = vpop.f32.mrb[0].mxu0
    %2954 = vmatprep.mubr.f32.mxu0 0.0
    %2955 = vmatmul.mubr.f32.gmra.mrb[0].mxu0 %v2855
    %v2956 = vpop.f32.mrb[0].mxu0
    %v2957 = vadd.f32 %v2835, %v2956
    %v2958 = vpop.f32.mrb[0].mxu0
    %2959 = vmatprep.mubr.f32.mxu0 0.0
    %2960 = vmatmul.mubr.f32.gmra.mrb[0].mxu0 %v2858
    %v2961 = vpop.f32.mrb[0].mxu0
    %v2962 = vadd.f32 %v2835, %v2961
    %v2963 = vpop.f32.mrb[0].mxu0
    %2964 = vdwg.mxu0
    %v2965 = vlaneseq
    %v2966 = vshrl.u32 %v2965, 7
    %v2967 = vsub.s32 1, %v2966
    %v2968 = vrot.slane %v170, %v2967
    %2969 = vmatprep.subr.mxu0 0.0
    %2970 = vmatpush1.msra.mxu0 %v30
    %2971 = vmatprep.subr.mxu0 0.0
    %2972 = vmatpush1.msra.mxu0 %v31
    %2973 = vmatprep.subr.mxu0 0.0
    %2974 = vmatpush1.msra.mxu0 %v32
    %2975 = vmatprep.subr.mxu0 0.0
    %2976 = vmatpush1.msra.mxu0 %v33
    %2977 = vmatprep.subr.mxu0 0.0
    %2978 = vmatpush1.msra.mxu0 0.0
    %2979 = vmatprep.subr.mxu0 0.0
    %2980 = vmatpush1.msra.mxu0 0.0
    %2981 = vmatprep.subr.mxu0 0.0
    %2982 = vmatpush1.msra.mxu0 0.0
    %2983 = vmatprep.subr.mxu0 0.0
    %2984 = vmatpush1.msra.mxu0 0.0
    %2985 = vmatprep.subr.mxu0 0.0
    %2986 = vmatpush1.msra.mxu0 0.0
    %2987 = vmatprep.subr.mxu0 0.0
    %2988 = vmatpush1.msra.mxu0 0.0
    %2989 = vmatprep.subr.mxu0 0.0
    %2990 = vmatpush1.msra.mxu0 0.0
    %2991 = vmatprep.subr.mxu0 0.0
    %2992 = vmatpush1.msra.mxu0 0.0
    %2993 = vmatprep.subr.mxu0 0.0
    %2994 = vmatpush1.msra.mxu0 0.0
    %2995 = vmatprep.subr.mxu0 0.0
    %2996 = vmatpush1.msra.mxu0 0.0
    %2997 = vmatprep.subr.mxu0 0.0
    %2998 = vmatpush1.msra.mxu0 0.0
    %2999 = vmatprep.subr.mxu0 0.0
    %3000 = vmatpush1.msra.mxu0 0.0
    %3001 = vmatprep.subr.mxu0 0.0
    %3002 = vmatpush1.msra.mxu0 0.0
    %3003 = vmatprep.subr.mxu0 0.0
    %3004 = vmatpush1.msra.mxu0 0.0
    %3005 = vmatprep.subr.mxu0 0.0
    %3006 = vmatpush1.msra.mxu0 0.0
    %3007 = vmatprep.subr.mxu0 0.0
    %3008 = vmatpush1.msra.mxu0 0.0
    %3009 = vmatprep.subr.mxu0 0.0
    %3010 = vmatpush1.msra.mxu0 0.0
    %3011 = vmatprep.subr.mxu0 0.0
    %3012 = vmatpush1.msra.mxu0 0.0
    %3013 = vmatprep.subr.mxu0 0.0
    %3014 = vmatpush1.msra.mxu0 0.0
    %3015 = vmatprep.subr.mxu0 0.0
    %3016 = vmatpush1.msra.mxu0 0.0
    %3017 = vmatprep.subr.mxu0 0.0
    %3018 = vmatpush1.msra.mxu0 0.0
    %3019 = vmatprep.subr.mxu0 0.0
    %3020 = vmatpush1.msra.mxu0 0.0
    %3021 = vmatprep.subr.mxu0 0.0
    %3022 = vmatpush1.msra.mxu0 0.0
    %3023 = vmatprep.subr.mxu0 0.0
    %3024 = vmatpush1.msra.mxu0 0.0
    %3025 = vmatprep.subr.mxu0 0.0
    %3026 = vmatpush1.msra.mxu0 0.0
    %3027 = vmatprep.subr.mxu0 0.0
    %3028 = vmatpush1.msra.mxu0 0.0
    %3029 = vmatprep.subr.mxu0 0.0
    %3030 = vmatpush1.msra.mxu0 0.0
    %3031 = vmatprep.subr.mxu0 0.0
    %3032 = vmatpush1.msra.mxu0 0.0
    %3033 = vmatprep.mubr.f32.mxu0 0.0
    %3034 = vmatmul.mubr.f32.gmra.mrb[0].mxu0 %v2837
    %v3035 = vpop.f32.mrb[0].mxu0
    %v3036 = vadd.f32 %v2968, %v3035
    %v3037 = vpop.f32.mrb[0].mxu0
    %3038 = vmatprep.mubr.f32.mxu0 0.0
    %3039 = vmatmul.mubr.f32.gmra.mrb[0].mxu0 %v2840
    %v3040 = vpop.f32.mrb[0].mxu0
    %v3041 = vadd.f32 %v2968, %v3040
    %v3042 = vpop.f32.mrb[0].mxu0
    %3043 = vmatprep.mubr.f32.mxu0 0.0
    %3044 = vmatmul.mubr.f32.gmra.mrb[0].mxu0 %v2843
    %v3045 = vpop.f32.mrb[0].mxu0
    %v3046 = vadd.f32 %v2968, %v3045
    %v3047 = vpop.f32.mrb[0].mxu0
    %3048 = vmatprep.mubr.f32.mxu0 0.0
    %3049 = vmatmul.mubr.f32.gmra.mrb[0].mxu0 %v2846
    %v3050 = vpop.f32.mrb[0].mxu0
    %v3051 = vadd.f32 %v2968, %v3050
    %v3052 = vpop.f32.mrb[0].mxu0
    %3053 = vmatprep.mubr.f32.mxu0 0.0
    %3054 = vmatmul.mubr.f32.gmra.mrb[0].mxu0 %v2849
    %v3055 = vpop.f32.mrb[0].mxu0
    %v3056 = vadd.f32 %v2968, %v3055
    %v3057 = vpop.f32.mrb[0].mxu0
    %3058 = vmatprep.mubr.f32.mxu0 0.0
    %3059 = vmatmul.mubr.f32.gmra.mrb[0].mxu0 %v2852
    %v3060 = vpop.f32.mrb[0].mxu0
    %v3061 = vadd.f32 %v2968, %v3060
    %v3062 = vpop.f32.mrb[0].mxu0
    %3063 = vmatprep.mubr.f32.mxu0 0.0
    %3064 = vmatmul.mubr.f32.gmra.mrb[0].mxu0 %v2855
    %v3065 = vpop.f32.mrb[0].mxu0
    %v3066 = vadd.f32 %v2968, %v3065
    %v3067 = vpop.f32.mrb[0].mxu0
    %3068 = vmatprep.mubr.f32.mxu0 0.0
    %3069 = vmatmul.mubr.f32.gmra.mrb[0].mxu0 %v2858
    %v3070 = vpop.f32.mrb[0].mxu0
    %v3071 = vadd.f32 %v2968, %v3070
    %v3072 = vpop.f32.mrb[0].mxu0
    %3073 = vdwg.mxu0
    %v3074 = vlaneseq
    %v3075 = vshrl.u32 %v3074, 7
    %v3076 = vsub.s32 2, %v3075
    %v3077 = vrot.slane %v170, %v3076
    %3078 = vmatprep.subr.mxu0 0.0
    %3079 = vmatpush1.msra.mxu0 %v34
    %3080 = vmatprep.subr.mxu0 0.0
    %3081 = vmatpush1.msra.mxu0 %v35
    %3082 = vmatprep.subr.mxu0 0.0
    %3083 = vmatpush1.msra.mxu0 %v36
    %3084 = vmatprep.subr.mxu0 0.0
    %3085 = vmatpush1.msra.mxu0 %v37
    %3086 = vmatprep.subr.mxu0 0.0
    %3087 = vmatpush1.msra.mxu0 0.0
    %3088 = vmatprep.subr.mxu0 0.0
    %3089 = vmatpush1.msra.mxu0 0.0
    %3090 = vmatprep.subr.mxu0 0.0
    %3091 = vmatpush1.msra.mxu0 0.0
    %3092 = vmatprep.subr.mxu0 0.0
    %3093 = vmatpush1.msra.mxu0 0.0
    %3094 = vmatprep.subr.mxu0 0.0
    %3095 = vmatpush1.msra.mxu0 0.0
    %3096 = vmatprep.subr.mxu0 0.0
    %3097 = vmatpush1.msra.mxu0 0.0
    %3098 = vmatprep.subr.mxu0 0.0
    %3099 = vmatpush1.msra.mxu0 0.0
    %3100 = vmatprep.subr.mxu0 0.0
    %3101 = vmatpush1.msra.mxu0 0.0
    %3102 = vmatprep.subr.mxu0 0.0
    %3103 = vmatpush1.msra.mxu0 0.0
    %3104 = vmatprep.subr.mxu0 0.0
    %3105 = vmatpush1.msra.mxu0 0.0
    %3106 = vmatprep.subr.mxu0 0.0
    %3107 = vmatpush1.msra.mxu0 0.0
    %3108 = vmatprep.subr.mxu0 0.0
    %3109 = vmatpush1.msra.mxu0 0.0
    %3110 = vmatprep.subr.mxu0 0.0
    %3111 = vmatpush1.msra.mxu0 0.0
    %3112 = vmatprep.subr.mxu0 0.0
    %3113 = vmatpush1.msra.mxu0 0.0
    %3114 = vmatprep.subr.mxu0 0.0
    %3115 = vmatpush1.msra.mxu0 0.0
    %3116 = vmatprep.subr.mxu0 0.0
    %3117 = vmatpush1.msra.mxu0 0.0
    %3118 = vmatprep.subr.mxu0 0.0
    %3119 = vmatpush1.msra.mxu0 0.0
    %3120 = vmatprep.subr.mxu0 0.0
    %3121 = vmatpush1.msra.mxu0 0.0
    %3122 = vmatprep.subr.mxu0 0.0
    %3123 = vmatpush1.msra.mxu0 0.0
    %3124 = vmatprep.subr.mxu0 0.0
    %3125 = vmatpush1.msra.mxu0 0.0
    %3126 = vmatprep.subr.mxu0 0.0
    %3127 = vmatpush1.msra.mxu0 0.0
    %3128 = vmatprep.subr.mxu0 0.0
    %3129 = vmatpush1.msra.mxu0 0.0
    %3130 = vmatprep.subr.mxu0 0.0
    %3131 = vmatpush1.msra.mxu0 0.0
    %3132 = vmatprep.subr.mxu0 0.0
    %3133 = vmatpush1.msra.mxu0 0.0
    %3134 = vmatprep.subr.mxu0 0.0
    %3135 = vmatpush1.msra.mxu0 0.0
    %3136 = vmatprep.subr.mxu0 0.0
    %3137 = vmatpush1.msra.mxu0 0.0
    %3138 = vmatprep.subr.mxu0 0.0
    %3139 = vmatpush1.msra.mxu0 0.0
    %3140 = vmatprep.subr.mxu0 0.0
    %3141 = vmatpush1.msra.mxu0 0.0
    %3142 = vmatprep.mubr.f32.mxu0 0.0
    %3143 = vmatmul.mubr.f32.gmra.mrb[0].mxu0 %v2837
    %v3144 = vpop.f32.mrb[0].mxu0
    %v3145 = vadd.f32 %v3077, %v3144
    %v3146 = vpop.f32.mrb[0].mxu0
    %3147 = vmatprep.mubr.f32.mxu0 0.0
    %3148 = vmatmul.mubr.f32.gmra.mrb[0].mxu0 %v2840
    %v3149 = vpop.f32.mrb[0].mxu0
    %v3150 = vadd.f32 %v3077, %v3149
    %v3151 = vpop.f32.mrb[0].mxu0
    %3152 = vmatprep.mubr.f32.mxu0 0.0
    %3153 = vmatmul.mubr.f32.gmra.mrb[0].mxu0 %v2843
    %v3154 = vpop.f32.mrb[0].mxu0
    %v3155 = vadd.f32 %v3077, %v3154
    %v3156 = vpop.f32.mrb[0].mxu0
    %3157 = vmatprep.mubr.f32.mxu0 0.0
    %3158 = vmatmul.mubr.f32.gmra.mrb[0].mxu0 %v2846
    %v3159 = vpop.f32.mrb[0].mxu0
    %v3160 = vadd.f32 %v3077, %v3159
    %v3161 = vpop.f32.mrb[0].mxu0
    %3162 = vmatprep.mubr.f32.mxu0 0.0
    %3163 = vmatmul.mubr.f32.gmra.mrb[0].mxu0 %v2849
    %v3164 = vpop.f32.mrb[0].mxu0
    %v3165 = vadd.f32 %v3077, %v3164
    %v3166 = vpop.f32.mrb[0].mxu0
    %3167 = vmatprep.mubr.f32.mxu0 0.0
    %3168 = vmatmul.mubr.f32.gmra.mrb[0].mxu0 %v2852
    %v3169 = vpop.f32.mrb[0].mxu0
    %v3170 = vadd.f32 %v3077, %v3169
    %v3171 = vpop.f32.mrb[0].mxu0
    %3172 = vmatprep.mubr.f32.mxu0 0.0
    %3173 = vmatmul.mubr.f32.gmra.mrb[0].mxu0 %v2855
    %v3174 = vpop.f32.mrb[0].mxu0
    %v3175 = vadd.f32 %v3077, %v3174
    %v3176 = vpop.f32.mrb[0].mxu0
    %3177 = vmatprep.mubr.f32.mxu0 0.0
    %3178 = vmatmul.mubr.f32.gmra.mrb[0].mxu0 %v2858
    %v3179 = vpop.f32.mrb[0].mxu0
    %v3180 = vadd.f32 %v3077, %v3179
    %v3181 = vpop.f32.mrb[0].mxu0
    %3182 = vdwg.mxu0
    %v3183 = vmul.f32 %v2927, %v106
    %v3184 = vmul.f32 %v2932, %v107
    %v3185 = vmul.f32 %v2937, %v108
    %v3186 = vmul.f32 %v2942, %v109
    %v3187 = vmul.f32 %v2947, %v110
    %v3188 = vmul.f32 %v2952, %v111
    %v3189 = vmul.f32 %v2957, %v112
    %v3190 = vmul.f32 %v2962, %v113
    %v3191 = vmul.f32 %v2927, %v114
    %v3192 = vmul.f32 %v2932, %v115
    %v3193 = vmul.f32 %v2937, %v116
    %v3194 = vmul.f32 %v2942, %v117
    %v3195 = vmul.f32 %v2947, %v118
    %v3196 = vmul.f32 %v2952, %v119
    %v3197 = vmul.f32 %v2957, %v120
    %v3198 = vmul.f32 %v2962, %v121
    %v3199 = vmul.f32 %v2927, %v122
    %v3200 = vmul.f32 %v2932, %v123
    %v3201 = vmul.f32 %v2937, %v124
    %v3202 = vmul.f32 %v2942, %v125
    %v3203 = vmul.f32 %v2947, %v126
    %v3204 = vmul.f32 %v2952, %v127
    %v3205 = vmul.f32 %v2957, %v128
    %v3206 = vmul.f32 %v2962, %v129
    %v3207 = vmul.f32 %v2927, %v130
    %v3208 = vmul.f32 %v2932, %v131
    %v3209 = vmul.f32 %v2937, %v132
    %v3210 = vmul.f32 %v2942, %v133
    %v3211 = vmul.f32 %v2947, %v134
    %v3212 = vmul.f32 %v2952, %v135
    %v3213 = vmul.f32 %v2957, %v136
    %v3214 = vmul.f32 %v2962, %v137
    %v3215 = vmul.f32 %v2927, %v138
    %v3216 = vmul.f32 %v2932, %v139
    %v3217 = vmul.f32 %v2937, %v140
    %v3218 = vmul.f32 %v2942, %v141
    %v3219 = vmul.f32 %v2947, %v142
    %v3220 = vmul.f32 %v2952, %v143
    %v3221 = vmul.f32 %v2957, %v144
    %v3222 = vmul.f32 %v2962, %v145
    %v3223 = vmul.f32 %v2927, %v146
    %v3224 = vmul.f32 %v2932, %v147
    %v3225 = vmul.f32 %v2937, %v148
    %v3226 = vmul.f32 %v2942, %v149
    %v3227 = vmul.f32 %v2947, %v150
    %v3228 = vmul.f32 %v2952, %v151
    %v3229 = vmul.f32 %v2957, %v152
    %v3230 = vmul.f32 %v2962, %v153
    %v3231 = vmul.f32 %v2927, %v154
    %v3232 = vmul.f32 %v2932, %v155
    %v3233 = vmul.f32 %v2937, %v156
    %v3234 = vmul.f32 %v2942, %v157
    %v3235 = vmul.f32 %v2947, %v158
    %v3236 = vmul.f32 %v2952, %v159
    %v3237 = vmul.f32 %v2957, %v160
    %v3238 = vmul.f32 %v2962, %v161
    %v3239 = vmul.f32 %v2927, %v162
    %v3240 = vmul.f32 %v2932, %v163
    %v3241 = vmul.f32 %v2937, %v164
    %v3242 = vmul.f32 %v2942, %v165
    %v3243 = vmul.f32 %v2947, %v166
    %v3244 = vmul.f32 %v2952, %v167
    %v3245 = vmul.f32 %v2957, %v168
    %v3246 = vmul.f32 %v2962, %v169
    %v3248 = vsel %vm713, %v3183, 0
    %v3251 = vsel %vm713, %v3184, 0
    %v3254 = vsel %vm713, %v3185, 0
    %v3257 = vsel %vm713, %v3186, 0
    %v3260 = vsel %vm713, %v3187, 0
    %v3263 = vsel %vm713, %v3188, 0
    %v3266 = vsel %vm713, %v3189, 0
    %v3269 = vsel %vm713, %v3190, 0
    %v3272 = vsel %vm713, %v3191, 0
    %v3275 = vsel %vm713, %v3192, 0
    %v3278 = vsel %vm713, %v3193, 0
    %v3281 = vsel %vm713, %v3194, 0
    %v3284 = vsel %vm713, %v3195, 0
    %v3287 = vsel %vm713, %v3196, 0
    %v3290 = vsel %vm713, %v3197, 0
    %v3293 = vsel %vm713, %v3198, 0
    %v3296 = vsel %vm713, %v3199, 0
    %v3299 = vsel %vm713, %v3200, 0
    %v3302 = vsel %vm713, %v3201, 0
    %v3305 = vsel %vm713, %v3202, 0
    %v3308 = vsel %vm713, %v3203, 0
    %v3311 = vsel %vm713, %v3204, 0
    %v3314 = vsel %vm713, %v3205, 0
    %v3317 = vsel %vm713, %v3206, 0
    %v3320 = vsel %vm713, %v3207, 0
    %v3323 = vsel %vm713, %v3208, 0
    %v3326 = vsel %vm713, %v3209, 0
    %v3329 = vsel %vm713, %v3210, 0
    %v3332 = vsel %vm713, %v3211, 0
    %v3335 = vsel %vm713, %v3212, 0
    %v3338 = vsel %vm713, %v3213, 0
    %v3341 = vsel %vm713, %v3214, 0
    %v3344 = vsel %vm713, %v3215, 0
    %v3347 = vsel %vm713, %v3216, 0
    %v3350 = vsel %vm713, %v3217, 0
    %v3353 = vsel %vm713, %v3218, 0
    %v3356 = vsel %vm713, %v3219, 0
    %v3359 = vsel %vm713, %v3220, 0
    %v3362 = vsel %vm713, %v3221, 0
    %v3365 = vsel %vm713, %v3222, 0
    %v3368 = vsel %vm713, %v3223, 0
    %v3371 = vsel %vm713, %v3224, 0
    %v3374 = vsel %vm713, %v3225, 0
    %v3377 = vsel %vm713, %v3226, 0
    %v3380 = vsel %vm713, %v3227, 0
    %v3383 = vsel %vm713, %v3228, 0
    %v3386 = vsel %vm713, %v3229, 0
    %v3389 = vsel %vm713, %v3230, 0
    %v3392 = vsel %vm713, %v3231, 0
    %v3395 = vsel %vm713, %v3232, 0
    %v3398 = vsel %vm713, %v3233, 0
    %v3401 = vsel %vm713, %v3234, 0
    %v3404 = vsel %vm713, %v3235, 0
    %v3407 = vsel %vm713, %v3236, 0
    %v3410 = vsel %vm713, %v3237, 0
    %v3413 = vsel %vm713, %v3238, 0
    %v3416 = vsel %vm713, %v3239, 0
    %v3419 = vsel %vm713, %v3240, 0
    %v3422 = vsel %vm713, %v3241, 0
    %v3425 = vsel %vm713, %v3242, 0
    %v3428 = vsel %vm713, %v3243, 0
    %v3431 = vsel %vm713, %v3244, 0
    %v3434 = vsel %vm713, %v3245, 0
    %v3437 = vsel %vm713, %v3246, 0
    %v3440 = vsel %vm713, %v3036, 0
    %v3443 = vsel %vm713, %v3041, 0
    %v3446 = vsel %vm713, %v3046, 0
    %v3449 = vsel %vm713, %v3051, 0
    %v3452 = vsel %vm713, %v3056, 0
    %v3455 = vsel %vm713, %v3061, 0
    %v3458 = vsel %vm713, %v3066, 0
    %v3461 = vsel %vm713, %v3071, 0
    %3463 = vmatprep.subr.mxu0 0.0
    %3464 = vmatpush1.xpose.msra.mxu0 %v3440
    %3465 = vmatprep.subr.mxu0 0.0
    %3466 = vmatpush1.xpose.msra.mxu0 %v3443
    %3467 = vmatprep.subr.mxu0 0.0
    %3468 = vmatpush1.xpose.msra.mxu0 %v3446
    %3469 = vmatprep.subr.mxu0 0.0
    %3470 = vmatpush1.xpose.msra.mxu0 %v3449
    %3471 = vmatprep.subr.mxu0 0.0
    %3472 = vmatpush1.xpose.msra.mxu0 %v3452
    %3473 = vmatprep.subr.mxu0 0.0
    %3474 = vmatpush1.xpose.msra.mxu0 %v3455
    %3475 = vmatprep.subr.mxu0 0.0
    %3476 = vmatpush1.xpose.msra.mxu0 %v3458
    %3477 = vmatprep.subr.mxu0 0.0
    %3478 = vmatpush1.xpose.msra.mxu0 %v3461
    %3479 = vmatprep.subr.mxu0 0.0
    %3480 = vmatpush1.xpose.msra.mxu0 0.0
    %3481 = vmatprep.subr.mxu0 0.0
    %3482 = vmatpush1.xpose.msra.mxu0 0.0
    %3483 = vmatprep.subr.mxu0 0.0
    %3484 = vmatpush1.xpose.msra.mxu0 0.0
    %3485 = vmatprep.subr.mxu0 0.0
    %3486 = vmatpush1.xpose.msra.mxu0 0.0
    %3487 = vmatprep.subr.mxu0 0.0
    %3488 = vmatpush1.xpose.msra.mxu0 0.0
    %3489 = vmatprep.subr.mxu0 0.0
    %3490 = vmatpush1.xpose.msra.mxu0 0.0
    %3491 = vmatprep.subr.mxu0 0.0
    %3492 = vmatpush1.xpose.msra.mxu0 0.0
    %3493 = vmatprep.subr.mxu0 0.0
    %3494 = vmatpush1.xpose.msra.mxu0 0.0
    %3495 = vmatprep.subr.mxu0 0.0
    %3496 = vmatpush1.xpose.msra.mxu0 0.0
    %3497 = vmatprep.subr.mxu0 0.0
    %3498 = vmatpush1.xpose.msra.mxu0 0.0
    %3499 = vmatprep.subr.mxu0 0.0
    %3500 = vmatpush1.xpose.msra.mxu0 0.0
    %3501 = vmatprep.subr.mxu0 0.0
    %3502 = vmatpush1.xpose.msra.mxu0 0.0
    %3503 = vmatprep.subr.mxu0 0.0
    %3504 = vmatpush1.xpose.msra.mxu0 0.0
    %3505 = vmatprep.subr.mxu0 0.0
    %3506 = vmatpush1.xpose.msra.mxu0 0.0
    %3507 = vmatprep.subr.mxu0 0.0
    %3508 = vmatpush1.xpose.msra.mxu0 0.0
    %3509 = vmatprep.subr.mxu0 0.0
    %3510 = vmatpush1.xpose.msra.mxu0 0.0
    %3511 = vmatprep.subr.mxu0 0.0
    %3512 = vmatpush1.xpose.msra.mxu0 0.0
    %3513 = vmatprep.subr.mxu0 0.0
    %3514 = vmatpush1.xpose.msra.mxu0 0.0
    %3515 = vmatprep.subr.mxu0 0.0
    %3516 = vmatpush1.xpose.msra.mxu0 0.0
    %3517 = vmatprep.subr.mxu0 0.0
    %3518 = vmatpush1.xpose.msra.mxu0 0.0
    %3519 = vmatprep.subr.mxu0 0.0
    %3520 = vmatpush1.xpose.msra.mxu0 0.0
    %3521 = vmatprep.subr.mxu0 0.0
    %3522 = vmatpush1.xpose.msra.mxu0 0.0
    %3523 = vmatprep.subr.mxu0 0.0
    %3524 = vmatpush1.xpose.msra.mxu0 0.0
    %3525 = vmatprep.subr.mxu0 0.0
    %3526 = vmatpush1.xpose.msra.mxu0 0.0
    %3527 = vmatprep.mubr.f32.mxu0 0.0
    %3528 = vmatmul.mubr.f32.gmra.mrb[0].mxu0 %v3248
    %v3529 = vpop.f32.mrb[0].mxu0
    %v3530 = vadd.f32 %v323, %v3529
    %v3531 = vpop.f32.mrb[0].mxu0
    %3532 = vmatprep.mubr.f32.mxu0 0.0
    %3533 = vmatmul.mubr.f32.gmra.mrb[0].mxu0 %v3251
    %v3534 = vpop.f32.mrb[0].mxu0
    %v3535 = vadd.f32 %v324, %v3534
    %v3536 = vpop.f32.mrb[0].mxu0
    %3537 = vmatprep.mubr.f32.mxu0 0.0
    %3538 = vmatmul.mubr.f32.gmra.mrb[0].mxu0 %v3254
    %v3539 = vpop.f32.mrb[0].mxu0
    %v3540 = vadd.f32 %v325, %v3539
    %v3541 = vpop.f32.mrb[0].mxu0
    %3542 = vmatprep.mubr.f32.mxu0 0.0
    %3543 = vmatmul.mubr.f32.gmra.mrb[0].mxu0 %v3257
    %v3544 = vpop.f32.mrb[0].mxu0
    %v3545 = vadd.f32 %v326, %v3544
    %v3546 = vpop.f32.mrb[0].mxu0
    %3547 = vmatprep.mubr.f32.mxu0 0.0
    %3548 = vmatmul.mubr.f32.gmra.mrb[0].mxu0 %v3260
    %v3549 = vpop.f32.mrb[0].mxu0
    %v3550 = vadd.f32 %v327, %v3549
    %v3551 = vpop.f32.mrb[0].mxu0
    %3552 = vmatprep.mubr.f32.mxu0 0.0
    %3553 = vmatmul.mubr.f32.gmra.mrb[0].mxu0 %v3263
    %v3554 = vpop.f32.mrb[0].mxu0
    %v3555 = vadd.f32 %v328, %v3554
    %v3556 = vpop.f32.mrb[0].mxu0
    %3557 = vmatprep.mubr.f32.mxu0 0.0
    %3558 = vmatmul.mubr.f32.gmra.mrb[0].mxu0 %v3266
    %v3559 = vpop.f32.mrb[0].mxu0
    %v3560 = vadd.f32 %v329, %v3559
    %v3561 = vpop.f32.mrb[0].mxu0
    %3562 = vmatprep.mubr.f32.mxu0 0.0
    %3563 = vmatmul.mubr.f32.gmra.mrb[0].mxu0 %v3269
    %v3564 = vpop.f32.mrb[0].mxu0
    %v3565 = vadd.f32 %v330, %v3564
    %v3566 = vpop.f32.mrb[0].mxu0
    %3567 = vmatprep.mubr.f32.mxu0 0.0
    %3568 = vmatmul.mubr.f32.gmra.mrb[0].mxu0 %v3272
    %v3569 = vpop.f32.mrb[0].mxu0
    %v3570 = vadd.f32 %v331, %v3569
    %v3571 = vpop.f32.mrb[0].mxu0
    %3572 = vmatprep.mubr.f32.mxu0 0.0
    %3573 = vmatmul.mubr.f32.gmra.mrb[0].mxu0 %v3275
    %v3574 = vpop.f32.mrb[0].mxu0
    %v3575 = vadd.f32 %v332, %v3574
    %v3576 = vpop.f32.mrb[0].mxu0
    %3577 = vmatprep.mubr.f32.mxu0 0.0
    %3578 = vmatmul.mubr.f32.gmra.mrb[0].mxu0 %v3278
    %v3579 = vpop.f32.mrb[0].mxu0
    %v3580 = vadd.f32 %v333, %v3579
    %v3581 = vpop.f32.mrb[0].mxu0
    %3582 = vmatprep.mubr.f32.mxu0 0.0
    %3583 = vmatmul.mubr.f32.gmra.mrb[0].mxu0 %v3281
    %v3584 = vpop.f32.mrb[0].mxu0
    %v3585 = vadd.f32 %v334, %v3584
    %v3586 = vpop.f32.mrb[0].mxu0
    %3587 = vmatprep.mubr.f32.mxu0 0.0
    %3588 = vmatmul.mubr.f32.gmra.mrb[0].mxu0 %v3284
    %v3589 = vpop.f32.mrb[0].mxu0
    %v3590 = vadd.f32 %v335, %v3589
    %v3591 = vpop.f32.mrb[0].mxu0
    %3592 = vmatprep.mubr.f32.mxu0 0.0
    %3593 = vmatmul.mubr.f32.gmra.mrb[0].mxu0 %v3287
    %v3594 = vpop.f32.mrb[0].mxu0
    %v3595 = vadd.f32 %v336, %v3594
    %v3596 = vpop.f32.mrb[0].mxu0
    %3597 = vmatprep.mubr.f32.mxu0 0.0
    %3598 = vmatmul.mubr.f32.gmra.mrb[0].mxu0 %v3290
    %v3599 = vpop.f32.mrb[0].mxu0
    %v3600 = vadd.f32 %v337, %v3599
    %v3601 = vpop.f32.mrb[0].mxu0
    %3602 = vmatprep.mubr.f32.mxu0 0.0
    %3603 = vmatmul.mubr.f32.gmra.mrb[0].mxu0 %v3293
    %v3604 = vpop.f32.mrb[0].mxu0
    %v3605 = vadd.f32 %v338, %v3604
    %v3606 = vpop.f32.mrb[0].mxu0
    %3607 = vmatprep.mubr.f32.mxu0 0.0
    %3608 = vmatmul.mubr.f32.gmra.mrb[0].mxu0 %v3296
    %v3609 = vpop.f32.mrb[0].mxu0
    %v3610 = vadd.f32 %v339, %v3609
    %v3611 = vpop.f32.mrb[0].mxu0
    %3612 = vmatprep.mubr.f32.mxu0 0.0
    %3613 = vmatmul.mubr.f32.gmra.mrb[0].mxu0 %v3299
    %v3614 = vpop.f32.mrb[0].mxu0
    %v3615 = vadd.f32 %v340, %v3614
    %v3616 = vpop.f32.mrb[0].mxu0
    %3617 = vmatprep.mubr.f32.mxu0 0.0
    %3618 = vmatmul.mubr.f32.gmra.mrb[0].mxu0 %v3302
    %v3619 = vpop.f32.mrb[0].mxu0
    %v3620 = vadd.f32 %v341, %v3619
    %v3621 = vpop.f32.mrb[0].mxu0
    %3622 = vmatprep.mubr.f32.mxu0 0.0
    %3623 = vmatmul.mubr.f32.gmra.mrb[0].mxu0 %v3305
    %v3624 = vpop.f32.mrb[0].mxu0
    %v3625 = vadd.f32 %v342, %v3624
    %v3626 = vpop.f32.mrb[0].mxu0
    %3627 = vmatprep.mubr.f32.mxu0 0.0
    %3628 = vmatmul.mubr.f32.gmra.mrb[0].mxu0 %v3308
    %v3629 = vpop.f32.mrb[0].mxu0
    %v3630 = vadd.f32 %v343, %v3629
    %v3631 = vpop.f32.mrb[0].mxu0
    %3632 = vmatprep.mubr.f32.mxu0 0.0
    %3633 = vmatmul.mubr.f32.gmra.mrb[0].mxu0 %v3311
    %v3634 = vpop.f32.mrb[0].mxu0
    %v3635 = vadd.f32 %v344, %v3634
    %v3636 = vpop.f32.mrb[0].mxu0
    %3637 = vmatprep.mubr.f32.mxu0 0.0
    %3638 = vmatmul.mubr.f32.gmra.mrb[0].mxu0 %v3314
    %v3639 = vpop.f32.mrb[0].mxu0
    %v3640 = vadd.f32 %v345, %v3639
    %v3641 = vpop.f32.mrb[0].mxu0
    %3642 = vmatprep.mubr.f32.mxu0 0.0
    %3643 = vmatmul.mubr.f32.gmra.mrb[0].mxu0 %v3317
    %v3644 = vpop.f32.mrb[0].mxu0
    %v3645 = vadd.f32 %v346, %v3644
    %v3646 = vpop.f32.mrb[0].mxu0
    %3647 = vmatprep.mubr.f32.mxu0 0.0
    %3648 = vmatmul.mubr.f32.gmra.mrb[0].mxu0 %v3320
    %v3649 = vpop.f32.mrb[0].mxu0
    %v3650 = vadd.f32 %v347, %v3649
    %v3651 = vpop.f32.mrb[0].mxu0
    %3652 = vmatprep.mubr.f32.mxu0 0.0
    %3653 = vmatmul.mubr.f32.gmra.mrb[0].mxu0 %v3323
    %v3654 = vpop.f32.mrb[0].mxu0
    %v3655 = vadd.f32 %v348, %v3654
    %v3656 = vpop.f32.mrb[0].mxu0
    %3657 = vmatprep.mubr.f32.mxu0 0.0
    %3658 = vmatmul.mubr.f32.gmra.mrb[0].mxu0 %v3326
    %v3659 = vpop.f32.mrb[0].mxu0
    %v3660 = vadd.f32 %v349, %v3659
    %v3661 = vpop.f32.mrb[0].mxu0
    %3662 = vmatprep.mubr.f32.mxu0 0.0
    %3663 = vmatmul.mubr.f32.gmra.mrb[0].mxu0 %v3329
    %v3664 = vpop.f32.mrb[0].mxu0
    %v3665 = vadd.f32 %v350, %v3664
    %v3666 = vpop.f32.mrb[0].mxu0
    %3667 = vmatprep.mubr.f32.mxu0 0.0
    %3668 = vmatmul.mubr.f32.gmra.mrb[0].mxu0 %v3332
    %v3669 = vpop.f32.mrb[0].mxu0
    %v3670 = vadd.f32 %v351, %v3669
    %v3671 = vpop.f32.mrb[0].mxu0
    %3672 = vmatprep.mubr.f32.mxu0 0.0
    %3673 = vmatmul.mubr.f32.gmra.mrb[0].mxu0 %v3335
    %v3674 = vpop.f32.mrb[0].mxu0
    %v3675 = vadd.f32 %v352, %v3674
    %v3676 = vpop.f32.mrb[0].mxu0
    %3677 = vmatprep.mubr.f32.mxu0 0.0
    %3678 = vmatmul.mubr.f32.gmra.mrb[0].mxu0 %v3338
    %v3679 = vpop.f32.mrb[0].mxu0
    %v3680 = vadd.f32 %v353, %v3679
    %v3681 = vpop.f32.mrb[0].mxu0
    %3682 = vmatprep.mubr.f32.mxu0 0.0
    %3683 = vmatmul.mubr.f32.gmra.mrb[0].mxu0 %v3341
    %v3684 = vpop.f32.mrb[0].mxu0
    %v3685 = vadd.f32 %v354, %v3684
    %v3686 = vpop.f32.mrb[0].mxu0
    %3687 = vmatprep.mubr.f32.mxu0 0.0
    %3688 = vmatmul.mubr.f32.gmra.mrb[0].mxu0 %v3344
    %v3689 = vpop.f32.mrb[0].mxu0
    %v3690 = vadd.f32 %v355, %v3689
    %v3691 = vpop.f32.mrb[0].mxu0
    %3692 = vmatprep.mubr.f32.mxu0 0.0
    %3693 = vmatmul.mubr.f32.gmra.mrb[0].mxu0 %v3347
    %v3694 = vpop.f32.mrb[0].mxu0
    %v3695 = vadd.f32 %v356, %v3694
    %v3696 = vpop.f32.mrb[0].mxu0
    %3697 = vmatprep.mubr.f32.mxu0 0.0
    %3698 = vmatmul.mubr.f32.gmra.mrb[0].mxu0 %v3350
    %v3699 = vpop.f32.mrb[0].mxu0
    %v3700 = vadd.f32 %v357, %v3699
    %v3701 = vpop.f32.mrb[0].mxu0
    %3702 = vmatprep.mubr.f32.mxu0 0.0
    %3703 = vmatmul.mubr.f32.gmra.mrb[0].mxu0 %v3353
    %v3704 = vpop.f32.mrb[0].mxu0
    %v3705 = vadd.f32 %v358, %v3704
    %v3706 = vpop.f32.mrb[0].mxu0
    %3707 = vmatprep.mubr.f32.mxu0 0.0
    %3708 = vmatmul.mubr.f32.gmra.mrb[0].mxu0 %v3356
    %v3709 = vpop.f32.mrb[0].mxu0
    %v3710 = vadd.f32 %v359, %v3709
    %v3711 = vpop.f32.mrb[0].mxu0
    %3712 = vmatprep.mubr.f32.mxu0 0.0
    %3713 = vmatmul.mubr.f32.gmra.mrb[0].mxu0 %v3359
    %v3714 = vpop.f32.mrb[0].mxu0
    %v3715 = vadd.f32 %v360, %v3714
    %v3716 = vpop.f32.mrb[0].mxu0
    %3717 = vmatprep.mubr.f32.mxu0 0.0
    %3718 = vmatmul.mubr.f32.gmra.mrb[0].mxu0 %v3362
    %v3719 = vpop.f32.mrb[0].mxu0
    %v3720 = vadd.f32 %v361, %v3719
    %v3721 = vpop.f32.mrb[0].mxu0
    %3722 = vmatprep.mubr.f32.mxu0 0.0
    %3723 = vmatmul.mubr.f32.gmra.mrb[0].mxu0 %v3365
    %v3724 = vpop.f32.mrb[0].mxu0
    %v3725 = vadd.f32 %v362, %v3724
    %v3726 = vpop.f32.mrb[0].mxu0
    %3727 = vmatprep.mubr.f32.mxu0 0.0
    %3728 = vmatmul.mubr.f32.gmra.mrb[0].mxu0 %v3368
    %v3729 = vpop.f32.mrb[0].mxu0
    %v3730 = vadd.f32 %v363, %v3729
    %v3731 = vpop.f32.mrb[0].mxu0
    %3732 = vmatprep.mubr.f32.mxu0 0.0
    %3733 = vmatmul.mubr.f32.gmra.mrb[0].mxu0 %v3371
    %v3734 = vpop.f32.mrb[0].mxu0
    %v3735 = vadd.f32 %v364, %v3734
    %v3736 = vpop.f32.mrb[0].mxu0
    %3737 = vmatprep.mubr.f32.mxu0 0.0
    %3738 = vmatmul.mubr.f32.gmra.mrb[0].mxu0 %v3374
    %v3739 = vpop.f32.mrb[0].mxu0
    %v3740 = vadd.f32 %v365, %v3739
    %v3741 = vpop.f32.mrb[0].mxu0
    %3742 = vmatprep.mubr.f32.mxu0 0.0
    %3743 = vmatmul.mubr.f32.gmra.mrb[0].mxu0 %v3377
    %v3744 = vpop.f32.mrb[0].mxu0
    %v3745 = vadd.f32 %v366, %v3744
    %v3746 = vpop.f32.mrb[0].mxu0
    %3747 = vmatprep.mubr.f32.mxu0 0.0
    %3748 = vmatmul.mubr.f32.gmra.mrb[0].mxu0 %v3380
    %v3749 = vpop.f32.mrb[0].mxu0
    %v3750 = vadd.f32 %v367, %v3749
    %v3751 = vpop.f32.mrb[0].mxu0
    %3752 = vmatprep.mubr.f32.mxu0 0.0
    %3753 = vmatmul.mubr.f32.gmra.mrb[0].mxu0 %v3383
    %v3754 = vpop.f32.mrb[0].mxu0
    %v3755 = vadd.f32 %v368, %v3754
    %v3756 = vpop.f32.mrb[0].mxu0
    %3757 = vmatprep.mubr.f32.mxu0 0.0
    %3758 = vmatmul.mubr.f32.gmra.mrb[0].mxu0 %v3386
    %v3759 = vpop.f32.mrb[0].mxu0
    %v3760 = vadd.f32 %v369, %v3759
    %v3761 = vpop.f32.mrb[0].mxu0
    %3762 = vmatprep.mubr.f32.mxu0 0.0
    %3763 = vmatmul.mubr.f32.gmra.mrb[0].mxu0 %v3389
    %v3764 = vpop.f32.mrb[0].mxu0
    %v3765 = vadd.f32 %v370, %v3764
    %v3766 = vpop.f32.mrb[0].mxu0
    %3767 = vmatprep.mubr.f32.mxu0 0.0
    %3768 = vmatmul.mubr.f32.gmra.mrb[0].mxu0 %v3392
    %v3769 = vpop.f32.mrb[0].mxu0
    %v3770 = vadd.f32 %v371, %v3769
    %v3771 = vpop.f32.mrb[0].mxu0
    %3772 = vmatprep.mubr.f32.mxu0 0.0
    %3773 = vmatmul.mubr.f32.gmra.mrb[0].mxu0 %v3395
    %v3774 = vpop.f32.mrb[0].mxu0
    %v3775 = vadd.f32 %v372, %v3774
    %v3776 = vpop.f32.mrb[0].mxu0
    %3777 = vmatprep.mubr.f32.mxu0 0.0
    %3778 = vmatmul.mubr.f32.gmra.mrb[0].mxu0 %v3398
    %v3779 = vpop.f32.mrb[0].mxu0
    %v3780 = vadd.f32 %v373, %v3779
    %v3781 = vpop.f32.mrb[0].mxu0
    %3782 = vmatprep.mubr.f32.mxu0 0.0
    %3783 = vmatmul.mubr.f32.gmra.mrb[0].mxu0 %v3401
    %v3784 = vpop.f32.mrb[0].mxu0
    %v3785 = vadd.f32 %v374, %v3784
    %v3786 = vpop.f32.mrb[0].mxu0
    %3787 = vmatprep.mubr.f32.mxu0 0.0
    %3788 = vmatmul.mubr.f32.gmra.mrb[0].mxu0 %v3404
    %v3789 = vpop.f32.mrb[0].mxu0
    %v3790 = vadd.f32 %v375, %v3789
    %v3791 = vpop.f32.mrb[0].mxu0
    %3792 = vmatprep.mubr.f32.mxu0 0.0
    %3793 = vmatmul.mubr.f32.gmra.mrb[0].mxu0 %v3407
    %v3794 = vpop.f32.mrb[0].mxu0
    %v3795 = vadd.f32 %v376, %v3794
    %v3796 = vpop.f32.mrb[0].mxu0
    %3797 = vmatprep.mubr.f32.mxu0 0.0
    %3798 = vmatmul.mubr.f32.gmra.mrb[0].mxu0 %v3410
    %v3799 = vpop.f32.mrb[0].mxu0
    %v3800 = vadd.f32 %v377, %v3799
    %v3801 = vpop.f32.mrb[0].mxu0
    %3802 = vmatprep.mubr.f32.mxu0 0.0
    %3803 = vmatmul.mubr.f32.gmra.mrb[0].mxu0 %v3413
    %v3804 = vpop.f32.mrb[0].mxu0
    %v3805 = vadd.f32 %v378, %v3804
    %v3806 = vpop.f32.mrb[0].mxu0
    %3807 = vmatprep.mubr.f32.mxu0 0.0
    %3808 = vmatmul.mubr.f32.gmra.mrb[0].mxu0 %v3416
    %v3809 = vpop.f32.mrb[0].mxu0
    %v3810 = vadd.f32 %v379, %v3809
    %v3811 = vpop.f32.mrb[0].mxu0
    %3812 = vmatprep.mubr.f32.mxu0 0.0
    %3813 = vmatmul.mubr.f32.gmra.mrb[0].mxu0 %v3419
    %v3814 = vpop.f32.mrb[0].mxu0
    %v3815 = vadd.f32 %v380, %v3814
    %v3816 = vpop.f32.mrb[0].mxu0
    %3817 = vmatprep.mubr.f32.mxu0 0.0
    %3818 = vmatmul.mubr.f32.gmra.mrb[0].mxu0 %v3422
    %v3819 = vpop.f32.mrb[0].mxu0
    %v3820 = vadd.f32 %v381, %v3819
    %v3821 = vpop.f32.mrb[0].mxu0
    %3822 = vmatprep.mubr.f32.mxu0 0.0
    %3823 = vmatmul.mubr.f32.gmra.mrb[0].mxu0 %v3425
    %v3824 = vpop.f32.mrb[0].mxu0
    %v3825 = vadd.f32 %v382, %v3824
    %v3826 = vpop.f32.mrb[0].mxu0
    %3827 = vmatprep.mubr.f32.mxu0 0.0
    %3828 = vmatmul.mubr.f32.gmra.mrb[0].mxu0 %v3428
    %v3829 = vpop.f32.mrb[0].mxu0
    %v3830 = vadd.f32 %v383, %v3829
    %v3831 = vpop.f32.mrb[0].mxu0
    %3832 = vmatprep.mubr.f32.mxu0 0.0
    %3833 = vmatmul.mubr.f32.gmra.mrb[0].mxu0 %v3431
    %v3834 = vpop.f32.mrb[0].mxu0
    %v3835 = vadd.f32 %v384, %v3834
    %v3836 = vpop.f32.mrb[0].mxu0
    %3837 = vmatprep.mubr.f32.mxu0 0.0
    %3838 = vmatmul.mubr.f32.gmra.mrb[0].mxu0 %v3434
    %v3839 = vpop.f32.mrb[0].mxu0
    %v3840 = vadd.f32 %v385, %v3839
    %v3841 = vpop.f32.mrb[0].mxu0
    %3842 = vmatprep.mubr.f32.mxu0 0.0
    %3843 = vmatmul.mubr.f32.gmra.mrb[0].mxu0 %v3437
    %v3844 = vpop.f32.mrb[0].mxu0
    %v3845 = vadd.f32 %v386, %v3844
    %v3846 = vpop.f32.mrb[0].mxu0
    %3847 = vdwg.mxu0
    %v3848 = vsel %vm2678, %v3530, -inf
    %3849 = vmax.xlane.f32.xlu0 %v3848
    %v3850 = vpop.xlane.xlu0 %3849
    %v3851 = vsel %vm2678, %v3535, -inf
    %3852 = vmax.xlane.f32.xlu0 %v3851
    %v3853 = vpop.xlane.xlu0 %3852
    %v3854 = vsel %vm2678, %v3540, -inf
    %3855 = vmax.xlane.f32.xlu0 %v3854
    %v3856 = vpop.xlane.xlu0 %3855
    %v3857 = vsel %vm2678, %v3545, -inf
    %3858 = vmax.xlane.f32.xlu0 %v3857
    %v3859 = vpop.xlane.xlu0 %3858
    %v3860 = vsel %vm2678, %v3550, -inf
    %3861 = vmax.xlane.f32.xlu0 %v3860
    %v3862 = vpop.xlane.xlu0 %3861
    %v3863 = vsel %vm2678, %v3555, -inf
    %3864 = vmax.xlane.f32.xlu0 %v3863
    %v3865 = vpop.xlane.xlu0 %3864
    %v3866 = vsel %vm2678, %v3560, -inf
    %3867 = vmax.xlane.f32.xlu0 %v3866
    %v3868 = vpop.xlane.xlu0 %3867
    %v3869 = vsel %vm2678, %v3565, -inf
    %3870 = vmax.xlane.f32.xlu0 %v3869
    %v3871 = vpop.xlane.xlu0 %3870
    %v3872 = vsel %vm2678, %v3570, -inf
    %3873 = vmax.xlane.f32.xlu0 %v3872
    %v3874 = vpop.xlane.xlu0 %3873
    %v3875 = vsel %vm2678, %v3575, -inf
    %3876 = vmax.xlane.f32.xlu0 %v3875
    %v3877 = vpop.xlane.xlu0 %3876
    %v3878 = vsel %vm2678, %v3580, -inf
    %3879 = vmax.xlane.f32.xlu0 %v3878
    %v3880 = vpop.xlane.xlu0 %3879
    %v3881 = vsel %vm2678, %v3585, -inf
    %3882 = vmax.xlane.f32.xlu0 %v3881
    %v3883 = vpop.xlane.xlu0 %3882
    %v3884 = vsel %vm2678, %v3590, -inf
    %3885 = vmax.xlane.f32.xlu0 %v3884
    %v3886 = vpop.xlane.xlu0 %3885
    %v3887 = vsel %vm2678, %v3595, -inf
    %3888 = vmax.xlane.f32.xlu0 %v3887
    %v3889 = vpop.xlane.xlu0 %3888
    %v3890 = vsel %vm2678, %v3600, -inf
    %3891 = vmax.xlane.f32.xlu0 %v3890
    %v3892 = vpop.xlane.xlu0 %3891
    %v3893 = vsel %vm2678, %v3605, -inf
    %3894 = vmax.xlane.f32.xlu0 %v3893
    %v3895 = vpop.xlane.xlu0 %3894
    %v3896 = vsel %vm2678, %v3610, -inf
    %3897 = vmax.xlane.f32.xlu0 %v3896
    %v3898 = vpop.xlane.xlu0 %3897
    %v3899 = vsel %vm2678, %v3615, -inf
    %3900 = vmax.xlane.f32.xlu0 %v3899
    %v3901 = vpop.xlane.xlu0 %3900
    %v3902 = vsel %vm2678, %v3620, -inf
    %3903 = vmax.xlane.f32.xlu0 %v3902
    %v3904 = vpop.xlane.xlu0 %3903
    %v3905 = vsel %vm2678, %v3625, -inf
    %3906 = vmax.xlane.f32.xlu0 %v3905
    %v3907 = vpop.xlane.xlu0 %3906
    %v3908 = vsel %vm2678, %v3630, -inf
    %3909 = vmax.xlane.f32.xlu0 %v3908
    %v3910 = vpop.xlane.xlu0 %3909
    %v3911 = vsel %vm2678, %v3635, -inf
    %3912 = vmax.xlane.f32.xlu0 %v3911
    %v3913 = vpop.xlane.xlu0 %3912
    %v3914 = vsel %vm2678, %v3640, -inf
    %3915 = vmax.xlane.f32.xlu0 %v3914
    %v3916 = vpop.xlane.xlu0 %3915
    %v3917 = vsel %vm2678, %v3645, -inf
    %3918 = vmax.xlane.f32.xlu0 %v3917
    %v3919 = vpop.xlane.xlu0 %3918
    %v3920 = vsel %vm2678, %v3650, -inf
    %3921 = vmax.xlane.f32.xlu0 %v3920
    %v3922 = vpop.xlane.xlu0 %3921
    %v3923 = vsel %vm2678, %v3655, -inf
    %3924 = vmax.xlane.f32.xlu0 %v3923
    %v3925 = vpop.xlane.xlu0 %3924
    %v3926 = vsel %vm2678, %v3660, -inf
    %3927 = vmax.xlane.f32.xlu0 %v3926
    %v3928 = vpop.xlane.xlu0 %3927
    %v3929 = vsel %vm2678, %v3665, -inf
    %3930 = vmax.xlane.f32.xlu0 %v3929
    %v3931 = vpop.xlane.xlu0 %3930
    %v3932 = vsel %vm2678, %v3670, -inf
    %3933 = vmax.xlane.f32.xlu0 %v3932
    %v3934 = vpop.xlane.xlu0 %3933
    %v3935 = vsel %vm2678, %v3675, -inf
    %3936 = vmax.xlane.f32.xlu0 %v3935
    %v3937 = vpop.xlane.xlu0 %3936
    %v3938 = vsel %vm2678, %v3680, -inf
    %3939 = vmax.xlane.f32.xlu0 %v3938
    %v3940 = vpop.xlane.xlu0 %3939
    %v3941 = vsel %vm2678, %v3685, -inf
    %3942 = vmax.xlane.f32.xlu0 %v3941
    %v3943 = vpop.xlane.xlu0 %3942
    %v3944 = vsel %vm2678, %v3690, -inf
    %3945 = vmax.xlane.f32.xlu0 %v3944
    %v3946 = vpop.xlane.xlu0 %3945
    %v3947 = vsel %vm2678, %v3695, -inf
    %3948 = vmax.xlane.f32.xlu0 %v3947
    %v3949 = vpop.xlane.xlu0 %3948
    %v3950 = vsel %vm2678, %v3700, -inf
    %3951 = vmax.xlane.f32.xlu0 %v3950
    %v3952 = vpop.xlane.xlu0 %3951
    %v3953 = vsel %vm2678, %v3705, -inf
    %3954 = vmax.xlane.f32.xlu0 %v3953
    %v3955 = vpop.xlane.xlu0 %3954
    %v3956 = vsel %vm2678, %v3710, -inf
    %3957 = vmax.xlane.f32.xlu0 %v3956
    %v3958 = vpop.xlane.xlu0 %3957
    %v3959 = vsel %vm2678, %v3715, -inf
    %3960 = vmax.xlane.f32.xlu0 %v3959
    %v3961 = vpop.xlane.xlu0 %3960
    %v3962 = vsel %vm2678, %v3720, -inf
    %3963 = vmax.xlane.f32.xlu0 %v3962
    %v3964 = vpop.xlane.xlu0 %3963
    %v3965 = vsel %vm2678, %v3725, -inf
    %3966 = vmax.xlane.f32.xlu0 %v3965
    %v3967 = vpop.xlane.xlu0 %3966
    %v3968 = vsel %vm2678, %v3730, -inf
    %3969 = vmax.xlane.f32.xlu0 %v3968
    %v3970 = vpop.xlane.xlu0 %3969
    %v3971 = vsel %vm2678, %v3735, -inf
    %3972 = vmax.xlane.f32.xlu0 %v3971
    %v3973 = vpop.xlane.xlu0 %3972
    %v3974 = vsel %vm2678, %v3740, -inf
    %3975 = vmax.xlane.f32.xlu0 %v3974
    %v3976 = vpop.xlane.xlu0 %3975
    %v3977 = vsel %vm2678, %v3745, -inf
    %3978 = vmax.xlane.f32.xlu0 %v3977
    %v3979 = vpop.xlane.xlu0 %3978
    %v3980 = vsel %vm2678, %v3750, -inf
    %3981 = vmax.xlane.f32.xlu0 %v3980
    %v3982 = vpop.xlane.xlu0 %3981
    %v3983 = vsel %vm2678, %v3755, -inf
    %3984 = vmax.xlane.f32.xlu0 %v3983
    %v3985 = vpop.xlane.xlu0 %3984
    %v3986 = vsel %vm2678, %v3760, -inf
    %3987 = vmax.xlane.f32.xlu0 %v3986
    %v3988 = vpop.xlane.xlu0 %3987
    %v3989 = vsel %vm2678, %v3765, -inf
    %3990 = vmax.xlane.f32.xlu0 %v3989
    %v3991 = vpop.xlane.xlu0 %3990
    %v3992 = vsel %vm2678, %v3770, -inf
    %3993 = vmax.xlane.f32.xlu0 %v3992
    %v3994 = vpop.xlane.xlu0 %3993
    %v3995 = vsel %vm2678, %v3775, -inf
    %3996 = vmax.xlane.f32.xlu0 %v3995
    %v3997 = vpop.xlane.xlu0 %3996
    %v3998 = vsel %vm2678, %v3780, -inf
    %3999 = vmax.xlane.f32.xlu0 %v3998
    %v4000 = vpop.xlane.xlu0 %3999
    %v4001 = vsel %vm2678, %v3785, -inf
    %4002 = vmax.xlane.f32.xlu0 %v4001
    %v4003 = vpop.xlane.xlu0 %4002
    %v4004 = vsel %vm2678, %v3790, -inf
    %4005 = vmax.xlane.f32.xlu0 %v4004
    %v4006 = vpop.xlane.xlu0 %4005
    %v4007 = vsel %vm2678, %v3795, -inf
    %4008 = vmax.xlane.f32.xlu0 %v4007
    %v4009 = vpop.xlane.xlu0 %4008
    %v4010 = vsel %vm2678, %v3800, -inf
    %4011 = vmax.xlane.f32.xlu0 %v4010
    %v4012 = vpop.xlane.xlu0 %4011
    %v4013 = vsel %vm2678, %v3805, -inf
    %4014 = vmax.xlane.f32.xlu0 %v4013
    %v4015 = vpop.xlane.xlu0 %4014
    %v4016 = vsel %vm2678, %v3810, -inf
    %4017 = vmax.xlane.f32.xlu0 %v4016
    %v4018 = vpop.xlane.xlu0 %4017
    %v4019 = vsel %vm2678, %v3815, -inf
    %4020 = vmax.xlane.f32.xlu0 %v4019
    %v4021 = vpop.xlane.xlu0 %4020
    %v4022 = vsel %vm2678, %v3820, -inf
    %4023 = vmax.xlane.f32.xlu0 %v4022
    %v4024 = vpop.xlane.xlu0 %4023
    %v4025 = vsel %vm2678, %v3825, -inf
    %4026 = vmax.xlane.f32.xlu0 %v4025
    %v4027 = vpop.xlane.xlu0 %4026
    %v4028 = vsel %vm2678, %v3830, -inf
    %4029 = vmax.xlane.f32.xlu0 %v4028
    %v4030 = vpop.xlane.xlu0 %4029
    %v4031 = vsel %vm2678, %v3835, -inf
    %4032 = vmax.xlane.f32.xlu0 %v4031
    %v4033 = vpop.xlane.xlu0 %4032
    %v4034 = vsel %vm2678, %v3840, -inf
    %4035 = vmax.xlane.f32.xlu0 %v4034
    %v4036 = vpop.xlane.xlu0 %4035
    %v4037 = vsel %vm2678, %v3845, -inf
    %4038 = vmax.xlane.f32.xlu0 %v4037
    %v4039 = vpop.xlane.xlu0 %4038
    %v4040 = vsub.f32 %v3530, %v3850
    %v4041 = vsub.f32 %v3535, %v3853
    %v4042 = vsub.f32 %v3540, %v3856
    %v4043 = vsub.f32 %v3545, %v3859
    %v4044 = vsub.f32 %v3550, %v3862
    %v4045 = vsub.f32 %v3555, %v3865
    %v4046 = vsub.f32 %v3560, %v3868
    %v4047 = vsub.f32 %v3565, %v3871
    %v4048 = vsub.f32 %v3570, %v3874
    %v4049 = vsub.f32 %v3575, %v3877
    %v4050 = vsub.f32 %v3580, %v3880
    %v4051 = vsub.f32 %v3585, %v3883
    %v4052 = vsub.f32 %v3590, %v3886
    %v4053 = vsub.f32 %v3595, %v3889
    %v4054 = vsub.f32 %v3600, %v3892
    %v4055 = vsub.f32 %v3605, %v3895
    %v4056 = vsub.f32 %v3610, %v3898
    %v4057 = vsub.f32 %v3615, %v3901
    %v4058 = vsub.f32 %v3620, %v3904
    %v4059 = vsub.f32 %v3625, %v3907
    %v4060 = vsub.f32 %v3630, %v3910
    %v4061 = vsub.f32 %v3635, %v3913
    %v4062 = vsub.f32 %v3640, %v3916
    %v4063 = vsub.f32 %v3645, %v3919
    %v4064 = vsub.f32 %v3650, %v3922
    %v4065 = vsub.f32 %v3655, %v3925
    %v4066 = vsub.f32 %v3660, %v3928
    %v4067 = vsub.f32 %v3665, %v3931
    %v4068 = vsub.f32 %v3670, %v3934
    %v4069 = vsub.f32 %v3675, %v3937
    %v4070 = vsub.f32 %v3680, %v3940
    %v4071 = vsub.f32 %v3685, %v3943
    %v4072 = vsub.f32 %v3690, %v3946
    %v4073 = vsub.f32 %v3695, %v3949
    %v4074 = vsub.f32 %v3700, %v3952
    %v4075 = vsub.f32 %v3705, %v3955
    %v4076 = vsub.f32 %v3710, %v3958
    %v4077 = vsub.f32 %v3715, %v3961
    %v4078 = vsub.f32 %v3720, %v3964
    %v4079 = vsub.f32 %v3725, %v3967
    %v4080 = vsub.f32 %v3730, %v3970
    %v4081 = vsub.f32 %v3735, %v3973
    %v4082 = vsub.f32 %v3740, %v3976
    %v4083 = vsub.f32 %v3745, %v3979
    %v4084 = vsub.f32 %v3750, %v3982
    %v4085 = vsub.f32 %v3755, %v3985
    %v4086 = vsub.f32 %v3760, %v3988
    %v4087 = vsub.f32 %v3765, %v3991
    %v4088 = vsub.f32 %v3770, %v3994
    %v4089 = vsub.f32 %v3775, %v3997
    %v4090 = vsub.f32 %v3780, %v4000
    %v4091 = vsub.f32 %v3785, %v4003
    %v4092 = vsub.f32 %v3790, %v4006
    %v4093 = vsub.f32 %v3795, %v4009
    %v4094 = vsub.f32 %v3800, %v4012
    %v4095 = vsub.f32 %v3805, %v4015
    %v4096 = vsub.f32 %v3810, %v4018
    %v4097 = vsub.f32 %v3815, %v4021
    %v4098 = vsub.f32 %v3820, %v4024
    %v4099 = vsub.f32 %v3825, %v4027
    %v4100 = vsub.f32 %v3830, %v4030
    %v4101 = vsub.f32 %v3835, %v4033
    %v4102 = vsub.f32 %v3840, %v4036
    %v4103 = vsub.f32 %v3845, %v4039
    %v4104 = vmul.f32 %v4040, 1.442695
    %v4105 = vpow.pop %v4104
    %v4106 = vmul.f32 %v4041, 1.442695
    %v4107 = vpow.pop %v4106
    %v4108 = vmul.f32 %v4042, 1.442695
    %v4109 = vpow.pop %v4108
    %v4110 = vmul.f32 %v4043, 1.442695
    %v4111 = vpow.pop %v4110
    %v4112 = vmul.f32 %v4044, 1.442695
    %v4113 = vpow.pop %v4112
    %v4114 = vmul.f32 %v4045, 1.442695
    %v4115 = vpow.pop %v4114
    %v4116 = vmul.f32 %v4046, 1.442695
    %v4117 = vpow.pop %v4116
    %v4118 = vmul.f32 %v4047, 1.442695
    %v4119 = vpow.pop %v4118
    %v4120 = vmul.f32 %v4048, 1.442695
    %v4121 = vpow.pop %v4120
    %v4122 = vmul.f32 %v4049, 1.442695
    %v4123 = vpow.pop %v4122
    %v4124 = vmul.f32 %v4050, 1.442695
    %v4125 = vpow.pop %v4124
    %v4126 = vmul.f32 %v4051, 1.442695
    %v4127 = vpow.pop %v4126
    %v4128 = vmul.f32 %v4052, 1.442695
    %v4129 = vpow.pop %v4128
    %v4130 = vmul.f32 %v4053, 1.442695
    %v4131 = vpow.pop %v4130
    %v4132 = vmul.f32 %v4054, 1.442695
    %v4133 = vpow.pop %v4132
    %v4134 = vmul.f32 %v4055, 1.442695
    %v4135 = vpow.pop %v4134
    %v4136 = vmul.f32 %v4056, 1.442695
    %v4137 = vpow.pop %v4136
    %v4138 = vmul.f32 %v4057, 1.442695
    %v4139 = vpow.pop %v4138
    %v4140 = vmul.f32 %v4058, 1.442695
    %v4141 = vpow.pop %v4140
    %v4142 = vmul.f32 %v4059, 1.442695
    %v4143 = vpow.pop %v4142
    %v4144 = vmul.f32 %v4060, 1.442695
    %v4145 = vpow.pop %v4144
    %v4146 = vmul.f32 %v4061, 1.442695
    %v4147 = vpow.pop %v4146
    %v4148 = vmul.f32 %v4062, 1.442695
    %v4149 = vpow.pop %v4148
    %v4150 = vmul.f32 %v4063, 1.442695
    %v4151 = vpow.pop %v4150
    %v4152 = vmul.f32 %v4064, 1.442695
    %v4153 = vpow.pop %v4152
    %v4154 = vmul.f32 %v4065, 1.442695
    %v4155 = vpow.pop %v4154
    %v4156 = vmul.f32 %v4066, 1.442695
    %v4157 = vpow.pop %v4156
    %v4158 = vmul.f32 %v4067, 1.442695
    %v4159 = vpow.pop %v4158
    %v4160 = vmul.f32 %v4068, 1.442695
    %v4161 = vpow.pop %v4160
    %v4162 = vmul.f32 %v4069, 1.442695
    %v4163 = vpow.pop %v4162
    %v4164 = vmul.f32 %v4070, 1.442695
    %v4165 = vpow.pop %v4164
    %v4166 = vmul.f32 %v4071, 1.442695
    %v4167 = vpow.pop %v4166
    %v4168 = vmul.f32 %v4072, 1.442695
    %v4169 = vpow.pop %v4168
    %v4170 = vmul.f32 %v4073, 1.442695
    %v4171 = vpow.pop %v4170
    %v4172 = vmul.f32 %v4074, 1.442695
    %v4173 = vpow.pop %v4172
    %v4174 = vmul.f32 %v4075, 1.442695
    %v4175 = vpow.pop %v4174
    %v4176 = vmul.f32 %v4076, 1.442695
    %v4177 = vpow.pop %v4176
    %v4178 = vmul.f32 %v4077, 1.442695
    %v4179 = vpow.pop %v4178
    %v4180 = vmul.f32 %v4078, 1.442695
    %v4181 = vpow.pop %v4180
    %v4182 = vmul.f32 %v4079, 1.442695
    %v4183 = vpow.pop %v4182
    %v4184 = vmul.f32 %v4080, 1.442695
    %v4185 = vpow.pop %v4184
    %v4186 = vmul.f32 %v4081, 1.442695
    %v4187 = vpow.pop %v4186
    %v4188 = vmul.f32 %v4082, 1.442695
    %v4189 = vpow.pop %v4188
    %v4190 = vmul.f32 %v4083, 1.442695
    %v4191 = vpow.pop %v4190
    %v4192 = vmul.f32 %v4084, 1.442695
    %v4193 = vpow.pop %v4192
    %v4194 = vmul.f32 %v4085, 1.442695
    %v4195 = vpow.pop %v4194
    %v4196 = vmul.f32 %v4086, 1.442695
    %v4197 = vpow.pop %v4196
    %v4198 = vmul.f32 %v4087, 1.442695
    %v4199 = vpow.pop %v4198
    %v4200 = vmul.f32 %v4088, 1.442695
    %v4201 = vpow.pop %v4200
    %v4202 = vmul.f32 %v4089, 1.442695
    %v4203 = vpow.pop %v4202
    %v4204 = vmul.f32 %v4090, 1.442695
    %v4205 = vpow.pop %v4204
    %v4206 = vmul.f32 %v4091, 1.442695
    %v4207 = vpow.pop %v4206
    %v4208 = vmul.f32 %v4092, 1.442695
    %v4209 = vpow.pop %v4208
    %v4210 = vmul.f32 %v4093, 1.442695
    %v4211 = vpow.pop %v4210
    %v4212 = vmul.f32 %v4094, 1.442695
    %v4213 = vpow.pop %v4212
    %v4214 = vmul.f32 %v4095, 1.442695
    %v4215 = vpow.pop %v4214
    %v4216 = vmul.f32 %v4096, 1.442695
    %v4217 = vpow.pop %v4216
    %v4218 = vmul.f32 %v4097, 1.442695
    %v4219 = vpow.pop %v4218
    %v4220 = vmul.f32 %v4098, 1.442695
    %v4221 = vpow.pop %v4220
    %v4222 = vmul.f32 %v4099, 1.442695
    %v4223 = vpow.pop %v4222
    %v4224 = vmul.f32 %v4100, 1.442695
    %v4225 = vpow.pop %v4224
    %v4226 = vmul.f32 %v4101, 1.442695
    %v4227 = vpow.pop %v4226
    %v4228 = vmul.f32 %v4102, 1.442695
    %v4229 = vpow.pop %v4228
    %v4230 = vmul.f32 %v4103, 1.442695
    %v4231 = vpow.pop %v4230
    %v4232 = vsel %vm2678, %v4105, 0.0
    %4233 = vadd.xlane.f32.xlu0 %v4232
    %v4234 = vpop.xlane.xlu0 %4233
    %v4235 = vsel %vm2678, %v4107, 0.0
    %4236 = vadd.xlane.f32.xlu0 %v4235
    %v4237 = vpop.xlane.xlu0 %4236
    %v4238 = vsel %vm2678, %v4109, 0.0
    %4239 = vadd.xlane.f32.xlu0 %v4238
    %v4240 = vpop.xlane.xlu0 %4239
    %v4241 = vsel %vm2678, %v4111, 0.0
    %4242 = vadd.xlane.f32.xlu0 %v4241
    %v4243 = vpop.xlane.xlu0 %4242
    %v4244 = vsel %vm2678, %v4113, 0.0
    %4245 = vadd.xlane.f32.xlu0 %v4244
    %v4246 = vpop.xlane.xlu0 %4245
    %v4247 = vsel %vm2678, %v4115, 0.0
    %4248 = vadd.xlane.f32.xlu0 %v4247
    %v4249 = vpop.xlane.xlu0 %4248
    %v4250 = vsel %vm2678, %v4117, 0.0
    %4251 = vadd.xlane.f32.xlu0 %v4250
    %v4252 = vpop.xlane.xlu0 %4251
    %v4253 = vsel %vm2678, %v4119, 0.0
    %4254 = vadd.xlane.f32.xlu0 %v4253
    %v4255 = vpop.xlane.xlu0 %4254
    %v4256 = vsel %vm2678, %v4121, 0.0
    %4257 = vadd.xlane.f32.xlu0 %v4256
    %v4258 = vpop.xlane.xlu0 %4257
    %v4259 = vsel %vm2678, %v4123, 0.0
    %4260 = vadd.xlane.f32.xlu0 %v4259
    %v4261 = vpop.xlane.xlu0 %4260
    %v4262 = vsel %vm2678, %v4125, 0.0
    %4263 = vadd.xlane.f32.xlu0 %v4262
    %v4264 = vpop.xlane.xlu0 %4263
    %v4265 = vsel %vm2678, %v4127, 0.0
    %4266 = vadd.xlane.f32.xlu0 %v4265
    %v4267 = vpop.xlane.xlu0 %4266
    %v4268 = vsel %vm2678, %v4129, 0.0
    %4269 = vadd.xlane.f32.xlu0 %v4268
    %v4270 = vpop.xlane.xlu0 %4269
    %v4271 = vsel %vm2678, %v4131, 0.0
    %4272 = vadd.xlane.f32.xlu0 %v4271
    %v4273 = vpop.xlane.xlu0 %4272
    %v4274 = vsel %vm2678, %v4133, 0.0
    %4275 = vadd.xlane.f32.xlu0 %v4274
    %v4276 = vpop.xlane.xlu0 %4275
    %v4277 = vsel %vm2678, %v4135, 0.0
    %4278 = vadd.xlane.f32.xlu0 %v4277
    %v4279 = vpop.xlane.xlu0 %4278
    %v4280 = vsel %vm2678, %v4137, 0.0
    %4281 = vadd.xlane.f32.xlu0 %v4280
    %v4282 = vpop.xlane.xlu0 %4281
    %v4283 = vsel %vm2678, %v4139, 0.0
    %4284 = vadd.xlane.f32.xlu0 %v4283
    %v4285 = vpop.xlane.xlu0 %4284
    %v4286 = vsel %vm2678, %v4141, 0.0
    %4287 = vadd.xlane.f32.xlu0 %v4286
    %v4288 = vpop.xlane.xlu0 %4287
    %v4289 = vsel %vm2678, %v4143, 0.0
    %4290 = vadd.xlane.f32.xlu0 %v4289
    %v4291 = vpop.xlane.xlu0 %4290
    %v4292 = vsel %vm2678, %v4145, 0.0
    %4293 = vadd.xlane.f32.xlu0 %v4292
    %v4294 = vpop.xlane.xlu0 %4293
    %v4295 = vsel %vm2678, %v4147, 0.0
    %4296 = vadd.xlane.f32.xlu0 %v4295
    %v4297 = vpop.xlane.xlu0 %4296
    %v4298 = vsel %vm2678, %v4149, 0.0
    %4299 = vadd.xlane.f32.xlu0 %v4298
    %v4300 = vpop.xlane.xlu0 %4299
    %v4301 = vsel %vm2678, %v4151, 0.0
    %4302 = vadd.xlane.f32.xlu0 %v4301
    %v4303 = vpop.xlane.xlu0 %4302
    %v4304 = vsel %vm2678, %v4153, 0.0
    %4305 = vadd.xlane.f32.xlu0 %v4304
    %v4306 = vpop.xlane.xlu0 %4305
    %v4307 = vsel %vm2678, %v4155, 0.0
    %4308 = vadd.xlane.f32.xlu0 %v4307
    %v4309 = vpop.xlane.xlu0 %4308
    %v4310 = vsel %vm2678, %v4157, 0.0
    %4311 = vadd.xlane.f32.xlu0 %v4310
    %v4312 = vpop.xlane.xlu0 %4311
    %v4313 = vsel %vm2678, %v4159, 0.0
    %4314 = vadd.xlane.f32.xlu0 %v4313
    %v4315 = vpop.xlane.xlu0 %4314
    %v4316 = vsel %vm2678, %v4161, 0.0
    %4317 = vadd.xlane.f32.xlu0 %v4316
    %v4318 = vpop.xlane.xlu0 %4317
    %v4319 = vsel %vm2678, %v4163, 0.0
    %4320 = vadd.xlane.f32.xlu0 %v4319
    %v4321 = vpop.xlane.xlu0 %4320
    %v4322 = vsel %vm2678, %v4165, 0.0
    %4323 = vadd.xlane.f32.xlu0 %v4322
    %v4324 = vpop.xlane.xlu0 %4323
    %v4325 = vsel %vm2678, %v4167, 0.0
    %4326 = vadd.xlane.f32.xlu0 %v4325
    %v4327 = vpop.xlane.xlu0 %4326
    %v4328 = vsel %vm2678, %v4169, 0.0
    %4329 = vadd.xlane.f32.xlu0 %v4328
    %v4330 = vpop.xlane.xlu0 %4329
    %v4331 = vsel %vm2678, %v4171, 0.0
    %4332 = vadd.xlane.f32.xlu0 %v4331
    %v4333 = vpop.xlane.xlu0 %4332
    %v4334 = vsel %vm2678, %v4173, 0.0
    %4335 = vadd.xlane.f32.xlu0 %v4334
    %v4336 = vpop.xlane.xlu0 %4335
    %v4337 = vsel %vm2678, %v4175, 0.0
    %4338 = vadd.xlane.f32.xlu0 %v4337
    %v4339 = vpop.xlane.xlu0 %4338
    %v4340 = vsel %vm2678, %v4177, 0.0
    %4341 = vadd.xlane.f32.xlu0 %v4340
    %v4342 = vpop.xlane.xlu0 %4341
    %v4343 = vsel %vm2678, %v4179, 0.0
    %4344 = vadd.xlane.f32.xlu0 %v4343
    %v4345 = vpop.xlane.xlu0 %4344
    %v4346 = vsel %vm2678, %v4181, 0.0
    %4347 = vadd.xlane.f32.xlu0 %v4346
    %v4348 = vpop.xlane.xlu0 %4347
    %v4349 = vsel %vm2678, %v4183, 0.0
    %4350 = vadd.xlane.f32.xlu0 %v4349
    %v4351 = vpop.xlane.xlu0 %4350
    %v4352 = vsel %vm2678, %v4185, 0.0
    %4353 = vadd.xlane.f32.xlu0 %v4352
    %v4354 = vpop.xlane.xlu0 %4353
    %v4355 = vsel %vm2678, %v4187, 0.0
    %4356 = vadd.xlane.f32.xlu0 %v4355
    %v4357 = vpop.xlane.xlu0 %4356
    %v4358 = vsel %vm2678, %v4189, 0.0
    %4359 = vadd.xlane.f32.xlu0 %v4358
    %v4360 = vpop.xlane.xlu0 %4359
    %v4361 = vsel %vm2678, %v4191, 0.0
    %4362 = vadd.xlane.f32.xlu0 %v4361
    %v4363 = vpop.xlane.xlu0 %4362
    %v4364 = vsel %vm2678, %v4193, 0.0
    %4365 = vadd.xlane.f32.xlu0 %v4364
    %v4366 = vpop.xlane.xlu0 %4365
    %v4367 = vsel %vm2678, %v4195, 0.0
    %4368 = vadd.xlane.f32.xlu0 %v4367
    %v4369 = vpop.xlane.xlu0 %4368
    %v4370 = vsel %vm2678, %v4197, 0.0
    %4371 = vadd.xlane.f32.xlu0 %v4370
    %v4372 = vpop.xlane.xlu0 %4371
    %v4373 = vsel %vm2678, %v4199, 0.0
    %4374 = vadd.xlane.f32.xlu0 %v4373
    %v4375 = vpop.xlane.xlu0 %4374
    %v4376 = vsel %vm2678, %v4201, 0.0
    %4377 = vadd.xlane.f32.xlu0 %v4376
    %v4378 = vpop.xlane.xlu0 %4377
    %v4379 = vsel %vm2678, %v4203, 0.0
    %4380 = vadd.xlane.f32.xlu0 %v4379
    %v4381 = vpop.xlane.xlu0 %4380
    %v4382 = vsel %vm2678, %v4205, 0.0
    %4383 = vadd.xlane.f32.xlu0 %v4382
    %v4384 = vpop.xlane.xlu0 %4383
    %v4385 = vsel %vm2678, %v4207, 0.0
    %4386 = vadd.xlane.f32.xlu0 %v4385
    %v4387 = vpop.xlane.xlu0 %4386
    %v4388 = vsel %vm2678, %v4209, 0.0
    %4389 = vadd.xlane.f32.xlu0 %v4388
    %v4390 = vpop.xlane.xlu0 %4389
    %v4391 = vsel %vm2678, %v4211, 0.0
    %4392 = vadd.xlane.f32.xlu0 %v4391
    %v4393 = vpop.xlane.xlu0 %4392
    %v4394 = vsel %vm2678, %v4213, 0.0
    %4395 = vadd.xlane.f32.xlu0 %v4394
    %v4396 = vpop.xlane.xlu0 %4395
    %v4397 = vsel %vm2678, %v4215, 0.0
    %4398 = vadd.xlane.f32.xlu0 %v4397
    %v4399 = vpop.xlane.xlu0 %4398
    %v4400 = vsel %vm2678, %v4217, 0.0
    %4401 = vadd.xlane.f32.xlu0 %v4400
    %v4402 = vpop.xlane.xlu0 %4401
    %v4403 = vsel %vm2678, %v4219, 0.0
    %4404 = vadd.xlane.f32.xlu0 %v4403
    %v4405 = vpop.xlane.xlu0 %4404
    %v4406 = vsel %vm2678, %v4221, 0.0
    %4407 = vadd.xlane.f32.xlu0 %v4406
    %v4408 = vpop.xlane.xlu0 %4407
    %v4409 = vsel %vm2678, %v4223, 0.0
    %4410 = vadd.xlane.f32.xlu0 %v4409
    %v4411 = vpop.xlane.xlu0 %4410
    %v4412 = vsel %vm2678, %v4225, 0.0
    %4413 = vadd.xlane.f32.xlu0 %v4412
    %v4414 = vpop.xlane.xlu0 %4413
    %v4415 = vsel %vm2678, %v4227, 0.0
    %4416 = vadd.xlane.f32.xlu0 %v4415
    %v4417 = vpop.xlane.xlu0 %4416
    %v4418 = vsel %vm2678, %v4229, 0.0
    %4419 = vadd.xlane.f32.xlu0 %v4418
    %v4420 = vpop.xlane.xlu0 %4419
    %v4421 = vsel %vm2678, %v4231, 0.0
    %4422 = vadd.xlane.f32.xlu0 %v4421
    %v4423 = vpop.xlane.xlu0 %4422
    %v4424 = vrcp.pop %v4234
    %v4425 = vrcp.pop %v4237
    %v4426 = vrcp.pop %v4240
    %v4427 = vrcp.pop %v4243
    %v4428 = vrcp.pop %v4246
    %v4429 = vrcp.pop %v4249
    %v4430 = vrcp.pop %v4252
    %v4431 = vrcp.pop %v4255
    %v4432 = vrcp.pop %v4258
    %v4433 = vrcp.pop %v4261
    %v4434 = vrcp.pop %v4264
    %v4435 = vrcp.pop %v4267
    %v4436 = vrcp.pop %v4270
    %v4437 = vrcp.pop %v4273
    %v4438 = vrcp.pop %v4276
    %v4439 = vrcp.pop %v4279
    %v4440 = vrcp.pop %v4282
    %v4441 = vrcp.pop %v4285
    %v4442 = vrcp.pop %v4288
    %v4443 = vrcp.pop %v4291
    %v4444 = vrcp.pop %v4294
    %v4445 = vrcp.pop %v4297
    %v4446 = vrcp.pop %v4300
    %v4447 = vrcp.pop %v4303
    %v4448 = vrcp.pop %v4306
    %v4449 = vrcp.pop %v4309
    %v4450 = vrcp.pop %v4312
    %v4451 = vrcp.pop %v4315
    %v4452 = vrcp.pop %v4318
    %v4453 = vrcp.pop %v4321
    %v4454 = vrcp.pop %v4324
    %v4455 = vrcp.pop %v4327
    %v4456 = vrcp.pop %v4330
    %v4457 = vrcp.pop %v4333
    %v4458 = vrcp.pop %v4336
    %v4459 = vrcp.pop %v4339
    %v4460 = vrcp.pop %v4342
    %v4461 = vrcp.pop %v4345
    %v4462 = vrcp.pop %v4348
    %v4463 = vrcp.pop %v4351
    %v4464 = vrcp.pop %v4354
    %v4465 = vrcp.pop %v4357
    %v4466 = vrcp.pop %v4360
    %v4467 = vrcp.pop %v4363
    %v4468 = vrcp.pop %v4366
    %v4469 = vrcp.pop %v4369
    %v4470 = vrcp.pop %v4372
    %v4471 = vrcp.pop %v4375
    %v4472 = vrcp.pop %v4378
    %v4473 = vrcp.pop %v4381
    %v4474 = vrcp.pop %v4384
    %v4475 = vrcp.pop %v4387
    %v4476 = vrcp.pop %v4390
    %v4477 = vrcp.pop %v4393
    %v4478 = vrcp.pop %v4396
    %v4479 = vrcp.pop %v4399
    %v4480 = vrcp.pop %v4402
    %v4481 = vrcp.pop %v4405
    %v4482 = vrcp.pop %v4408
    %v4483 = vrcp.pop %v4411
    %v4484 = vrcp.pop %v4414
    %v4485 = vrcp.pop %v4417
    %v4486 = vrcp.pop %v4420
    %v4487 = vrcp.pop %v4423
    %v4488 = vmul.f32 %v4105, %v4424
    %v4489 = vmul.f32 %v4107, %v4425
    %v4490 = vmul.f32 %v4109, %v4426
    %v4491 = vmul.f32 %v4111, %v4427
    %v4492 = vmul.f32 %v4113, %v4428
    %v4493 = vmul.f32 %v4115, %v4429
    %v4494 = vmul.f32 %v4117, %v4430
    %v4495 = vmul.f32 %v4119, %v4431
    %v4496 = vmul.f32 %v4121, %v4432
    %v4497 = vmul.f32 %v4123, %v4433
    %v4498 = vmul.f32 %v4125, %v4434
    %v4499 = vmul.f32 %v4127, %v4435
    %v4500 = vmul.f32 %v4129, %v4436
    %v4501 = vmul.f32 %v4131, %v4437
    %v4502 = vmul.f32 %v4133, %v4438
    %v4503 = vmul.f32 %v4135, %v4439
    %v4504 = vmul.f32 %v4137, %v4440
    %v4505 = vmul.f32 %v4139, %v4441
    %v4506 = vmul.f32 %v4141, %v4442
    %v4507 = vmul.f32 %v4143, %v4443
    %v4508 = vmul.f32 %v4145, %v4444
    %v4509 = vmul.f32 %v4147, %v4445
    %v4510 = vmul.f32 %v4149, %v4446
    %v4511 = vmul.f32 %v4151, %v4447
    %v4512 = vmul.f32 %v4153, %v4448
    %v4513 = vmul.f32 %v4155, %v4449
    %v4514 = vmul.f32 %v4157, %v4450
    %v4515 = vmul.f32 %v4159, %v4451
    %v4516 = vmul.f32 %v4161, %v4452
    %v4517 = vmul.f32 %v4163, %v4453
    %v4518 = vmul.f32 %v4165, %v4454
    %v4519 = vmul.f32 %v4167, %v4455
    %v4520 = vmul.f32 %v4169, %v4456
    %v4521 = vmul.f32 %v4171, %v4457
    %v4522 = vmul.f32 %v4173, %v4458
    %v4523 = vmul.f32 %v4175, %v4459
    %v4524 = vmul.f32 %v4177, %v4460
    %v4525 = vmul.f32 %v4179, %v4461
    %v4526 = vmul.f32 %v4181, %v4462
    %v4527 = vmul.f32 %v4183, %v4463
    %v4528 = vmul.f32 %v4185, %v4464
    %v4529 = vmul.f32 %v4187, %v4465
    %v4530 = vmul.f32 %v4189, %v4466
    %v4531 = vmul.f32 %v4191, %v4467
    %v4532 = vmul.f32 %v4193, %v4468
    %v4533 = vmul.f32 %v4195, %v4469
    %v4534 = vmul.f32 %v4197, %v4470
    %v4535 = vmul.f32 %v4199, %v4471
    %v4536 = vmul.f32 %v4201, %v4472
    %v4537 = vmul.f32 %v4203, %v4473
    %v4538 = vmul.f32 %v4205, %v4474
    %v4539 = vmul.f32 %v4207, %v4475
    %v4540 = vmul.f32 %v4209, %v4476
    %v4541 = vmul.f32 %v4211, %v4477
    %v4542 = vmul.f32 %v4213, %v4478
    %v4543 = vmul.f32 %v4215, %v4479
    %v4544 = vmul.f32 %v4217, %v4480
    %v4545 = vmul.f32 %v4219, %v4481
    %v4546 = vmul.f32 %v4221, %v4482
    %v4547 = vmul.f32 %v4223, %v4483
    %v4548 = vmul.f32 %v4225, %v4484
    %v4549 = vmul.f32 %v4227, %v4485
    %v4550 = vmul.f32 %v4229, %v4486
    %v4551 = vmul.f32 %v4231, %v4487
    %v4553 = vsel %vm2678, %v4488, 0
    %v4556 = vsel %vm2678, %v4489, 0
    %v4559 = vsel %vm2678, %v4490, 0
    %v4562 = vsel %vm2678, %v4491, 0
    %v4565 = vsel %vm2678, %v4492, 0
    %v4568 = vsel %vm2678, %v4493, 0
    %v4571 = vsel %vm2678, %v4494, 0
    %v4574 = vsel %vm2678, %v4495, 0
    %v4577 = vsel %vm2678, %v4496, 0
    %v4580 = vsel %vm2678, %v4497, 0
    %v4583 = vsel %vm2678, %v4498, 0
    %v4586 = vsel %vm2678, %v4499, 0
    %v4589 = vsel %vm2678, %v4500, 0
    %v4592 = vsel %vm2678, %v4501, 0
    %v4595 = vsel %vm2678, %v4502, 0
    %v4598 = vsel %vm2678, %v4503, 0
    %v4601 = vsel %vm2678, %v4504, 0
    %v4604 = vsel %vm2678, %v4505, 0
    %v4607 = vsel %vm2678, %v4506, 0
    %v4610 = vsel %vm2678, %v4507, 0
    %v4613 = vsel %vm2678, %v4508, 0
    %v4616 = vsel %vm2678, %v4509, 0
    %v4619 = vsel %vm2678, %v4510, 0
    %v4622 = vsel %vm2678, %v4511, 0
    %v4625 = vsel %vm2678, %v4512, 0
    %v4628 = vsel %vm2678, %v4513, 0
    %v4631 = vsel %vm2678, %v4514, 0
    %v4634 = vsel %vm2678, %v4515, 0
    %v4637 = vsel %vm2678, %v4516, 0
    %v4640 = vsel %vm2678, %v4517, 0
    %v4643 = vsel %vm2678, %v4518, 0
    %v4646 = vsel %vm2678, %v4519, 0
    %v4649 = vsel %vm2678, %v4520, 0
    %v4652 = vsel %vm2678, %v4521, 0
    %v4655 = vsel %vm2678, %v4522, 0
    %v4658 = vsel %vm2678, %v4523, 0
    %v4661 = vsel %vm2678, %v4524, 0
    %v4664 = vsel %vm2678, %v4525, 0
    %v4667 = vsel %vm2678, %v4526, 0
    %v4670 = vsel %vm2678, %v4527, 0
    %v4673 = vsel %vm2678, %v4528, 0
    %v4676 = vsel %vm2678, %v4529, 0
    %v4679 = vsel %vm2678, %v4530, 0
    %v4682 = vsel %vm2678, %v4531, 0
    %v4685 = vsel %vm2678, %v4532, 0
    %v4688 = vsel %vm2678, %v4533, 0
    %v4691 = vsel %vm2678, %v4534, 0
    %v4694 = vsel %vm2678, %v4535, 0
    %v4697 = vsel %vm2678, %v4536, 0
    %v4700 = vsel %vm2678, %v4537, 0
    %v4703 = vsel %vm2678, %v4538, 0
    %v4706 = vsel %vm2678, %v4539, 0
    %v4709 = vsel %vm2678, %v4540, 0
    %v4712 = vsel %vm2678, %v4541, 0
    %v4715 = vsel %vm2678, %v4542, 0
    %v4718 = vsel %vm2678, %v4543, 0
    %v4721 = vsel %vm2678, %v4544, 0
    %v4724 = vsel %vm2678, %v4545, 0
    %v4727 = vsel %vm2678, %v4546, 0
    %v4730 = vsel %vm2678, %v4547, 0
    %v4733 = vsel %vm2678, %v4548, 0
    %v4736 = vsel %vm2678, %v4549, 0
    %v4739 = vsel %vm2678, %v4550, 0
    %v4742 = vsel %vm2678, %v4551, 0
    %4744 = vmatprep.subr.mxu0 0.0
    %4745 = vmatpush1.msra.mxu0 %v3145
    %4746 = vmatprep.subr.mxu0 0.0
    %4747 = vmatpush1.msra.mxu0 %v3150
    %4748 = vmatprep.subr.mxu0 0.0
    %4749 = vmatpush1.msra.mxu0 %v3155
    %4750 = vmatprep.subr.mxu0 0.0
    %4751 = vmatpush1.msra.mxu0 %v3160
    %4752 = vmatprep.subr.mxu0 0.0
    %4753 = vmatpush1.msra.mxu0 %v3165
    %4754 = vmatprep.subr.mxu0 0.0
    %4755 = vmatpush1.msra.mxu0 %v3170
    %4756 = vmatprep.subr.mxu0 0.0
    %4757 = vmatpush1.msra.mxu0 %v3175
    %4758 = vmatprep.subr.mxu0 0.0
    %4759 = vmatpush1.msra.mxu0 %v3180
    %4760 = vmatprep.subr.mxu0 0.0
    %4761 = vmatpush1.msra.mxu0 0.0
    %4762 = vmatprep.subr.mxu0 0.0
    %4763 = vmatpush1.msra.mxu0 0.0
    %4764 = vmatprep.subr.mxu0 0.0
    %4765 = vmatpush1.msra.mxu0 0.0
    %4766 = vmatprep.subr.mxu0 0.0
    %4767 = vmatpush1.msra.mxu0 0.0
    %4768 = vmatprep.subr.mxu0 0.0
    %4769 = vmatpush1.msra.mxu0 0.0
    %4770 = vmatprep.subr.mxu0 0.0
    %4771 = vmatpush1.msra.mxu0 0.0
    %4772 = vmatprep.subr.mxu0 0.0
    %4773 = vmatpush1.msra.mxu0 0.0
    %4774 = vmatprep.subr.mxu0 0.0
    %4775 = vmatpush1.msra.mxu0 0.0
    %4776 = vmatprep.subr.mxu0 0.0
    %4777 = vmatpush1.msra.mxu0 0.0
    %4778 = vmatprep.subr.mxu0 0.0
    %4779 = vmatpush1.msra.mxu0 0.0
    %4780 = vmatprep.subr.mxu0 0.0
    %4781 = vmatpush1.msra.mxu0 0.0
    %4782 = vmatprep.subr.mxu0 0.0
    %4783 = vmatpush1.msra.mxu0 0.0
    %4784 = vmatprep.subr.mxu0 0.0
    %4785 = vmatpush1.msra.mxu0 0.0
    %4786 = vmatprep.subr.mxu0 0.0
    %4787 = vmatpush1.msra.mxu0 0.0
    %4788 = vmatprep.subr.mxu0 0.0
    %4789 = vmatpush1.msra.mxu0 0.0
    %4790 = vmatprep.subr.mxu0 0.0
    %4791 = vmatpush1.msra.mxu0 0.0
    %4792 = vmatprep.subr.mxu0 0.0
    %4793 = vmatpush1.msra.mxu0 0.0
    %4794 = vmatprep.subr.mxu0 0.0
    %4795 = vmatpush1.msra.mxu0 0.0
    %4796 = vmatprep.subr.mxu0 0.0
    %4797 = vmatpush1.msra.mxu0 0.0
    %4798 = vmatprep.subr.mxu0 0.0
    %4799 = vmatpush1.msra.mxu0 0.0
    %4800 = vmatprep.subr.mxu0 0.0
    %4801 = vmatpush1.msra.mxu0 0.0
    %4802 = vmatprep.subr.mxu0 0.0
    %4803 = vmatpush1.msra.mxu0 0.0
    %4804 = vmatprep.subr.mxu0 0.0
    %4805 = vmatpush1.msra.mxu0 0.0
    %4806 = vmatprep.subr.mxu0 0.0
    %4807 = vmatpush1.msra.mxu0 0.0
    %4808 = vmatprep.mubr.f32.mxu0 0.0
    %4809 = vmatmul.mubr.f32.gmra.mrb[0].mxu0 %v4553
    %v4810 = vpop.f32.mrb[0].mxu0
    %v4811 = vadd.f32 0.0, %v4810
    %v4812 = vpop.f32.mrb[0].mxu0
    %4813 = vmatprep.mubr.f32.mxu0 0.0
    %4814 = vmatmul.mubr.f32.gmra.mrb[0].mxu0 %v4556
    %v4815 = vpop.f32.mrb[0].mxu0
    %v4816 = vadd.f32 0.0, %v4815
    %v4817 = vpop.f32.mrb[0].mxu0
    %4818 = vmatprep.mubr.f32.mxu0 0.0
    %4819 = vmatmul.mubr.f32.gmra.mrb[0].mxu0 %v4559
    %v4820 = vpop.f32.mrb[0].mxu0
    %v4821 = vadd.f32 0.0, %v4820
    %v4822 = vpop.f32.mrb[0].mxu0
    %4823 = vmatprep.mubr.f32.mxu0 0.0
    %4824 = vmatmul.mubr.f32.gmra.mrb[0].mxu0 %v4562
    %v4825 = vpop.f32.mrb[0].mxu0
    %v4826 = vadd.f32 0.0, %v4825
    %v4827 = vpop.f32.mrb[0].mxu0
    %4828 = vmatprep.mubr.f32.mxu0 0.0
    %4829 = vmatmul.mubr.f32.gmra.mrb[0].mxu0 %v4565
    %v4830 = vpop.f32.mrb[0].mxu0
    %v4831 = vadd.f32 0.0, %v4830
    %v4832 = vpop.f32.mrb[0].mxu0
    %4833 = vmatprep.mubr.f32.mxu0 0.0
    %4834 = vmatmul.mubr.f32.gmra.mrb[0].mxu0 %v4568
    %v4835 = vpop.f32.mrb[0].mxu0
    %v4836 = vadd.f32 0.0, %v4835
    %v4837 = vpop.f32.mrb[0].mxu0
    %4838 = vmatprep.mubr.f32.mxu0 0.0
    %4839 = vmatmul.mubr.f32.gmra.mrb[0].mxu0 %v4571
    %v4840 = vpop.f32.mrb[0].mxu0
    %v4841 = vadd.f32 0.0, %v4840
    %v4842 = vpop.f32.mrb[0].mxu0
    %4843 = vmatprep.mubr.f32.mxu0 0.0
    %4844 = vmatmul.mubr.f32.gmra.mrb[0].mxu0 %v4574
    %v4845 = vpop.f32.mrb[0].mxu0
    %v4846 = vadd.f32 0.0, %v4845
    %v4847 = vpop.f32.mrb[0].mxu0
    %4848 = vmatprep.mubr.f32.mxu0 0.0
    %4849 = vmatmul.mubr.f32.gmra.mrb[0].mxu0 %v4577
    %v4850 = vpop.f32.mrb[0].mxu0
    %v4851 = vadd.f32 0.0, %v4850
    %v4852 = vpop.f32.mrb[0].mxu0
    %4853 = vmatprep.mubr.f32.mxu0 0.0
    %4854 = vmatmul.mubr.f32.gmra.mrb[0].mxu0 %v4580
    %v4855 = vpop.f32.mrb[0].mxu0
    %v4856 = vadd.f32 0.0, %v4855
    %v4857 = vpop.f32.mrb[0].mxu0
    %4858 = vmatprep.mubr.f32.mxu0 0.0
    %4859 = vmatmul.mubr.f32.gmra.mrb[0].mxu0 %v4583
    %v4860 = vpop.f32.mrb[0].mxu0
    %v4861 = vadd.f32 0.0, %v4860
    %v4862 = vpop.f32.mrb[0].mxu0
    %4863 = vmatprep.mubr.f32.mxu0 0.0
    %4864 = vmatmul.mubr.f32.gmra.mrb[0].mxu0 %v4586
    %v4865 = vpop.f32.mrb[0].mxu0
    %v4866 = vadd.f32 0.0, %v4865
    %v4867 = vpop.f32.mrb[0].mxu0
    %4868 = vmatprep.mubr.f32.mxu0 0.0
    %4869 = vmatmul.mubr.f32.gmra.mrb[0].mxu0 %v4589
    %v4870 = vpop.f32.mrb[0].mxu0
    %v4871 = vadd.f32 0.0, %v4870
    %v4872 = vpop.f32.mrb[0].mxu0
    %4873 = vmatprep.mubr.f32.mxu0 0.0
    %4874 = vmatmul.mubr.f32.gmra.mrb[0].mxu0 %v4592
    %v4875 = vpop.f32.mrb[0].mxu0
    %v4876 = vadd.f32 0.0, %v4875
    %v4877 = vpop.f32.mrb[0].mxu0
    %4878 = vmatprep.mubr.f32.mxu0 0.0
    %4879 = vmatmul.mubr.f32.gmra.mrb[0].mxu0 %v4595
    %v4880 = vpop.f32.mrb[0].mxu0
    %v4881 = vadd.f32 0.0, %v4880
    %v4882 = vpop.f32.mrb[0].mxu0
    %4883 = vmatprep.mubr.f32.mxu0 0.0
    %4884 = vmatmul.mubr.f32.gmra.mrb[0].mxu0 %v4598
    %v4885 = vpop.f32.mrb[0].mxu0
    %v4886 = vadd.f32 0.0, %v4885
    %v4887 = vpop.f32.mrb[0].mxu0
    %4888 = vmatprep.mubr.f32.mxu0 0.0
    %4889 = vmatmul.mubr.f32.gmra.mrb[0].mxu0 %v4601
    %v4890 = vpop.f32.mrb[0].mxu0
    %v4891 = vadd.f32 0.0, %v4890
    %v4892 = vpop.f32.mrb[0].mxu0
    %4893 = vmatprep.mubr.f32.mxu0 0.0
    %4894 = vmatmul.mubr.f32.gmra.mrb[0].mxu0 %v4604
    %v4895 = vpop.f32.mrb[0].mxu0
    %v4896 = vadd.f32 0.0, %v4895
    %v4897 = vpop.f32.mrb[0].mxu0
    %4898 = vmatprep.mubr.f32.mxu0 0.0
    %4899 = vmatmul.mubr.f32.gmra.mrb[0].mxu0 %v4607
    %v4900 = vpop.f32.mrb[0].mxu0
    %v4901 = vadd.f32 0.0, %v4900
    %v4902 = vpop.f32.mrb[0].mxu0
    %4903 = vmatprep.mubr.f32.mxu0 0.0
    %4904 = vmatmul.mubr.f32.gmra.mrb[0].mxu0 %v4610
    %v4905 = vpop.f32.mrb[0].mxu0
    %v4906 = vadd.f32 0.0, %v4905
    %v4907 = vpop.f32.mrb[0].mxu0
    %4908 = vmatprep.mubr.f32.mxu0 0.0
    %4909 = vmatmul.mubr.f32.gmra.mrb[0].mxu0 %v4613
    %v4910 = vpop.f32.mrb[0].mxu0
    %v4911 = vadd.f32 0.0, %v4910
    %v4912 = vpop.f32.mrb[0].mxu0
    %4913 = vmatprep.mubr.f32.mxu0 0.0
    %4914 = vmatmul.mubr.f32.gmra.mrb[0].mxu0 %v4616
    %v4915 = vpop.f32.mrb[0].mxu0
    %v4916 = vadd.f32 0.0, %v4915
    %v4917 = vpop.f32.mrb[0].mxu0
    %4918 = vmatprep.mubr.f32.mxu0 0.0
    %4919 = vmatmul.mubr.f32.gmra.mrb[0].mxu0 %v4619
    %v4920 = vpop.f32.mrb[0].mxu0
    %v4921 = vadd.f32 0.0, %v4920
    %v4922 = vpop.f32.mrb[0].mxu0
    %4923 = vmatprep.mubr.f32.mxu0 0.0
    %4924 = vmatmul.mubr.f32.gmra.mrb[0].mxu0 %v4622
    %v4925 = vpop.f32.mrb[0].mxu0
    %v4926 = vadd.f32 0.0, %v4925
    %v4927 = vpop.f32.mrb[0].mxu0
    %4928 = vmatprep.mubr.f32.mxu0 0.0
    %4929 = vmatmul.mubr.f32.gmra.mrb[0].mxu0 %v4625
    %v4930 = vpop.f32.mrb[0].mxu0
    %v4931 = vadd.f32 0.0, %v4930
    %v4932 = vpop.f32.mrb[0].mxu0
    %4933 = vmatprep.mubr.f32.mxu0 0.0
    %4934 = vmatmul.mubr.f32.gmra.mrb[0].mxu0 %v4628
    %v4935 = vpop.f32.mrb[0].mxu0
    %v4936 = vadd.f32 0.0, %v4935
    %v4937 = vpop.f32.mrb[0].mxu0
    %4938 = vmatprep.mubr.f32.mxu0 0.0
    %4939 = vmatmul.mubr.f32.gmra.mrb[0].mxu0 %v4631
    %v4940 = vpop.f32.mrb[0].mxu0
    %v4941 = vadd.f32 0.0, %v4940
    %v4942 = vpop.f32.mrb[0].mxu0
    %4943 = vmatprep.mubr.f32.mxu0 0.0
    %4944 = vmatmul.mubr.f32.gmra.mrb[0].mxu0 %v4634
    %v4945 = vpop.f32.mrb[0].mxu0
    %v4946 = vadd.f32 0.0, %v4945
    %v4947 = vpop.f32.mrb[0].mxu0
    %4948 = vmatprep.mubr.f32.mxu0 0.0
    %4949 = vmatmul.mubr.f32.gmra.mrb[0].mxu0 %v4637
    %v4950 = vpop.f32.mrb[0].mxu0
    %v4951 = vadd.f32 0.0, %v4950
    %v4952 = vpop.f32.mrb[0].mxu0
    %4953 = vmatprep.mubr.f32.mxu0 0.0
    %4954 = vmatmul.mubr.f32.gmra.mrb[0].mxu0 %v4640
    %v4955 = vpop.f32.mrb[0].mxu0
    %v4956 = vadd.f32 0.0, %v4955
    %v4957 = vpop.f32.mrb[0].mxu0
    %4958 = vmatprep.mubr.f32.mxu0 0.0
    %4959 = vmatmul.mubr.f32.gmra.mrb[0].mxu0 %v4643
    %v4960 = vpop.f32.mrb[0].mxu0
    %v4961 = vadd.f32 0.0, %v4960
    %v4962 = vpop.f32.mrb[0].mxu0
    %4963 = vmatprep.mubr.f32.mxu0 0.0
    %4964 = vmatmul.mubr.f32.gmra.mrb[0].mxu0 %v4646
    %v4965 = vpop.f32.mrb[0].mxu0
    %v4966 = vadd.f32 0.0, %v4965
    %v4967 = vpop.f32.mrb[0].mxu0
    %4968 = vmatprep.mubr.f32.mxu0 0.0
    %4969 = vmatmul.mubr.f32.gmra.mrb[0].mxu0 %v4649
    %v4970 = vpop.f32.mrb[0].mxu0
    %v4971 = vadd.f32 0.0, %v4970
    %v4972 = vpop.f32.mrb[0].mxu0
    %4973 = vmatprep.mubr.f32.mxu0 0.0
    %4974 = vmatmul.mubr.f32.gmra.mrb[0].mxu0 %v4652
    %v4975 = vpop.f32.mrb[0].mxu0
    %v4976 = vadd.f32 0.0, %v4975
    %v4977 = vpop.f32.mrb[0].mxu0
    %4978 = vmatprep.mubr.f32.mxu0 0.0
    %4979 = vmatmul.mubr.f32.gmra.mrb[0].mxu0 %v4655
    %v4980 = vpop.f32.mrb[0].mxu0
    %v4981 = vadd.f32 0.0, %v4980
    %v4982 = vpop.f32.mrb[0].mxu0
    %4983 = vmatprep.mubr.f32.mxu0 0.0
    %4984 = vmatmul.mubr.f32.gmra.mrb[0].mxu0 %v4658
    %v4985 = vpop.f32.mrb[0].mxu0
    %v4986 = vadd.f32 0.0, %v4985
    %v4987 = vpop.f32.mrb[0].mxu0
    %4988 = vmatprep.mubr.f32.mxu0 0.0
    %4989 = vmatmul.mubr.f32.gmra.mrb[0].mxu0 %v4661
    %v4990 = vpop.f32.mrb[0].mxu0
    %v4991 = vadd.f32 0.0, %v4990
    %v4992 = vpop.f32.mrb[0].mxu0
    %4993 = vmatprep.mubr.f32.mxu0 0.0
    %4994 = vmatmul.mubr.f32.gmra.mrb[0].mxu0 %v4664
    %v4995 = vpop.f32.mrb[0].mxu0
    %v4996 = vadd.f32 0.0, %v4995
    %v4997 = vpop.f32.mrb[0].mxu0
    %4998 = vmatprep.mubr.f32.mxu0 0.0
    %4999 = vmatmul.mubr.f32.gmra.mrb[0].mxu0 %v4667
    %v5000 = vpop.f32.mrb[0].mxu0
    %v5001 = vadd.f32 0.0, %v5000
    %v5002 = vpop.f32.mrb[0].mxu0
    %5003 = vmatprep.mubr.f32.mxu0 0.0
    %5004 = vmatmul.mubr.f32.gmra.mrb[0].mxu0 %v4670
    %v5005 = vpop.f32.mrb[0].mxu0
    %v5006 = vadd.f32 0.0, %v5005
    %v5007 = vpop.f32.mrb[0].mxu0
    %5008 = vmatprep.mubr.f32.mxu0 0.0
    %5009 = vmatmul.mubr.f32.gmra.mrb[0].mxu0 %v4673
    %v5010 = vpop.f32.mrb[0].mxu0
    %v5011 = vadd.f32 0.0, %v5010
    %v5012 = vpop.f32.mrb[0].mxu0
    %5013 = vmatprep.mubr.f32.mxu0 0.0
    %5014 = vmatmul.mubr.f32.gmra.mrb[0].mxu0 %v4676
    %v5015 = vpop.f32.mrb[0].mxu0
    %v5016 = vadd.f32 0.0, %v5015
    %v5017 = vpop.f32.mrb[0].mxu0
    %5018 = vmatprep.mubr.f32.mxu0 0.0
    %5019 = vmatmul.mubr.f32.gmra.mrb[0].mxu0 %v4679
    %v5020 = vpop.f32.mrb[0].mxu0
    %v5021 = vadd.f32 0.0, %v5020
    %v5022 = vpop.f32.mrb[0].mxu0
    %5023 = vmatprep.mubr.f32.mxu0 0.0
    %5024 = vmatmul.mubr.f32.gmra.mrb[0].mxu0 %v4682
    %v5025 = vpop.f32.mrb[0].mxu0
    %v5026 = vadd.f32 0.0, %v5025
    %v5027 = vpop.f32.mrb[0].mxu0
    %5028 = vmatprep.mubr.f32.mxu0 0.0
    %5029 = vmatmul.mubr.f32.gmra.mrb[0].mxu0 %v4685
    %v5030 = vpop.f32.mrb[0].mxu0
    %v5031 = vadd.f32 0.0, %v5030
    %v5032 = vpop.f32.mrb[0].mxu0
    %5033 = vmatprep.mubr.f32.mxu0 0.0
    %5034 = vmatmul.mubr.f32.gmra.mrb[0].mxu0 %v4688
    %v5035 = vpop.f32.mrb[0].mxu0
    %v5036 = vadd.f32 0.0, %v5035
    %v5037 = vpop.f32.mrb[0].mxu0
    %5038 = vmatprep.mubr.f32.mxu0 0.0
    %5039 = vmatmul.mubr.f32.gmra.mrb[0].mxu0 %v4691
    %v5040 = vpop.f32.mrb[0].mxu0
    %v5041 = vadd.f32 0.0, %v5040
    %v5042 = vpop.f32.mrb[0].mxu0
    %5043 = vmatprep.mubr.f32.mxu0 0.0
    %5044 = vmatmul.mubr.f32.gmra.mrb[0].mxu0 %v4694
    %v5045 = vpop.f32.mrb[0].mxu0
    %v5046 = vadd.f32 0.0, %v5045
    %v5047 = vpop.f32.mrb[0].mxu0
    %5048 = vmatprep.mubr.f32.mxu0 0.0
    %5049 = vmatmul.mubr.f32.gmra.mrb[0].mxu0 %v4697
    %v5050 = vpop.f32.mrb[0].mxu0
    %v5051 = vadd.f32 0.0, %v5050
    %v5052 = vpop.f32.mrb[0].mxu0
    %5053 = vmatprep.mubr.f32.mxu0 0.0
    %5054 = vmatmul.mubr.f32.gmra.mrb[0].mxu0 %v4700
    %v5055 = vpop.f32.mrb[0].mxu0
    %v5056 = vadd.f32 0.0, %v5055
    %v5057 = vpop.f32.mrb[0].mxu0
    %5058 = vmatprep.mubr.f32.mxu0 0.0
    %5059 = vmatmul.mubr.f32.gmra.mrb[0].mxu0 %v4703
    %v5060 = vpop.f32.mrb[0].mxu0
    %v5061 = vadd.f32 0.0, %v5060
    %v5062 = vpop.f32.mrb[0].mxu0
    %5063 = vmatprep.mubr.f32.mxu0 0.0
    %5064 = vmatmul.mubr.f32.gmra.mrb[0].mxu0 %v4706
    %v5065 = vpop.f32.mrb[0].mxu0
    %v5066 = vadd.f32 0.0, %v5065
    %v5067 = vpop.f32.mrb[0].mxu0
    %5068 = vmatprep.mubr.f32.mxu0 0.0
    %5069 = vmatmul.mubr.f32.gmra.mrb[0].mxu0 %v4709
    %v5070 = vpop.f32.mrb[0].mxu0
    %v5071 = vadd.f32 0.0, %v5070
    %v5072 = vpop.f32.mrb[0].mxu0
    %5073 = vmatprep.mubr.f32.mxu0 0.0
    %5074 = vmatmul.mubr.f32.gmra.mrb[0].mxu0 %v4712
    %v5075 = vpop.f32.mrb[0].mxu0
    %v5076 = vadd.f32 0.0, %v5075
    %v5077 = vpop.f32.mrb[0].mxu0
    %5078 = vmatprep.mubr.f32.mxu0 0.0
    %5079 = vmatmul.mubr.f32.gmra.mrb[0].mxu0 %v4715
    %v5080 = vpop.f32.mrb[0].mxu0
    %v5081 = vadd.f32 0.0, %v5080
    %v5082 = vpop.f32.mrb[0].mxu0
    %5083 = vmatprep.mubr.f32.mxu0 0.0
    %5084 = vmatmul.mubr.f32.gmra.mrb[0].mxu0 %v4718
    %v5085 = vpop.f32.mrb[0].mxu0
    %v5086 = vadd.f32 0.0, %v5085
    %v5087 = vpop.f32.mrb[0].mxu0
    %5088 = vmatprep.mubr.f32.mxu0 0.0
    %5089 = vmatmul.mubr.f32.gmra.mrb[0].mxu0 %v4721
    %v5090 = vpop.f32.mrb[0].mxu0
    %v5091 = vadd.f32 0.0, %v5090
    %v5092 = vpop.f32.mrb[0].mxu0
    %5093 = vmatprep.mubr.f32.mxu0 0.0
    %5094 = vmatmul.mubr.f32.gmra.mrb[0].mxu0 %v4724
    %v5095 = vpop.f32.mrb[0].mxu0
    %v5096 = vadd.f32 0.0, %v5095
    %v5097 = vpop.f32.mrb[0].mxu0
    %5098 = vmatprep.mubr.f32.mxu0 0.0
    %5099 = vmatmul.mubr.f32.gmra.mrb[0].mxu0 %v4727
    %v5100 = vpop.f32.mrb[0].mxu0
    %v5101 = vadd.f32 0.0, %v5100
    %v5102 = vpop.f32.mrb[0].mxu0
    %5103 = vmatprep.mubr.f32.mxu0 0.0
    %5104 = vmatmul.mubr.f32.gmra.mrb[0].mxu0 %v4730
    %v5105 = vpop.f32.mrb[0].mxu0
    %v5106 = vadd.f32 0.0, %v5105
    %v5107 = vpop.f32.mrb[0].mxu0
    %5108 = vmatprep.mubr.f32.mxu0 0.0
    %5109 = vmatmul.mubr.f32.gmra.mrb[0].mxu0 %v4733
    %v5110 = vpop.f32.mrb[0].mxu0
    %v5111 = vadd.f32 0.0, %v5110
    %v5112 = vpop.f32.mrb[0].mxu0
    %5113 = vmatprep.mubr.f32.mxu0 0.0
    %5114 = vmatmul.mubr.f32.gmra.mrb[0].mxu0 %v4736
    %v5115 = vpop.f32.mrb[0].mxu0
    %v5116 = vadd.f32 0.0, %v5115
    %v5117 = vpop.f32.mrb[0].mxu0
    %5118 = vmatprep.mubr.f32.mxu0 0.0
    %5119 = vmatmul.mubr.f32.gmra.mrb[0].mxu0 %v4739
    %v5120 = vpop.f32.mrb[0].mxu0
    %v5121 = vadd.f32 0.0, %v5120
    %v5122 = vpop.f32.mrb[0].mxu0
    %5123 = vmatprep.mubr.f32.mxu0 0.0
    %5124 = vmatmul.mubr.f32.gmra.mrb[0].mxu0 %v4742
    %v5125 = vpop.f32.mrb[0].mxu0
    %v5126 = vadd.f32 0.0, %v5125
    %v5127 = vpop.f32.mrb[0].mxu0
    %5128 = vdwg.mxu0
    %v5129 = vmul.f32 %v4811, %v106
    %v5130 = vmul.f32 %v4816, %v107
    %v5131 = vmul.f32 %v4821, %v108
    %v5132 = vmul.f32 %v4826, %v109
    %v5133 = vmul.f32 %v4831, %v110
    %v5134 = vmul.f32 %v4836, %v111
    %v5135 = vmul.f32 %v4841, %v112
    %v5136 = vmul.f32 %v4846, %v113
    %v5137 = vmul.f32 %v4851, %v114
    %v5138 = vmul.f32 %v4856, %v115
    %v5139 = vmul.f32 %v4861, %v116
    %v5140 = vmul.f32 %v4866, %v117
    %v5141 = vmul.f32 %v4871, %v118
    %v5142 = vmul.f32 %v4876, %v119
    %v5143 = vmul.f32 %v4881, %v120
    %v5144 = vmul.f32 %v4886, %v121
    %v5145 = vmul.f32 %v4891, %v122
    %v5146 = vmul.f32 %v4896, %v123
    %v5147 = vmul.f32 %v4901, %v124
    %v5148 = vmul.f32 %v4906, %v125
    %v5149 = vmul.f32 %v4911, %v126
    %v5150 = vmul.f32 %v4916, %v127
    %v5151 = vmul.f32 %v4921, %v128
    %v5152 = vmul.f32 %v4926, %v129
    %v5153 = vmul.f32 %v4931, %v130
    %v5154 = vmul.f32 %v4936, %v131
    %v5155 = vmul.f32 %v4941, %v132
    %v5156 = vmul.f32 %v4946, %v133
    %v5157 = vmul.f32 %v4951, %v134
    %v5158 = vmul.f32 %v4956, %v135
    %v5159 = vmul.f32 %v4961, %v136
    %v5160 = vmul.f32 %v4966, %v137
    %v5161 = vmul.f32 %v4971, %v138
    %v5162 = vmul.f32 %v4976, %v139
    %v5163 = vmul.f32 %v4981, %v140
    %v5164 = vmul.f32 %v4986, %v141
    %v5165 = vmul.f32 %v4991, %v142
    %v5166 = vmul.f32 %v4996, %v143
    %v5167 = vmul.f32 %v5001, %v144
    %v5168 = vmul.f32 %v5006, %v145
    %v5169 = vmul.f32 %v5011, %v146
    %v5170 = vmul.f32 %v5016, %v147
    %v5171 = vmul.f32 %v5021, %v148
    %v5172 = vmul.f32 %v5026, %v149
    %v5173 = vmul.f32 %v5031, %v150
    %v5174 = vmul.f32 %v5036, %v151
    %v5175 = vmul.f32 %v5041, %v152
    %v5176 = vmul.f32 %v5046, %v153
    %v5177 = vmul.f32 %v5051, %v154
    %v5178 = vmul.f32 %v5056, %v155
    %v5179 = vmul.f32 %v5061, %v156
    %v5180 = vmul.f32 %v5066, %v157
    %v5181 = vmul.f32 %v5071, %v158
    %v5182 = vmul.f32 %v5076, %v159
    %v5183 = vmul.f32 %v5081, %v160
    %v5184 = vmul.f32 %v5086, %v161
    %v5185 = vmul.f32 %v5091, %v162
    %v5186 = vmul.f32 %v5096, %v163
    %v5187 = vmul.f32 %v5101, %v164
    %v5188 = vmul.f32 %v5106, %v165
    %v5189 = vmul.f32 %v5111, %v166
    %v5190 = vmul.f32 %v5116, %v167
    %v5191 = vmul.f32 %v5121, %v168
    %v5192 = vmul.f32 %v5126, %v169
    %v5193 = vsel %vm713, %v5129, 0.0
    %v5194 = vsel %vm713, %v5137, 0.0
    %v5195 = vadd.f32 %v5193, %v5194
    %v5196 = vsel %vm713, %v5145, 0.0
    %v5197 = vadd.f32 %v5195, %v5196
    %v5198 = vsel %vm713, %v5153, 0.0
    %v5199 = vadd.f32 %v5197, %v5198
    %v5200 = vsel %vm713, %v5161, 0.0
    %v5201 = vadd.f32 %v5199, %v5200
    %v5202 = vsel %vm713, %v5169, 0.0
    %v5203 = vadd.f32 %v5201, %v5202
    %v5204 = vsel %vm713, %v5177, 0.0
    %v5205 = vadd.f32 %v5203, %v5204
    %v5206 = vsel %vm713, %v5185, 0.0
    %v5207 = vadd.f32 %v5205, %v5206
    %v5208 = vsel %vm713, %v5130, 0.0
    %v5209 = vsel %vm713, %v5138, 0.0
    %v5210 = vadd.f32 %v5208, %v5209
    %v5211 = vsel %vm713, %v5146, 0.0
    %v5212 = vadd.f32 %v5210, %v5211
    %v5213 = vsel %vm713, %v5154, 0.0
    %v5214 = vadd.f32 %v5212, %v5213
    %v5215 = vsel %vm713, %v5162, 0.0
    %v5216 = vadd.f32 %v5214, %v5215
    %v5217 = vsel %vm713, %v5170, 0.0
    %v5218 = vadd.f32 %v5216, %v5217
    %v5219 = vsel %vm713, %v5178, 0.0
    %v5220 = vadd.f32 %v5218, %v5219
    %v5221 = vsel %vm713, %v5186, 0.0
    %v5222 = vadd.f32 %v5220, %v5221
    %v5223 = vsel %vm713, %v5131, 0.0
    %v5224 = vsel %vm713, %v5139, 0.0
    %v5225 = vadd.f32 %v5223, %v5224
    %v5226 = vsel %vm713, %v5147, 0.0
    %v5227 = vadd.f32 %v5225, %v5226
    %v5228 = vsel %vm713, %v5155, 0.0
    %v5229 = vadd.f32 %v5227, %v5228
    %v5230 = vsel %vm713, %v5163, 0.0
    %v5231 = vadd.f32 %v5229, %v5230
    %v5232 = vsel %vm713, %v5171, 0.0
    %v5233 = vadd.f32 %v5231, %v5232
    %v5234 = vsel %vm713, %v5179, 0.0
    %v5235 = vadd.f32 %v5233, %v5234
    %v5236 = vsel %vm713, %v5187, 0.0
    %v5237 = vadd.f32 %v5235, %v5236
    %v5238 = vsel %vm713, %v5132, 0.0
    %v5239 = vsel %vm713, %v5140, 0.0
    %v5240 = vadd.f32 %v5238, %v5239
    %v5241 = vsel %vm713, %v5148, 0.0
    %v5242 = vadd.f32 %v5240, %v5241
    %v5243 = vsel %vm713, %v5156, 0.0
    %v5244 = vadd.f32 %v5242, %v5243
    %v5245 = vsel %vm713, %v5164, 0.0
    %v5246 = vadd.f32 %v5244, %v5245
    %v5247 = vsel %vm713, %v5172, 0.0
    %v5248 = vadd.f32 %v5246, %v5247
    %v5249 = vsel %vm713, %v5180, 0.0
    %v5250 = vadd.f32 %v5248, %v5249
    %v5251 = vsel %vm713, %v5188, 0.0
    %v5252 = vadd.f32 %v5250, %v5251
    %v5253 = vsel %vm713, %v5133, 0.0
    %v5254 = vsel %vm713, %v5141, 0.0
    %v5255 = vadd.f32 %v5253, %v5254
    %v5256 = vsel %vm713, %v5149, 0.0
    %v5257 = vadd.f32 %v5255, %v5256
    %v5258 = vsel %vm713, %v5157, 0.0
    %v5259 = vadd.f32 %v5257, %v5258
    %v5260 = vsel %vm713, %v5165, 0.0
    %v5261 = vadd.f32 %v5259, %v5260
    %v5262 = vsel %vm713, %v5173, 0.0
    %v5263 = vadd.f32 %v5261, %v5262
    %v5264 = vsel %vm713, %v5181, 0.0
    %v5265 = vadd.f32 %v5263, %v5264
    %v5266 = vsel %vm713, %v5189, 0.0
    %v5267 = vadd.f32 %v5265, %v5266
    %v5268 = vsel %vm713, %v5134, 0.0
    %v5269 = vsel %vm713, %v5142, 0.0
    %v5270 = vadd.f32 %v5268, %v5269
    %v5271 = vsel %vm713, %v5150, 0.0
    %v5272 = vadd.f32 %v5270, %v5271
    %v5273 = vsel %vm713, %v5158, 0.0
    %v5274 = vadd.f32 %v5272, %v5273
    %v5275 = vsel %vm713, %v5166, 0.0
    %v5276 = vadd.f32 %v5274, %v5275
    %v5277 = vsel %vm713, %v5174, 0.0
    %v5278 = vadd.f32 %v5276, %v5277
    %v5279 = vsel %vm713, %v5182, 0.0
    %v5280 = vadd.f32 %v5278, %v5279
    %v5281 = vsel %vm713, %v5190, 0.0
    %v5282 = vadd.f32 %v5280, %v5281
    %v5283 = vsel %vm713, %v5135, 0.0
    %v5284 = vsel %vm713, %v5143, 0.0
    %v5285 = vadd.f32 %v5283, %v5284
    %v5286 = vsel %vm713, %v5151, 0.0
    %v5287 = vadd.f32 %v5285, %v5286
    %v5288 = vsel %vm713, %v5159, 0.0
    %v5289 = vadd.f32 %v5287, %v5288
    %v5290 = vsel %vm713, %v5167, 0.0
    %v5291 = vadd.f32 %v5289, %v5290
    %v5292 = vsel %vm713, %v5175, 0.0
    %v5293 = vadd.f32 %v5291, %v5292
    %v5294 = vsel %vm713, %v5183, 0.0
    %v5295 = vadd.f32 %v5293, %v5294
    %v5296 = vsel %vm713, %v5191, 0.0
    %v5297 = vadd.f32 %v5295, %v5296
    %v5298 = vsel %vm713, %v5136, 0.0
    %v5299 = vsel %vm713, %v5144, 0.0
    %v5300 = vadd.f32 %v5298, %v5299
    %v5301 = vsel %vm713, %v5152, 0.0
    %v5302 = vadd.f32 %v5300, %v5301
    %v5303 = vsel %vm713, %v5160, 0.0
    %v5304 = vadd.f32 %v5302, %v5303
    %v5305 = vsel %vm713, %v5168, 0.0
    %v5306 = vadd.f32 %v5304, %v5305
    %v5307 = vsel %vm713, %v5176, 0.0
    %v5308 = vadd.f32 %v5306, %v5307
    %v5309 = vsel %vm713, %v5184, 0.0
    %v5310 = vadd.f32 %v5308, %v5309
    %v5311 = vsel %vm713, %v5192, 0.0
    %v5312 = vadd.f32 %v5310, %v5311
    %v5313 = vlaneseq
    %v5314 = vshrl.u32 %v5313, 7
    %v5315 = vsub.s32 3, %v5314
    %v5316 = vrot.slane %v170, %v5315
    %v5318 = vsel %vm713, %v5207, 0
    %v5321 = vsel %vm713, %v5222, 0
    %v5324 = vsel %vm713, %v5237, 0
    %v5327 = vsel %vm713, %v5252, 0
    %v5330 = vsel %vm713, %v5267, 0
    %v5333 = vsel %vm713, %v5282, 0
    %v5336 = vsel %vm713, %v5297, 0
    %v5339 = vsel %vm713, %v5312, 0
    %5341 = vmatprep.subr.mxu0 0.0
    %5342 = vmatpush1.msra.mxu0 %v38
    %5343 = vmatprep.subr.mxu0 0.0
    %5344 = vmatpush1.msra.mxu0 %v39
    %5345 = vmatprep.subr.mxu0 0.0
    %5346 = vmatpush1.msra.mxu0 %v40
    %5347 = vmatprep.subr.mxu0 0.0
    %5348 = vmatpush1.msra.mxu0 %v41
    %5349 = vmatprep.subr.mxu0 0.0
    %5350 = vmatpush1.msra.mxu0 0.0
    %5351 = vmatprep.subr.mxu0 0.0
    %5352 = vmatpush1.msra.mxu0 0.0
    %5353 = vmatprep.subr.mxu0 0.0
    %5354 = vmatpush1.msra.mxu0 0.0
    %5355 = vmatprep.subr.mxu0 0.0
    %5356 = vmatpush1.msra.mxu0 0.0
    %5357 = vmatprep.subr.mxu0 0.0
    %5358 = vmatpush1.msra.mxu0 0.0
    %5359 = vmatprep.subr.mxu0 0.0
    %5360 = vmatpush1.msra.mxu0 0.0
    %5361 = vmatprep.subr.mxu0 0.0
    %5362 = vmatpush1.msra.mxu0 0.0
    %5363 = vmatprep.subr.mxu0 0.0
    %5364 = vmatpush1.msra.mxu0 0.0
    %5365 = vmatprep.subr.mxu0 0.0
    %5366 = vmatpush1.msra.mxu0 0.0
    %5367 = vmatprep.subr.mxu0 0.0
    %5368 = vmatpush1.msra.mxu0 0.0
    %5369 = vmatprep.subr.mxu0 0.0
    %5370 = vmatpush1.msra.mxu0 0.0
    %5371 = vmatprep.subr.mxu0 0.0
    %5372 = vmatpush1.msra.mxu0 0.0
    %5373 = vmatprep.subr.mxu0 0.0
    %5374 = vmatpush1.msra.mxu0 0.0
    %5375 = vmatprep.subr.mxu0 0.0
    %5376 = vmatpush1.msra.mxu0 0.0
    %5377 = vmatprep.subr.mxu0 0.0
    %5378 = vmatpush1.msra.mxu0 0.0
    %5379 = vmatprep.subr.mxu0 0.0
    %5380 = vmatpush1.msra.mxu0 0.0
    %5381 = vmatprep.subr.mxu0 0.0
    %5382 = vmatpush1.msra.mxu0 0.0
    %5383 = vmatprep.subr.mxu0 0.0
    %5384 = vmatpush1.msra.mxu0 0.0
    %5385 = vmatprep.subr.mxu0 0.0
    %5386 = vmatpush1.msra.mxu0 0.0
    %5387 = vmatprep.subr.mxu0 0.0
    %5388 = vmatpush1.msra.mxu0 0.0
    %5389 = vmatprep.subr.mxu0 0.0
    %5390 = vmatpush1.msra.mxu0 0.0
    %5391 = vmatprep.subr.mxu0 0.0
    %5392 = vmatpush1.msra.mxu0 0.0
    %5393 = vmatprep.subr.mxu0 0.0
    %5394 = vmatpush1.msra.mxu0 0.0
    %5395 = vmatprep.subr.mxu0 0.0
    %5396 = vmatpush1.msra.mxu0 0.0
    %5397 = vmatprep.subr.mxu0 0.0
    %5398 = vmatpush1.msra.mxu0 0.0
    %5399 = vmatprep.subr.mxu0 0.0
    %5400 = vmatpush1.msra.mxu0 0.0
    %5401 = vmatprep.subr.mxu0 0.0
    %5402 = vmatpush1.msra.mxu0 0.0
    %5403 = vmatprep.subr.mxu0 0.0
    %5404 = vmatpush1.msra.mxu0 0.0
    %5405 = vmatprep.mubr.f32.mxu0 0.0
    %5406 = vmatmul.mubr.f32.gmra.mrb[0].mxu0 %v5318
    %v5407 = vpop.f32.mrb[0].mxu0
    %v5408 = vadd.f32 %v5316, %v5407
    %v5409 = vpop.f32.mrb[0].mxu0
    %5410 = vmatprep.mubr.f32.mxu0 0.0
    %5411 = vmatmul.mubr.f32.gmra.mrb[0].mxu0 %v5321
    %v5412 = vpop.f32.mrb[0].mxu0
    %v5413 = vadd.f32 %v5316, %v5412
    %v5414 = vpop.f32.mrb[0].mxu0
    %5415 = vmatprep.mubr.f32.mxu0 0.0
    %5416 = vmatmul.mubr.f32.gmra.mrb[0].mxu0 %v5324
    %v5417 = vpop.f32.mrb[0].mxu0
    %v5418 = vadd.f32 %v5316, %v5417
    %v5419 = vpop.f32.mrb[0].mxu0
    %5420 = vmatprep.mubr.f32.mxu0 0.0
    %5421 = vmatmul.mubr.f32.gmra.mrb[0].mxu0 %v5327
    %v5422 = vpop.f32.mrb[0].mxu0
    %v5423 = vadd.f32 %v5316, %v5422
    %v5424 = vpop.f32.mrb[0].mxu0
    %5425 = vmatprep.mubr.f32.mxu0 0.0
    %5426 = vmatmul.mubr.f32.gmra.mrb[0].mxu0 %v5330
    %v5427 = vpop.f32.mrb[0].mxu0
    %v5428 = vadd.f32 %v5316, %v5427
    %v5429 = vpop.f32.mrb[0].mxu0
    %5430 = vmatprep.mubr.f32.mxu0 0.0
    %5431 = vmatmul.mubr.f32.gmra.mrb[0].mxu0 %v5333
    %v5432 = vpop.f32.mrb[0].mxu0
    %v5433 = vadd.f32 %v5316, %v5432
    %v5434 = vpop.f32.mrb[0].mxu0
    %5435 = vmatprep.mubr.f32.mxu0 0.0
    %5436 = vmatmul.mubr.f32.gmra.mrb[0].mxu0 %v5336
    %v5437 = vpop.f32.mrb[0].mxu0
    %v5438 = vadd.f32 %v5316, %v5437
    %v5439 = vpop.f32.mrb[0].mxu0
    %5440 = vmatprep.mubr.f32.mxu0 0.0
    %5441 = vmatmul.mubr.f32.gmra.mrb[0].mxu0 %v5339
    %v5442 = vpop.f32.mrb[0].mxu0
    %v5443 = vadd.f32 %v5316, %v5442
    %v5444 = vpop.f32.mrb[0].mxu0
    %5445 = vdwg.mxu0
    %v5447 = vsel %vm713, %v5408, 0
    %v5450 = vsel %vm713, %v5413, 0
    %v5453 = vsel %vm713, %v5418, 0
    %v5456 = vsel %vm713, %v5423, 0
    %v5459 = vsel %vm713, %v5428, 0
    %v5462 = vsel %vm713, %v5433, 0
    %v5465 = vsel %vm713, %v5438, 0
    %v5468 = vsel %vm713, %v5443, 0
    %5470 = vmatprep.subr.mxu0 %v172
    %5471 = vmatpush1.msra.mxu0 %v171
    %5472 = vmatprep.subr.mxu0 %v174
    %5473 = vmatpush1.msra.mxu0 %v173
    %5474 = vmatprep.subr.mxu0 %v176
    %5475 = vmatpush1.msra.mxu0 %v175
    %5476 = vmatprep.subr.mxu0 %v178
    %5477 = vmatpush1.msra.mxu0 %v177
    %5478 = vmatprep.subr.mxu0 0.0
    %5479 = vmatpush1.msra.mxu0 0.0
    %5480 = vmatprep.subr.mxu0 0.0
    %5481 = vmatpush1.msra.mxu0 0.0
    %5482 = vmatprep.subr.mxu0 0.0
    %5483 = vmatpush1.msra.mxu0 0.0
    %5484 = vmatprep.subr.mxu0 0.0
    %5485 = vmatpush1.msra.mxu0 0.0
    %5486 = vmatprep.subr.mxu0 0.0
    %5487 = vmatpush1.msra.mxu0 0.0
    %5488 = vmatprep.subr.mxu0 0.0
    %5489 = vmatpush1.msra.mxu0 0.0
    %5490 = vmatprep.subr.mxu0 0.0
    %5491 = vmatpush1.msra.mxu0 0.0
    %5492 = vmatprep.subr.mxu0 0.0
    %5493 = vmatpush1.msra.mxu0 0.0
    %5494 = vmatprep.subr.mxu0 0.0
    %5495 = vmatpush1.msra.mxu0 0.0
    %5496 = vmatprep.subr.mxu0 0.0
    %5497 = vmatpush1.msra.mxu0 0.0
    %5498 = vmatprep.subr.mxu0 0.0
    %5499 = vmatpush1.msra.mxu0 0.0
    %5500 = vmatprep.subr.mxu0 0.0
    %5501 = vmatpush1.msra.mxu0 0.0
    %5502 = vmatprep.subr.mxu0 0.0
    %5503 = vmatpush1.msra.mxu0 0.0
    %5504 = vmatprep.subr.mxu0 0.0
    %5505 = vmatpush1.msra.mxu0 0.0
    %5506 = vmatprep.subr.mxu0 0.0
    %5507 = vmatpush1.msra.mxu0 0.0
    %5508 = vmatprep.subr.mxu0 0.0
    %5509 = vmatpush1.msra.mxu0 0.0
    %5510 = vmatprep.subr.mxu0 0.0
    %5511 = vmatpush1.msra.mxu0 0.0
    %5512 = vmatprep.subr.mxu0 0.0
    %5513 = vmatpush1.msra.mxu0 0.0
    %5514 = vmatprep.subr.mxu0 0.0
    %5515 = vmatpush1.msra.mxu0 0.0
    %5516 = vmatprep.subr.mxu0 0.0
    %5517 = vmatpush1.msra.mxu0 0.0
    %5518 = vmatprep.subr.mxu0 0.0
    %5519 = vmatpush1.msra.mxu0 0.0
    %5520 = vmatprep.subr.mxu0 0.0
    %5521 = vmatpush1.msra.mxu0 0.0
    %5522 = vmatprep.subr.mxu0 0.0
    %5523 = vmatpush1.msra.mxu0 0.0
    %5524 = vmatprep.subr.mxu0 0.0
    %5525 = vmatpush1.msra.mxu0 0.0
    %5526 = vmatprep.subr.mxu0 0.0
    %5527 = vmatpush1.msra.mxu0 0.0
    %5528 = vmatprep.subr.mxu0 0.0
    %5529 = vmatpush1.msra.mxu0 0.0
    %5530 = vmatprep.subr.mxu0 0.0
    %5531 = vmatpush1.msra.mxu0 0.0
    %5532 = vmatprep.subr.mxu0 0.0
    %5533 = vmatpush1.msra.mxu0 0.0
    %5534 = vmatprep.mubr.f32.mxu0 0.0
    %5535 = vmatmul.mubr.f32.gmra.mrb[0].mxu0 %v5447
    %v5536 = vpop.f32.mrb[0].mxu0
    %v5537 = vadd.f32 0.0, %v5536
    %v5538 = vpop.f32.mrb[0].mxu0
    %v5539 = vadd.f32 0.0, %v5538
    %5540 = vmatprep.mubr.f32.mxu0 0.0
    %5541 = vmatmul.mubr.f32.gmra.mrb[0].mxu0 %v5450
    %v5542 = vpop.f32.mrb[0].mxu0
    %v5543 = vadd.f32 0.0, %v5542
    %v5544 = vpop.f32.mrb[0].mxu0
    %v5545 = vadd.f32 0.0, %v5544
    %5546 = vmatprep.mubr.f32.mxu0 0.0
    %5547 = vmatmul.mubr.f32.gmra.mrb[0].mxu0 %v5453
    %v5548 = vpop.f32.mrb[0].mxu0
    %v5549 = vadd.f32 0.0, %v5548
    %v5550 = vpop.f32.mrb[0].mxu0
    %v5551 = vadd.f32 0.0, %v5550
    %5552 = vmatprep.mubr.f32.mxu0 0.0
    %5553 = vmatmul.mubr.f32.gmra.mrb[0].mxu0 %v5456
    %v5554 = vpop.f32.mrb[0].mxu0
    %v5555 = vadd.f32 0.0, %v5554
    %v5556 = vpop.f32.mrb[0].mxu0
    %v5557 = vadd.f32 0.0, %v5556
    %5558 = vmatprep.mubr.f32.mxu0 0.0
    %5559 = vmatmul.mubr.f32.gmra.mrb[0].mxu0 %v5459
    %v5560 = vpop.f32.mrb[0].mxu0
    %v5561 = vadd.f32 0.0, %v5560
    %v5562 = vpop.f32.mrb[0].mxu0
    %v5563 = vadd.f32 0.0, %v5562
    %5564 = vmatprep.mubr.f32.mxu0 0.0
    %5565 = vmatmul.mubr.f32.gmra.mrb[0].mxu0 %v5462
    %v5566 = vpop.f32.mrb[0].mxu0
    %v5567 = vadd.f32 0.0, %v5566
    %v5568 = vpop.f32.mrb[0].mxu0
    %v5569 = vadd.f32 0.0, %v5568
    %5570 = vmatprep.mubr.f32.mxu0 0.0
    %5571 = vmatmul.mubr.f32.gmra.mrb[0].mxu0 %v5465
    %v5572 = vpop.f32.mrb[0].mxu0
    %v5573 = vadd.f32 0.0, %v5572
    %v5574 = vpop.f32.mrb[0].mxu0
    %v5575 = vadd.f32 0.0, %v5574
    %5576 = vmatprep.mubr.f32.mxu0 0.0
    %5577 = vmatmul.mubr.f32.gmra.mrb[0].mxu0 %v5468
    %v5578 = vpop.f32.mrb[0].mxu0
    %v5579 = vadd.f32 0.0, %v5578
    %v5580 = vpop.f32.mrb[0].mxu0
    %v5581 = vadd.f32 0.0, %v5580
    %5582 = vdwg.mxu0
    %v5583 = vmul.f32 %v5537, %v179
    %v5584 = vmul.f32 %v5539, %v180
    %v5585 = vmul.f32 %v5543, %v181
    %v5586 = vmul.f32 %v5545, %v182
    %v5587 = vmul.f32 %v5549, %v183
    %v5588 = vmul.f32 %v5551, %v184
    %v5589 = vmul.f32 %v5555, %v185
    %v5590 = vmul.f32 %v5557, %v186
    %v5591 = vmul.f32 %v5561, %v187
    %v5592 = vmul.f32 %v5563, %v188
    %v5593 = vmul.f32 %v5567, %v189
    %v5594 = vmul.f32 %v5569, %v190
    %v5595 = vmul.f32 %v5573, %v191
    %v5596 = vmul.f32 %v5575, %v192
    %v5597 = vmul.f32 %v5579, %v193
    %v5598 = vmul.f32 %v5581, %v194
    %v5600 = vsel %vm2678, %v5584, 0
    %v5603 = vsel %vm2678, %v5586, 0
    %v5606 = vsel %vm2678, %v5588, 0
    %v5609 = vsel %vm2678, %v5590, 0
    %v5612 = vsel %vm2678, %v5592, 0
    %v5615 = vsel %vm2678, %v5594, 0
    %v5618 = vsel %vm2678, %v5596, 0
    %v5621 = vsel %vm2678, %v5598, 0
    %5623 = vmatprep.subr.mxu0 0.0
    %5624 = vmatpush1.msra.mxu0 %v66
    %5625 = vmatprep.subr.mxu0 0.0
    %5626 = vmatpush1.msra.mxu0 %v67
    %5627 = vmatprep.subr.mxu0 0.0
    %5628 = vmatpush1.msra.mxu0 %v68
    %5629 = vmatprep.subr.mxu0 0.0
    %5630 = vmatpush1.msra.mxu0 %v69
    %5631 = vmatprep.subr.mxu0 0.0
    %5632 = vmatpush1.msra.mxu0 %v70
    %5633 = vmatprep.subr.mxu0 0.0
    %5634 = vmatpush1.msra.mxu0 %v71
    %5635 = vmatprep.subr.mxu0 0.0
    %5636 = vmatpush1.msra.mxu0 %v72
    %5637 = vmatprep.subr.mxu0 0.0
    %5638 = vmatpush1.msra.mxu0 %v73
    %5639 = vmatprep.subr.mxu0 0.0
    %5640 = vmatpush1.msra.mxu0 %v74
    %5641 = vmatprep.subr.mxu0 0.0
    %5642 = vmatpush1.msra.mxu0 %v75
    %5643 = vmatprep.subr.mxu0 0.0
    %5644 = vmatpush1.msra.mxu0 %v76
    %5645 = vmatprep.subr.mxu0 0.0
    %5646 = vmatpush1.msra.mxu0 %v77
    %5647 = vmatprep.subr.mxu0 0.0
    %5648 = vmatpush1.msra.mxu0 %v78
    %5649 = vmatprep.subr.mxu0 0.0
    %5650 = vmatpush1.msra.mxu0 %v79
    %5651 = vmatprep.subr.mxu0 0.0
    %5652 = vmatpush1.msra.mxu0 %v80
    %5653 = vmatprep.subr.mxu0 0.0
    %5654 = vmatpush1.msra.mxu0 %v81
    %5655 = vmatprep.subr.mxu0 0.0
    %5656 = vmatpush1.msra.mxu0 %v82
    %5657 = vmatprep.subr.mxu0 0.0
    %5658 = vmatpush1.msra.mxu0 %v83
    %5659 = vmatprep.subr.mxu0 0.0
    %5660 = vmatpush1.msra.mxu0 %v84
    %5661 = vmatprep.subr.mxu0 0.0
    %5662 = vmatpush1.msra.mxu0 %v85
    %5663 = vmatprep.subr.mxu0 0.0
    %5664 = vmatpush1.msra.mxu0 %v86
    %5665 = vmatprep.subr.mxu0 0.0
    %5666 = vmatpush1.msra.mxu0 %v87
    %5667 = vmatprep.subr.mxu0 0.0
    %5668 = vmatpush1.msra.mxu0 %v88
    %5669 = vmatprep.subr.mxu0 0.0
    %5670 = vmatpush1.msra.mxu0 %v89
    %5671 = vmatprep.subr.mxu0 0.0
    %5672 = vmatpush1.msra.mxu0 0.0
    %5673 = vmatprep.subr.mxu0 0.0
    %5674 = vmatpush1.msra.mxu0 0.0
    %5675 = vmatprep.subr.mxu0 0.0
    %5676 = vmatpush1.msra.mxu0 0.0
    %5677 = vmatprep.subr.mxu0 0.0
    %5678 = vmatpush1.msra.mxu0 0.0
    %5679 = vmatprep.subr.mxu0 0.0
    %5680 = vmatpush1.msra.mxu0 0.0
    %5681 = vmatprep.subr.mxu0 0.0
    %5682 = vmatpush1.msra.mxu0 0.0
    %5683 = vmatprep.subr.mxu0 0.0
    %5684 = vmatpush1.msra.mxu0 0.0
    %5685 = vmatprep.subr.mxu0 0.0
    %5686 = vmatpush1.msra.mxu0 0.0
    %5687 = vmatprep.mubr.f32.mxu0 %v5600
    %5688 = vmatmul.mubr.f32.gmra.mrb[0].mxu0 %v5583
    %v5689 = vpop.f32.mrb[0].mxu0
    %v5690 = vadd.f32 0.0, %v5689
    %v5691 = vpop.f32.mrb[0].mxu0
    %5692 = vmatprep.mubr.f32.mxu0 %v5603
    %5693 = vmatmul.mubr.f32.gmra.mrb[0].mxu0 %v5585
    %v5694 = vpop.f32.mrb[0].mxu0
    %v5695 = vadd.f32 0.0, %v5694
    %v5696 = vpop.f32.mrb[0].mxu0
    %5697 = vmatprep.mubr.f32.mxu0 %v5606
    %5698 = vmatmul.mubr.f32.gmra.mrb[0].mxu0 %v5587
    %v5699 = vpop.f32.mrb[0].mxu0
    %v5700 = vadd.f32 0.0, %v5699
    %v5701 = vpop.f32.mrb[0].mxu0
    %5702 = vmatprep.mubr.f32.mxu0 %v5609
    %5703 = vmatmul.mubr.f32.gmra.mrb[0].mxu0 %v5589
    %v5704 = vpop.f32.mrb[0].mxu0
    %v5705 = vadd.f32 0.0, %v5704
    %v5706 = vpop.f32.mrb[0].mxu0
    %5707 = vmatprep.mubr.f32.mxu0 %v5612
    %5708 = vmatmul.mubr.f32.gmra.mrb[0].mxu0 %v5591
    %v5709 = vpop.f32.mrb[0].mxu0
    %v5710 = vadd.f32 0.0, %v5709
    %v5711 = vpop.f32.mrb[0].mxu0
    %5712 = vmatprep.mubr.f32.mxu0 %v5615
    %5713 = vmatmul.mubr.f32.gmra.mrb[0].mxu0 %v5593
    %v5714 = vpop.f32.mrb[0].mxu0
    %v5715 = vadd.f32 0.0, %v5714
    %v5716 = vpop.f32.mrb[0].mxu0
    %5717 = vmatprep.mubr.f32.mxu0 %v5618
    %5718 = vmatmul.mubr.f32.gmra.mrb[0].mxu0 %v5595
    %v5719 = vpop.f32.mrb[0].mxu0
    %v5720 = vadd.f32 0.0, %v5719
    %v5721 = vpop.f32.mrb[0].mxu0
    %5722 = vmatprep.mubr.f32.mxu0 %v5621
    %5723 = vmatmul.mubr.f32.gmra.mrb[0].mxu0 %v5597
    %v5724 = vpop.f32.mrb[0].mxu0
    %v5725 = vadd.f32 0.0, %v5724
    %v5726 = vpop.f32.mrb[0].mxu0
    %5727 = vdwg.mxu0
    %v5728 = vlaneseq
    %v5729 = vshrl.u32 %v5728, 7
    %v5730 = vsub.s32 4, %v5729
    %v5731 = vrot.slane %v170, %v5730
    %v5733 = vsel %vm2678, %v387, 0
    %5735 = vmatprep.subr.mxu0 0.0
    %5736 = vmatpush1.msra.mxu0 %v5690
    %5737 = vmatprep.subr.mxu0 0.0
    %5738 = vmatpush1.msra.mxu0 %v5695
    %5739 = vmatprep.subr.mxu0 0.0
    %5740 = vmatpush1.msra.mxu0 %v5700
    %5741 = vmatprep.subr.mxu0 0.0
    %5742 = vmatpush1.msra.mxu0 %v5705
    %5743 = vmatprep.subr.mxu0 0.0
    %5744 = vmatpush1.msra.mxu0 %v5710
    %5745 = vmatprep.subr.mxu0 0.0
    %5746 = vmatpush1.msra.mxu0 %v5715
    %5747 = vmatprep.subr.mxu0 0.0
    %5748 = vmatpush1.msra.mxu0 %v5720
    %5749 = vmatprep.subr.mxu0 0.0
    %5750 = vmatpush1.msra.mxu0 %v5725
    %5751 = vmatprep.subr.mxu0 0.0
    %5752 = vmatpush1.msra.mxu0 0.0
    %5753 = vmatprep.subr.mxu0 0.0
    %5754 = vmatpush1.msra.mxu0 0.0
    %5755 = vmatprep.subr.mxu0 0.0
    %5756 = vmatpush1.msra.mxu0 0.0
    %5757 = vmatprep.subr.mxu0 0.0
    %5758 = vmatpush1.msra.mxu0 0.0
    %5759 = vmatprep.subr.mxu0 0.0
    %5760 = vmatpush1.msra.mxu0 0.0
    %5761 = vmatprep.subr.mxu0 0.0
    %5762 = vmatpush1.msra.mxu0 0.0
    %5763 = vmatprep.subr.mxu0 0.0
    %5764 = vmatpush1.msra.mxu0 0.0
    %5765 = vmatprep.subr.mxu0 0.0
    %5766 = vmatpush1.msra.mxu0 0.0
    %5767 = vmatprep.subr.mxu0 0.0
    %5768 = vmatpush1.msra.mxu0 0.0
    %5769 = vmatprep.subr.mxu0 0.0
    %5770 = vmatpush1.msra.mxu0 0.0
    %5771 = vmatprep.subr.mxu0 0.0
    %5772 = vmatpush1.msra.mxu0 0.0
    %5773 = vmatprep.subr.mxu0 0.0
    %5774 = vmatpush1.msra.mxu0 0.0
    %5775 = vmatprep.subr.mxu0 0.0
    %5776 = vmatpush1.msra.mxu0 0.0
    %5777 = vmatprep.subr.mxu0 0.0
    %5778 = vmatpush1.msra.mxu0 0.0
    %5779 = vmatprep.subr.mxu0 0.0
    %5780 = vmatpush1.msra.mxu0 0.0
    %5781 = vmatprep.subr.mxu0 0.0
    %5782 = vmatpush1.msra.mxu0 0.0
    %5783 = vmatprep.subr.mxu0 0.0
    %5784 = vmatpush1.msra.mxu0 0.0
    %5785 = vmatprep.subr.mxu0 0.0
    %5786 = vmatpush1.msra.mxu0 0.0
    %5787 = vmatprep.subr.mxu0 0.0
    %5788 = vmatpush1.msra.mxu0 0.0
    %5789 = vmatprep.subr.mxu0 0.0
    %5790 = vmatpush1.msra.mxu0 0.0
    %5791 = vmatprep.subr.mxu0 0.0
    %5792 = vmatpush1.msra.mxu0 0.0
    %5793 = vmatprep.subr.mxu0 0.0
    %5794 = vmatpush1.msra.mxu0 0.0
    %5795 = vmatprep.subr.mxu0 0.0
    %5796 = vmatpush1.msra.mxu0 0.0
    %5797 = vmatprep.subr.mxu0 0.0
    %5798 = vmatpush1.msra.mxu0 0.0
    %5799 = vmatprep.mubr.f32.mxu0 0.0
    %5800 = vmatmul.mubr.f32.gmra.mrb[0].mxu0 %v5733
    %v5801 = vpop.f32.mrb[0].mxu0
    %v5802 = vadd.f32 %v5731, %v5801
    %v5803 = vpop.f32.mrb[0].mxu0
    %5804 = vdwg.mxu0
    %vm5805 = vcmask 257024
    %v5806 = vsel %vm5805, %v5802, 0.0
    %5807 = vadd.xlane.f32.xlu0 %v5806
    %v5808 = vpop.xlane.xlu0 %5807
    %v5809 = vrcp.pop 32.0
    %v5810 = vmul.f32 %v5808, %v5809
    %v5811 = vsub.f32 %v5802, %v5810
    %v5812 = vmul.f32 %v5811, %v5811
    %v5813 = vsel %vm5805, %v5812, 0.0
    %5814 = vadd.xlane.f32.xlu0 %v5813
    %v5815 = vpop.xlane.xlu0 %5814
    %v5816 = vmul.f32 %v5815, %v5809
    %v5817 = vadd.f32 %v5816, 1e-05
    %v5818 = vrsqrt.pop %v5817
    %v5819 = vmul.f32 %v5811, %v5818
    %v5820 = vlaneseq
    %v5821 = vshrl.u32 %v5820, 7
    %v5822 = vsub.s32 5, %v5821
    %v5823 = vrot.slane %v170, %v5822
    %v5824 = vmul.f32 %v5819, %v5823
    %v5825 = vlaneseq
    %v5826 = vshrl.u32 %v5825, 7
    %v5827 = vsub.s32 6, %v5826
    %v5828 = vrot.slane %v170, %v5827
    %v5829 = vadd.f32 %v5824, %v5828
    %v5830 = vmax.f32 %v5829, 0.0
    %5831 = vst.msk [vmem:[#allocation2] sm:$0xf] %vm5805, %v5830
    // Predicated region
    $region26: #{tpu_custom_call.1} parent=1 // pred_check
      _
    $region27: #{tpu_custom_call.1} parent=1 // pred_check_branch
      %5833 = sbr.rel (0) target = $region29
    $region28: #{tpu_custom_call.1} parent=1 // pred_region
      %s5835 = ssub.s32 64, 64
      %5836 = vsyncadd [#allocation3], %s5835
      %s5838 = sshll.u32 [#allocation2], 4
      %s5839 = int_to_ptr.vmem [resolvable:$true] %s5838
      %5841 = dma.vmem_to_hbm [thread:$0]  %s5839, 64, %s6, [#allocation3]
    $region29: #{tpu_custom_call.1} parent=1 // pred_fallthru
      _
    // Predicated region
    $region30: #{tpu_custom_call.1} parent=1 // pred_check
      _
    $region31: #{tpu_custom_call.1} parent=1 // pred_check_branch
      %5843 = sbr.rel (0) target = $region33
    $region32: #{tpu_custom_call.1} parent=1 // pred_region
      %5844 = dma.done [#allocation3], 64
    $region33: #{tpu_custom_call.1} parent=1 // pred_fallthru
      _
    %5845 = vsyncpa [#allocation3], 1

</llo_original>
